<compile_context>
chip_gen: v6e
topology: v6e:2x2x1
jax: 0.10.0
libtpu: 0.0.40
codegen_flags: <defaults>
</compile_context>

<pallas_src>
import math
import functools

import jax
import jax.numpy as jnp
from jax.experimental import pallas as pl
from jax.experimental.pallas import tpu as pltpu


# ----------------------------------------------------------------------------
# hardware / tiling helpers
# ----------------------------------------------------------------------------

_VMEM_CAP = None


def _vmem_capacity_bytes():
    global _VMEM_CAP
    if _VMEM_CAP is None:
        try:
            _VMEM_CAP = int(pltpu.get_tpu_info().vmem_capacity_bytes)
        except Exception:
            _VMEM_CAP = 64 * 1024 * 1024          # conservative (v7x per-core)
    return _VMEM_CAP


def _vmem_limit_bytes():
    # ~75% of physical VMEM: ~96 MiB on v5e/v6e, ~48 MiB on v7x.
    return (_vmem_capacity_bytes() * 3) // 4


_COMPILER_PARAMS = None


def _compiler_params():
    global _COMPILER_PARAMS
    if _COMPILER_PARAMS is None:
        _COMPILER_PARAMS = pltpu.CompilerParams(
            dimension_semantics=("parallel",),
            vmem_limit_bytes=int(_vmem_limit_bytes()))
    return _COMPILER_PARAMS


_BUFFERED_OK = None


def _buffered_supported():
    """Probe once whether pipeline_mode=pl.Buffered(1) lowers/runs here."""
    global _BUFFERED_OK
    if _BUFFERED_OK is None:
        try:
            def k(x_ref, w_ref, o_ref):
                o_ref[...] = x_ref[...] + w_ref[...]
            f = pl.pallas_call(
                k,
                out_shape=jax.ShapeDtypeStruct((8, 128), jnp.float32),
                grid=(1,),
                in_specs=[pl.BlockSpec((8, 128), lambda i: (0, 0)),
                          pl.BlockSpec((8, 128), lambda i: (0, 0),
                                       pipeline_mode=pl.Buffered(1))],
                out_specs=pl.BlockSpec((8, 128), lambda i: (0, 0)))
            jax.block_until_ready(f(jnp.zeros((8, 128), jnp.float32),
                                    jnp.ones((8, 128), jnp.float32)))
            _BUFFERED_OK = True
        except Exception:
            _BUFFERED_OK = False
    return _BUFFERED_OK


def _const_spec(shape):
    """BlockSpec for a grid-constant (weight / bias) block.

    Single-buffered when supported (halves resident-weight VMEM; matters most
    under v7x's 64 MiB), plain resident block otherwise.
    """
    nd = len(shape)
    idx = lambda *args: (0,) * nd
    if _buffered_supported():
        return pl.BlockSpec(shape, idx, pipeline_mode=pl.Buffered(1))
    return pl.BlockSpec(shape, idx)


def _choose_row_tile(n, per_row_bytes, budget_bytes, cap=512):
    """Byte-budgeted leading/row-dim tile.

    Returns (tile, padded_n).  tile is a multiple of 8 (safe when the row axis
    is the sublane axis of a 2-D block) or equals n; n is padded up to a
    multiple of tile when needed — no degenerate tile=1 / tile=n fallbacks.
    """
    per_row_bytes = max(int(per_row_bytes), 1)
    t = max(1, min(int(n), int(cap), int(budget_bytes) // per_row_bytes))
    if t >= n:
        return n, n
    t = max(8, (t // 8) * 8)
    if t >= n:
        return n, n
    if n % t:
        # prefer a nearby multiple-of-8 divisor of n (avoids padding)
        for c in range(t, max(8, t // 2) - 1, -8):
            if n % c == 0:
                return c, n
        n_pad = ((n + t - 1) // t) * t
        return t, n_pad
    return t, n


def _pad_rows(x, n_pad):
    n = x.shape[0]
    if n_pad == n:
        return x
    pad = [(0, n_pad - n)] + [(0, 0)] * (x.ndim - 1)
    return jnp.pad(x, pad)


def _recip(x, approx):
    if approx:
        return pl.reciprocal(x, approx=True)
    return 1.0 / x


# ----------------------------------------------------------------------------
# Pallas kernels
# ----------------------------------------------------------------------------

def _attn_kernel(x_ref, mask_ref, *refs, num_heads, head_dim, has_bias,
                 approx_recip, compute_dtype):
    """Fused multi-head self-attention for a block of segments.

    x_ref:    (Bb, T, d)
    mask_ref: (Bb, Mq, T)   additive f32 mask (Mq == 1 broadcast or T)
    [bias_ref:(H, T, T)]    shared position bias (only when has_bias)
    wqkv_ref: (d, 3d)       Q columns pre-scaled by 1/sqrt(head_dim)
    bqkv_ref: (1, 3d), wo_ref: (d, d), bo_ref: (1, d)
    o_ref:    (Bb, T, d)
    ctx_ref:  (Bb*T, d)     compute-dtype scratch collecting all head contexts
    """
    if has_bias:
        bias_ref, wqkv_ref, bqkv_ref, wo_ref, bo_ref, o_ref, ctx_ref = refs
    else:
        bias_ref = None
        wqkv_ref, bqkv_ref, wo_ref, bo_ref, o_ref, ctx_ref = refs

    Bb, T, d = x_ref.shape
    H, hd = num_heads, head_dim
    cd = compute_dtype

    x2 = x_ref[...].reshape(Bb * T, d).astype(cd)
    qkv = jnp.dot(x2, wqkv_ref[...], preferred_element_type=jnp.float32)
    # keep qkv in compute dtype (halves the largest in-kernel temporary)
    qkv = (qkv + bqkv_ref[...].astype(jnp.float32)).astype(cd)
    qkv = qkv.reshape(Bb, T, 3 * d)

    mask = mask_ref[...].astype(jnp.float32)                   # (Bb, Mq, T)

    for h in range(H):
        q = qkv[:, :, h * hd:(h + 1) * hd]
        k = qkv[:, :, d + h * hd:d + (h + 1) * hd]
        v = qkv[:, :, 2 * d + h * hd:2 * d + (h + 1) * hd]

        # scale already folded into the Q weights
        s = jnp.einsum('bqd,bkd->bqk', q, k,
                       preferred_element_type=jnp.float32)     # (Bb, T, T)
        if has_bias:
            s = s + bias_ref[h][None].astype(jnp.float32)
        s = s + mask
        s = s - jnp.max(s, axis=-1, keepdims=True)
        e = jnp.exp(s)
        p = e * _recip(jnp.sum(e, axis=-1, keepdims=True), approx_recip)

        ctx = jnp.einsum('bqk,bkd->bqd', p.astype(cd), v,
                         preferred_element_type=jnp.float32)   # (Bb, T, hd)
        ctx_ref[:, h * hd:(h + 1) * hd] = ctx.reshape(Bb * T, hd).astype(cd)

    # one full-depth output projection for all heads (K = d, not head_dim)
    out = jnp.dot(ctx_ref[...], wo_ref[...], preferred_element_type=jnp.float32)
    out = out + bo_ref[...].astype(jnp.float32)
    o_ref[...] = out.reshape(Bb, T, d).astype(o_ref.dtype)


def _pooler_kernel(tok_ref, mask_ref, w_ref, b_ref, o_ref, *,
                   hidden_size, approx_recip, compute_dtype):
    """SegmentPooler: (Nb, T, d), (Nb, T) -> (Nb, d)."""
    tok = tok_ref[...].astype(jnp.float32)
    m = mask_ref[...].astype(jnp.float32)
    m3 = m[:, :, None]

    denom = jnp.sum(m, axis=1, keepdims=True) + 1e-6
    avg = jnp.sum(m3 * tok, axis=1) / denom                               # (Nb, d)

    scores = jnp.sum(tok * avg[:, None, :], axis=2) / math.sqrt(hidden_size)
    scores = scores + m                  # literal torch: `scores += attention_mask`
    scores = scores - jnp.max(scores, axis=1, keepdims=True)
    e = jnp.exp(scores)
    p = e * _recip(jnp.sum(e, axis=1, keepdims=True), approx_recip)

    utt = jnp.sum(tok * p[:, :, None], axis=1)                            # (Nb, d)
    out = jnp.dot(utt.astype(compute_dtype), w_ref[...],
                  preferred_element_type=jnp.float32)
    out = out + b_ref[...].astype(jnp.float32)
    o_ref[...] = out.astype(o_ref.dtype)


def _updater_ffn_kernel(utt_ref, tok_ref, madd_ref, g1_ref, b1_ref,
                        wi_ref, bi_ref, wo2_ref, bo2_ref, g2_ref, b2_ref,
                        o_ref, *, hidden_size, eps, approx_recip,
                        compute_dtype):
    """Fused SegmentUpdater + LayerNorm + Intermediate + Output + LayerNorm.

    utt_ref: (Nb, d); tok_ref: (Nb, T, d); madd_ref: (Nb, T) precomputed
    exp((1-mask)*(-1e5)) additive term; o_ref: (Nb, T, d).
    The (Nb*T, I) GELU activation never leaves VMEM/vregs.
    """
    Nb, T, d = tok_ref.shape
    cd = compute_dtype

    utt = utt_ref[...].astype(jnp.float32)                                # (Nb, d)
    tok = tok_ref[...].astype(jnp.float32)                                # (Nb, T, d)
    u3 = utt[:, None, :]

    scores = jnp.sum(tok * u3, axis=2) / math.sqrt(hidden_size)          # (Nb, T)
    scores = scores + madd_ref[...].astype(jnp.float32)
    scores = scores - jnp.max(scores, axis=1, keepdims=True)
    e = jnp.exp(scores)
    p = e * _recip(jnp.sum(e, axis=1, keepdims=True), approx_recip)

    h = tok + p[:, :, None] * u3                                          # (Nb, T, d)

    # HSSAAttention.LayerNorm  ->  attention_output
    mean = jnp.mean(h, axis=-1, keepdims=True)
    var = jnp.mean(jnp.square(h - mean), axis=-1, keepdims=True)
    a = (h - mean) * jax.lax.rsqrt(var + eps)
    a = a * g1_ref[...].astype(jnp.float32) + b1_ref[...].astype(jnp.float32)

    # Intermediate + Output (residual onto attention_output) + LayerNorm
    a2 = a.reshape(Nb * T, d)
    hid = jnp.dot(a2.astype(cd), wi_ref[...], preferred_element_type=jnp.float32)
    hid = hid + bi_ref[...].astype(jnp.float32)
    # TODO(synk): reference Intermediate class not provided; tanh-GELU assumed.
    hid = jax.nn.gelu(hid, approximate=True)
    y = jnp.dot(hid.astype(cd), wo2_ref[...], preferred_element_type=jnp.float32)
    y = y + bo2_ref[...].astype(jnp.float32) + a2

    mean2 = jnp.mean(y, axis=-1, keepdims=True)
    var2 = jnp.mean(jnp.square(y - mean2), axis=-1, keepdims=True)
    y = (y - mean2) * jax.lax.rsqrt(var2 + eps)
    y = y * g2_ref[...].astype(jnp.float32) + b2_ref[...].astype(jnp.float32)
    o_ref[...] = y.reshape(Nb, T, d).astype(o_ref.dtype)


# ----------------------------------------------------------------------------
# Pallas wrappers (grids / BlockSpecs / VMEM-budgeted tiles)
# ----------------------------------------------------------------------------

def self_attention(x, add_mask, pos_bias, p, *, num_heads, cfg):
    """x: (Bp, T, d); add_mask: (Bp, Mq, T) additive f32; pos_bias: (H,T,T) or None."""
    Bp, T, d = x.shape
    Mq = add_mask.shape[1]
    H = num_heads
    cd = cfg['matmul_dtype']
    act = cfg['activation_dtype']
    has_bias = pos_bias is not None

    cdb = jnp.dtype(cd).itemsize
    in_b = jnp.dtype(x.dtype).itemsize
    out_b = jnp.dtype(act).itemsize
    bias_b = jnp.dtype(pos_bias.dtype).itemsize if has_bias else 0

    bf = 1 if _buffered_supported() else 2
    resident = bf * (d * 3 * d * cdb + 3 * d * 4 + d * d * cdb + d * 4
                     + (H * T * T * bias_b if has_bias else 0))
    # x / mask / out blocks double-buffered + in-kernel qkv, ctx scratch, scores
    per_row = (2 * T * d * in_b + 2 * Mq * T * 4 + 2 * T * d * out_b
               + 3 * T * d * (4 + cdb) + T * d * cdb + 2 * T * T * 4)
    budget = int(_vmem_limit_bytes() * 0.7) - resident
    Bb, Bp_pad = _choose_row_tile(Bp, per_row, budget, cap=256)

    xp = _pad_rows(x, Bp_pad)
    mp = _pad_rows(add_mask, Bp_pad)

    kernel = functools.partial(_attn_kernel, num_heads=H, head_dim=d // H,
                               has_bias=has_bias,
                               approx_recip=cfg['approx_reciprocal'],
                               compute_dtype=cd)

    in_specs = [pl.BlockSpec((Bb, T, d), lambda b: (b, 0, 0)),
                pl.BlockSpec((Bb, Mq, T), lambda b: (b, 0, 0))]
    ins = [xp, mp]
    if has_bias:
        in_specs.append(_const_spec((H, T, T)))
        ins.append(pos_bias)
    in_specs += [_const_spec((d, 3 * d)), _const_spec((1, 3 * d)),
                 _const_spec((d, d)), _const_spec((1, d))]
    ins += [p['wqkv'], p['bqkv'], p['wo'], p['bo']]

    out = pl.pallas_call(
        kernel,
        out_shape=jax.ShapeDtypeStruct((Bp_pad, T, d), act),
        grid=(Bp_pad // Bb,),
        in_specs=in_specs,
        out_specs=pl.BlockSpec((Bb, T, d), lambda b: (b, 0, 0)),
        scratch_shapes=[pltpu.VMEM((Bb * T, d), cd)],
        compiler_params=_compiler_params(),
    )(*ins)
    return out[:Bp] if Bp_pad != Bp else out


def segment_pooler(token_states, attention_mask, w, b, *, cfg):
    N, T, d = token_states.shape
    cd = cfg['matmul_dtype']
    act = cfg['activation_dtype']
    in_b = jnp.dtype(token_states.dtype).itemsize
    cdb = jnp.dtype(cd).itemsize
    out_b = jnp.dtype(act).itemsize

    bf = 1 if _buffered_supported() else 2
    resident = bf * (d * d * cdb + d * 4)
    per_row = 2 * T * d * in_b + 2 * T * 4 + 2 * d * out_b + 2 * T * d * 4
    Nb, N_pad = _choose_row_tile(N, per_row,
                                 int(_vmem_limit_bytes() * 0.7) - resident,
                                 cap=512)

    tok = _pad_rows(token_states, N_pad)
    am = _pad_rows(attention_mask, N_pad)

    kernel = functools.partial(_pooler_kernel, hidden_size=d,
                               approx_recip=cfg['approx_reciprocal'],
                               compute_dtype=cd)
    out = pl.pallas_call(
        kernel,
        out_shape=jax.ShapeDtypeStruct((N_pad, d), act),
        grid=(N_pad // Nb,),
        in_specs=[pl.BlockSpec((Nb, T, d), lambda i: (i, 0, 0)),
                  pl.BlockSpec((Nb, T), lambda i: (i, 0)),
                  _const_spec((d, d)),
                  _const_spec((1, d))],
        out_specs=pl.BlockSpec((Nb, d), lambda i: (i, 0)),
        compiler_params=_compiler_params(),
    )(tok, am, w, b)
    return out[:N] if N_pad != N else out


def updater_ffn(utt_states, token_states, upd_add, lp, eps, *, cfg):
    """Fused SegmentUpdater + LN + Intermediate + Output + LN, row-tiled."""
    N, T, d = token_states.shape
    I = lp['wi'].shape[1]
    cd = cfg['matmul_dtype']
    act = cfg['activation_dtype']
    cdb = jnp.dtype(cd).itemsize
    in_b = jnp.dtype(token_states.dtype).itemsize
    ub = jnp.dtype(utt_states.dtype).itemsize
    out_b = jnp.dtype(act).itemsize

    bf = 1 if _buffered_supported() else 2
    resident = bf * ((d * I + I * d) * cdb + (I + 5 * d) * 4)
    per_row = (2 * T * d * in_b + 2 * d * ub + 2 * T * 4 + 2 * T * d * out_b
               + 3 * T * d * 4 + T * I * (4 + cdb))
    Nb, N_pad = _choose_row_tile(N, per_row,
                                 int(_vmem_limit_bytes() * 0.7) - resident,
                                 cap=256)

    utt = _pad_rows(utt_states, N_pad)
    tok = _pad_rows(token_states, N_pad)
    madd = _pad_rows(upd_add, N_pad)

    kernel = functools.partial(_updater_ffn_kernel, hidden_size=d, eps=eps,
                               approx_recip=cfg['approx_reciprocal'],
                               compute_dtype=cd)
    out = pl.pallas_call(
        kernel,
        out_shape=jax.ShapeDtypeStruct((N_pad, T, d), act),
        grid=(N_pad // Nb,),
        in_specs=[pl.BlockSpec((Nb, d), lambda i: (i, 0)),
                  pl.BlockSpec((Nb, T, d), lambda i: (i, 0, 0)),
                  pl.BlockSpec((Nb, T), lambda i: (i, 0)),
                  _const_spec((1, d)), _const_spec((1, d)),
                  _const_spec((d, I)), _const_spec((1, I)),
                  _const_spec((I, d)), _const_spec((1, d)),
                  _const_spec((1, d)), _const_spec((1, d))],
        out_specs=pl.BlockSpec((Nb, T, d), lambda i: (i, 0, 0)),
        compiler_params=_compiler_params(),
    )(utt, tok, madd, lp['ln1_g'], lp['ln1_b'],
      lp['wi'], lp['bi'], lp['wo2'], lp['bo2'], lp['ln2_g'], lp['ln2_b'])
    return out[:N] if N_pad != N else out


# ----------------------------------------------------------------------------
# Glue: relative position bias, masks, layer / encoder composition
# ----------------------------------------------------------------------------

def relative_position_bucket(relative_position, num_buckets=32, max_distance=128):
    ret = jnp.zeros_like(relative_position)
    n = -relative_position
    num_buckets //= 2
    ret = ret + (n < 0).astype(jnp.int32) * num_buckets
    n = jnp.abs(n)
    max_exact = num_buckets // 2
    is_small = n < max_exact
    n_safe = jnp.maximum(n, 1)          # avoid log(0) on the non-selected branch
    val_if_large = max_exact + (
        jnp.log(n_safe.astype(jnp.float32) / max_exact)
        / math.log(max_distance / max_exact)
        * (num_buckets - max_exact)
    ).astype(jnp.int32)
    val_if_large = jnp.minimum(val_if_large, num_buckets - 1)
    ret = ret + jnp.where(is_small, n, val_if_large)
    return ret


def compute_position_bias(rel_emb, qlen, num_buckets=32):
    """Shared (H, T, T) position bias (no batch broadcast)."""
    cp = jnp.arange(qlen, dtype=jnp.int32)[:, None]
    mp = jnp.arange(qlen, dtype=jnp.int32)[None, :]
    buckets = relative_position_bucket(mp - cp, num_buckets=num_buckets)
    values = rel_emb[buckets]                        # (T, T, H) gather (glue)
    return jnp.transpose(values, (2, 0, 1)).astype(jnp.float32)   # (H, T, T)


def hssa_layer(lp, hidden_states, am, tok_mask_add, utt_mask_add, upd_add,
               pos_bias, max_dia_len, cfg):
    BS, T, d = hidden_states.shape
    H = cfg['num_attention_heads']
    eps = cfg['layer_norm_eps']

    # token-level self-attention (within segment), shared position bias
    token_states = self_attention(hidden_states, tok_mask_add, pos_bias,
                                  lp['attn'], num_heads=H, cfg=cfg)

    # pool segments -> utterance states
    utt = segment_pooler(token_states, am, lp['pooler_w'], lp['pooler_b'], cfg=cfg)
    B = BS // max_dia_len
    utt = utt.reshape(B, max_dia_len, d)

    # utterance-level self-attention (same weights, no position bias)
    utt = self_attention(utt, utt_mask_add, None, lp['attn'],
                         num_heads=H, cfg=cfg)
    utt = utt.reshape(BS, d)

    # fused: segment update + LayerNorm + Intermediate + Output + LayerNorm
    return updater_ffn(utt, token_states, upd_add, lp, eps, cfg=cfg)


def hssa_encoder_forward(params, hidden_states, attention_mask, max_dia_len,
                         utterance_mask, cfg):
    BS, T, d = hidden_states.shape

    # shared (H, T, T) position bias, carried in the matmul dtype
    pos_bias = compute_position_bias(
        params['rel_emb'], T,
        num_buckets=cfg['relative_attention_num_buckets']
    ).astype(cfg['matmul_dtype'])

    am = attention_mask.astype(jnp.float32)                      # (BS, T)
    # token-level additive mask: (BS, 1, T), broadcast over heads & queries
    tok_mask_add = ((1.0 - am) * (-10000.0))[:, None, :]
    # precomputed updater additive term (literal torch semantics; == am for a
    # binary mask) — computed once here, not per kernel step
    upd_add = jnp.exp((1.0 - am) * (-100000.0))                  # (BS, T)

    um = utterance_mask.astype(jnp.float32)
    B, S = um.shape
    if cfg['casual_utterance_attention']:
        tril = jnp.tril(jnp.ones((1, S, S), dtype=jnp.float32))
        utt_mask_add = (1.0 - um[:, None, :] * tril) * (-10000.0)   # (B, S, S)
    else:
        utt_mask_add = ((1.0 - um) * (-10000.0))[:, None, :]        # (B, 1, S)

    x = hidden_states.astype(cfg['activation_dtype'])
    for lp in params['layers']:
        x = hssa_layer(lp, x, am, tok_mask_add, utt_mask_add, upd_add,
                       pos_bias, max_dia_len, cfg)
    return x.astype(hidden_states.dtype)


# ----------------------------------------------------------------------------
# Deterministic parameter init + one-time compute-dtype preparation
# ----------------------------------------------------------------------------

def init_params(key, cfg):
    d = cfg['hidden_size']
    I = cfg['intermediate_size']
    H = cfg['num_attention_heads']
    L = cfg['num_hidden_layers']
    NB = cfg['relative_attention_num_buckets']

    n_per_layer = 10
    keys = jax.random.split(key, L * n_per_layer + 1)
    it = iter(keys[:-1])

    def nrm(shape):
        return (0.02 * jax.random.normal(next(it), shape)).astype(jnp.float32)

    layers = []
    for _ in range(L):
        attn = {'wqkv': nrm((d, 3 * d)), 'bqkv': nrm((1, 3 * d)),
                'wo': nrm((d, d)), 'bo': nrm((1, d))}
        layers.append({
            'attn': attn,
            'pooler_w': nrm((d, d)), 'pooler_b': nrm((1, d)),
            'ln1_g': jnp.ones((1, d), jnp.float32), 'ln1_b': jnp.zeros((1, d), jnp.float32),
            'wi': nrm((d, I)), 'bi': nrm((1, I)),
            'wo2': nrm((I, d)), 'bo2': nrm((1, d)),
            'ln2_g': jnp.ones((1, d), jnp.float32), 'ln2_b': jnp.zeros((1, d), jnp.float32),
        })
    rel_emb = (0.02 * jax.random.normal(keys[-1], (NB, H))).astype(jnp.float32)
    return {'layers': layers, 'rel_emb': rel_emb}


def prepare_params(params, cfg):
    """Pre-cast matmul weights to the compute dtype once and fold the
    1/sqrt(head_dim) attention scale into the Q columns of wqkv/bqkv."""
    cd = cfg['matmul_dtype']
    d = cfg['hidden_size']
    H = cfg['num_attention_heads']
    scale = 1.0 / math.sqrt(d // H)
    qscale = jnp.concatenate([jnp.full((d,), scale, jnp.float32),
                              jnp.ones((2 * d,), jnp.float32)])[None, :]

    layers = []
    for lp in params['layers']:
        a = lp['attn']
        layers.append({
            'attn': {
                'wqkv': (a['wqkv'] * qscale).astype(cd),
                'bqkv': (a['bqkv'] * qscale).astype(jnp.float32),
                'wo': a['wo'].astype(cd),
                'bo': a['bo'].astype(jnp.float32),
            },
            'pooler_w': lp['pooler_w'].astype(cd),
            'pooler_b': lp['pooler_b'].astype(jnp.float32),
            'ln1_g': lp['ln1_g'].astype(jnp.float32),
            'ln1_b': lp['ln1_b'].astype(jnp.float32),
            'wi': lp['wi'].astype(cd), 'bi': lp['bi'].astype(jnp.float32),
            'wo2': lp['wo2'].astype(cd), 'bo2': lp['bo2'].astype(jnp.float32),
            'ln2_g': lp['ln2_g'].astype(jnp.float32),
            'ln2_b': lp['ln2_b'].astype(jnp.float32),
        })
    return {'layers': layers, 'rel_emb': params['rel_emb']}


# ----------------------------------------------------------------------------
# Demo
# ----------------------------------------------------------------------------

if __name__ == "__main__":
    cfg = dict(hidden_size=32, num_attention_heads=4, num_hidden_layers=2,
               intermediate_size=64, layer_norm_eps=1e-12,
               relative_attention_num_buckets=32,
               casual_utterance_attention=False,
               # bf16 MXU inputs / activations, f32 accumulation & LN/softmax.
               # Set both to jnp.float32 (and approx_reciprocal=False) for
               # exact-f32 parity checks against the PyTorch reference.
               matmul_dtype=jnp.bfloat16,
               activation_dtype=jnp.bfloat16,
               approx_reciprocal=True)

    B, S, T, d = 2, 4, 8, cfg['hidden_size']

    key = jax.random.PRNGKey(0)
    k_params, k_x = jax.random.split(key, 2)
    params = prepare_params(init_params(k_params, cfg), cfg)

    hidden_states = jax.random.normal(k_x, (B * S, T, d), dtype=jnp.float32)
    lengths = jnp.array([T, T - 2, T - 1, 3, T, 5, T - 3, 4], dtype=jnp.int32)
    attention_mask = (jnp.arange(T)[None, :] < lengths[:, None]).astype(jnp.float32)  # (B*S, T)
    utterance_mask = jnp.array([[1, 1, 1, 0],
                                [1, 1, 1, 1]], dtype=jnp.float32)                     # (B, S)

    out = hssa_encoder_forward(params, hidden_states, attention_mask, S,
                               utterance_mask, cfg)
    out = jax.block_until_ready(out)
    assert out.shape == (B * S, T, d)
    assert bool(jnp.all(jnp.isfinite(out)))
    print("KERNEL_OK")
</pallas_src>

<mosaic_0001>
module attributes {stable_mosaic.version = 11 : i64} {
  func.func @k(%arg0: i32, %arg1: memref<8x128xf32, #tpu.memory_space<vmem>>, %arg2: memref<8x128xf32, #tpu.memory_space<vmem>>, %arg3: memref<8x128xf32, #tpu.memory_space<vmem>>) attributes {dimension_semantics = [#tpu.dimension_semantics<arbitrary>], iteration_bounds = array<i64: 1>, scalar_prefetch = 0 : i64, scratch_operands = 0 : i64, tpu.core_type = #tpu.core_type<tc>, window_params = [{pipeline_mode = #tpu.pipeline_mode<synchronous>, transform_indices = @transform_0, window_bounds = array<i64: 8, 128>}, {pipeline_mode = #tpu.pipeline_mode<synchronous>, transform_indices = @transform_1, window_bounds = array<i64: 8, 128>}, {pipeline_mode = #tpu.pipeline_mode<synchronous>, transform_indices = @transform_2, window_bounds = array<i64: 8, 128>}]} {
    %c0 = arith.constant 0 : index
    %c0_0 = arith.constant 0 : index
    %0 = vector.load %arg1[%c0, %c0_0] : memref<8x128xf32, #tpu.memory_space<vmem>>, vector<8x128xf32>
    %c0_1 = arith.constant 0 : index
    %c0_2 = arith.constant 0 : index
    %1 = vector.load %arg2[%c0_1, %c0_2] : memref<8x128xf32, #tpu.memory_space<vmem>>, vector<8x128xf32>
    %2 = arith.addf %0, %1 : vector<8x128xf32>
    %c0_3 = arith.constant 0 : index
    %c0_4 = arith.constant 0 : index
    %3 = vector.load %arg3[%c0_3, %c0_4] : memref<8x128xf32, #tpu.memory_space<vmem>>, vector<8x128xf32>
    tpu.vector_store %arg3[%c0_3, %c0_4], %2 {strides = array<i32>} : memref<8x128xf32, #tpu.memory_space<vmem>>, vector<8x128xf32>,
    return
  }
  func.func @transform_0(%arg0: i32) -> (i32, i32) {
    %c0_i32 = arith.constant 0 : i32
    %c0_i32_0 = arith.constant 0 : i32
    %c0_i32_1 = arith.constant 0 : i32
    return %c0_i32, %c0_i32_0 : i32, i32
  }
  func.func @transform_1(%arg0: i32) -> (i32, i32) {
    %c0_i32 = arith.constant 0 : i32
    %c0_i32_0 = arith.constant 0 : i32
    %c0_i32_1 = arith.constant 0 : i32
    return %c0_i32, %c0_i32_0 : i32, i32
  }
  func.func @transform_2(%arg0: i32) -> (i32, i32) {
    %c0_i32 = arith.constant 0 : i32
    %c0_i32_0 = arith.constant 0 : i32
    %c0_i32_1 = arith.constant 0 : i32
    return %c0_i32, %c0_i32_0 : i32, i32
  }
}

module attributes {stable_mosaic.version = 11 : i64} {
  func.func @_attn_kernel(%arg0: i32, %arg1: memref<8x8x32xbf16, #tpu.memory_space<vmem>>, %arg2: memref<8x1x8xf32, #tpu.memory_space<vmem>>, %arg3: memref<4x8x8xbf16, #tpu.memory_space<vmem>>, %arg4: memref<32x96xbf16, #tpu.memory_space<vmem>>, %arg5: memref<1x96xf32, #tpu.memory_space<vmem>>, %arg6: memref<32x32xbf16, #tpu.memory_space<vmem>>, %arg7: memref<1x32xf32, #tpu.memory_space<vmem>>, %arg8: memref<8x8x32xbf16, #tpu.memory_space<vmem>>, %arg9: memref<64x32xbf16, #tpu.memory_space<vmem>>) attributes {dimension_semantics = [#tpu.dimension_semantics<parallel>], iteration_bounds = array<i64: 1>, scalar_prefetch = 0 : i64, scratch_operands = 1 : i64, tpu.core_type = #tpu.core_type<tc>, window_params = [{transform_indices = @transform_0, window_bounds = array<i64: 8, 8, 32>}, {transform_indices = @transform_1, window_bounds = array<i64: 8, 1, 8>}, {pipeline_mode = #tpu.pipeline_mode<synchronous>, transform_indices = @transform_2, window_bounds = array<i64: 4, 8, 8>}, {pipeline_mode = #tpu.pipeline_mode<synchronous>, transform_indices = @transform_3, window_bounds = array<i64: 32, 96>}, {pipeline_mode = #tpu.pipeline_mode<synchronous>, transform_indices = @transform_4, window_bounds = array<i64: 1, 96>}, {pipeline_mode = #tpu.pipeline_mode<synchronous>, transform_indices = @transform_5, window_bounds = array<i64: 32, 32>}, {pipeline_mode = #tpu.pipeline_mode<synchronous>, transform_indices = @transform_6, window_bounds = array<i64: 1, 32>}, {transform_indices = @transform_7, window_bounds = array<i64: 8, 8, 32>}]} {
    %c0 = arith.constant 0 : index
    %c0_0 = arith.constant 0 : index
    %c0_1 = arith.constant 0 : index
    %0 = vector.load %arg1[%c0, %c0_0, %c0_1] : memref<8x8x32xbf16, #tpu.memory_space<vmem>>, vector<8x8x32xbf16>
    %1 = vector.shape_cast %0 : vector<8x8x32xbf16> to vector<64x32xbf16>
    %c0_2 = arith.constant 0 : index
    %c0_3 = arith.constant 0 : index
    %2 = vector.load %arg4[%c0_2, %c0_3] : memref<32x96xbf16, #tpu.memory_space<vmem>>, vector<32x96xbf16>
    %cst = arith.constant dense<0.000000e+00> : vector<64x96xf32>
    %3 = tpu.matmul %1, %2, %cst {dimension_numbers = #tpu.dot_dimension_numbers<[1], [0], [0], [1], [0, 0, 1, 1], [], []>} : vector<64x32xbf16>, vector<32x96xbf16>, vector<64x96xf32> -> vector<64x96xf32>
    %c0_4 = arith.constant 0 : index
    %c0_5 = arith.constant 0 : index
    %4 = vector.load %arg5[%c0_4, %c0_5] : memref<1x96xf32, #tpu.memory_space<vmem>>, vector<1x96xf32>
    %5 = vector.broadcast %4 : vector<1x96xf32> to vector<64x96xf32>
    %6 = arith.addf %3, %5 : vector<64x96xf32>
    %7 = arith.truncf %6 : vector<64x96xf32> to vector<64x96xbf16>
    %8 = vector.shape_cast %7 : vector<64x96xbf16> to vector<8x8x96xbf16>
    %c0_6 = arith.constant 0 : index
    %c0_7 = arith.constant 0 : index
    %c0_8 = arith.constant 0 : index
    %9 = vector.load %arg2[%c0_6, %c0_7, %c0_8] : memref<8x1x8xf32, #tpu.memory_space<vmem>>, vector<8x1x8xf32>
    %10 = vector.extract_strided_slice %8 {offsets = [0, 0, 0], sizes = [8, 8, 8], strides = [1, 1, 1]} : vector<8x8x96xbf16> to vector<8x8x8xbf16>
    %11 = vector.extract_strided_slice %8 {offsets = [0, 0, 32], sizes = [8, 8, 8], strides = [1, 1, 1]} : vector<8x8x96xbf16> to vector<8x8x8xbf16>
    %12 = vector.extract_strided_slice %8 {offsets = [0, 0, 64], sizes = [8, 8, 8], strides = [1, 1, 1]} : vector<8x8x96xbf16> to vector<8x8x8xbf16>
    "tpu.trace_start"() <{level = 10 : i32, message = "bqd,bkd->bqk"}> : () -> ()
    %cst_9 = arith.constant dense<0.000000e+00> : vector<8x8x8xf32>
    %13 = tpu.matmul %10, %11, %cst_9 {dimension_numbers = #tpu.dot_dimension_numbers<[2], [2], [1], [1], [0, 0, 0, 1, 1, 1], [0], [0]>} : vector<8x8x8xbf16>, vector<8x8x8xbf16>, vector<8x8x8xf32> -> vector<8x8x8xf32>
    "tpu.trace_stop"() : () -> ()
    %c0_10 = arith.constant 0 : index
    %c0_11 = arith.constant 0 : index
    %c0_12 = arith.constant 0 : index
    %14 = vector.load %arg3[%c0_10, %c0_11, %c0_12] : memref<4x8x8xbf16, #tpu.memory_space<vmem>>, vector<1x8x8xbf16>
    %15 = vector.shape_cast %14 : vector<1x8x8xbf16> to vector<8x8xbf16>
    %16 = vector.shape_cast %15 : vector<8x8xbf16> to vector<1x8x8xbf16>
    %17 = arith.extf %16 : vector<1x8x8xbf16> to vector<1x8x8xf32>
    %18 = vector.broadcast %17 : vector<1x8x8xf32> to vector<8x8x8xf32>
    %19 = arith.addf %13, %18 : vector<8x8x8xf32>
    %20 = vector.broadcast %9 : vector<8x1x8xf32> to vector<8x8x8xf32>
    %21 = arith.addf %19, %20 : vector<8x8x8xf32>
    %cst_13 = arith.constant dense<0xFF800000> : vector<8x8xf32>
    %22 = vector.multi_reduction <maximumf>, %21, %cst_13 [2] : vector<8x8x8xf32> to vector<8x8xf32>
    %23 = vector.shape_cast %22 : vector<8x8xf32> to vector<8x8x1xf32>
    %24 = vector.broadcast %23 : vector<8x8x1xf32> to vector<8x8x8xf32>
    %25 = arith.subf %21, %24 : vector<8x8x8xf32>
    %26 = math.exp %25 : vector<8x8x8xf32>
    %cst_14 = arith.constant dense<0.000000e+00> : vector<8x8xf32>
    %27 = vector.multi_reduction <add>, %26, %cst_14 [2] : vector<8x8x8xf32> to vector<8x8xf32>
    %28 = vector.shape_cast %27 : vector<8x8xf32> to vector<8x8x1xf32>
    %29 = tpu.reciprocal %28 {approx = true} : vector<8x8x1xf32> -> vector<8x8x1xf32>
    %30 = vector.broadcast %29 : vector<8x8x1xf32> to vector<8x8x8xf32>
    %31 = arith.mulf %26, %30 : vector<8x8x8xf32>
    %32 = arith.truncf %31 : vector<8x8x8xf32> to vector<8x8x8xbf16>
    "tpu.trace_start"() <{level = 10 : i32, message = "bqk,bkd->bqd"}> : () -> ()
    %cst_15 = arith.constant dense<0.000000e+00> : vector<8x8x8xf32>
    %33 = tpu.matmul %32, %12, %cst_15 {dimension_numbers = #tpu.dot_dimension_numbers<[2], [1], [1], [2], [0, 0, 0, 1, 1, 2], [0], [0]>} : vector<8x8x8xbf16>, vector<8x8x8xbf16>, vector<8x8x8xf32> -> vector<8x8x8xf32>
    "tpu.trace_stop"() : () -> ()
    %34 = vector.shape_cast %33 : vector<8x8x8xf32> to vector<64x8xf32>
    %35 = arith.truncf %34 : vector<64x8xf32> to vector<64x8xbf16>
    %c0_16 = arith.constant 0 : index
    %c0_17 = arith.constant 0 : index
    %36 = vector.load %arg9[%c0_16, %c0_17] : memref<64x32xbf16, #tpu.memory_space<vmem>>, vector<64x8xbf16>
    tpu.vector_store %arg9[%c0_16, %c0_17], %35 {strides = array<i32>} : memref<64x32xbf16, #tpu.memory_space<vmem>>, vector<64x8xbf16>,
    %37 = vector.extract_strided_slice %8 {offsets = [0, 0, 8], sizes = [8, 8, 8], strides = [1, 1, 1]} : vector<8x8x96xbf16> to vector<8x8x8xbf16>
    %38 = vector.extract_strided_slice %8 {offsets = [0, 0, 40], sizes = [8, 8, 8], strides = [1, 1, 1]} : vector<8x8x96xbf16> to vector<8x8x8xbf16>
    %39 = vector.extract_strided_slice %8 {offsets = [0, 0, 72], sizes = [8, 8, 8], strides = [1, 1, 1]} : vector<8x8x96xbf16> to vector<8x8x8xbf16>
    "tpu.trace_start"() <{level = 10 : i32, message = "bqd,bkd->bqk"}> : () -> ()
    %cst_18 = arith.constant dense<0.000000e+00> : vector<8x8x8xf32>
    %40 = tpu.matmul %37, %38, %cst_18 {dimension_numbers = #tpu.dot_dimension_numbers<[2], [2], [1], [1], [0, 0, 0, 1, 1, 1], [0], [0]>} : vector<8x8x8xbf16>, vector<8x8x8xbf16>, vector<8x8x8xf32> -> vector<8x8x8xf32>
    "tpu.trace_stop"() : () -> ()
    %c1 = arith.constant 1 : index
    %c0_19 = arith.constant 0 : index
    %c0_20 = arith.constant 0 : index
    %41 = vector.load %arg3[%c1, %c0_19, %c0_20] : memref<4x8x8xbf16, #tpu.memory_space<vmem>>, vector<1x8x8xbf16>
    %42 = vector.shape_cast %41 : vector<1x8x8xbf16> to vector<8x8xbf16>
    %43 = vector.shape_cast %42 : vector<8x8xbf16> to vector<1x8x8xbf16>
    %44 = arith.extf %43 : vector<1x8x8xbf16> to vector<1x8x8xf32>
    %45 = vector.broadcast %44 : vector<1x8x8xf32> to vector<8x8x8xf32>
    %46 = arith.addf %40, %45 : vector<8x8x8xf32>
    %47 = vector.broadcast %9 : vector<8x1x8xf32> to vector<8x8x8xf32>
    %48 = arith.addf %46, %47 : vector<8x8x8xf32>
    %cst_21 = arith.constant dense<0xFF800000> : vector<8x8xf32>
    %49 = vector.multi_reduction <maximumf>, %48, %cst_21 [2] : vector<8x8x8xf32> to vector<8x8xf32>
    %50 = vector.shape_cast %49 : vector<8x8xf32> to vector<8x8x1xf32>
    %51 = vector.broadcast %50 : vector<8x8x1xf32> to vector<8x8x8xf32>
    %52 = arith.subf %48, %51 : vector<8x8x8xf32>
    %53 = math.exp %52 : vector<8x8x8xf32>
    %cst_22 = arith.constant dense<0.000000e+00> : vector<8x8xf32>
    %54 = vector.multi_reduction <add>, %53, %cst_22 [2] : vector<8x8x8xf32> to vector<8x8xf32>
    %55 = vector.shape_cast %54 : vector<8x8xf32> to vector<8x8x1xf32>
    %56 = tpu.reciprocal %55 {approx = true} : vector<8x8x1xf32> -> vector<8x8x1xf32>
    %57 = vector.broadcast %56 : vector<8x8x1xf32> to vector<8x8x8xf32>
    %58 = arith.mulf %53, %57 : vector<8x8x8xf32>
    %59 = arith.truncf %58 : vector<8x8x8xf32> to vector<8x8x8xbf16>
    "tpu.trace_start"() <{level = 10 : i32, message = "bqk,bkd->bqd"}> : () -> ()
    %cst_23 = arith.constant dense<0.000000e+00> : vector<8x8x8xf32>
    %60 = tpu.matmul %59, %39, %cst_23 {dimension_numbers = #tpu.dot_dimension_numbers<[2], [1], [1], [2], [0, 0, 0, 1, 1, 2], [0], [0]>} : vector<8x8x8xbf16>, vector<8x8x8xbf16>, vector<8x8x8xf32> -> vector<8x8x8xf32>
    "tpu.trace_stop"() : () -> ()
    %61 = vector.shape_cast %60 : vector<8x8x8xf32> to vector<64x8xf32>
    %62 = arith.truncf %61 : vector<64x8xf32> to vector<64x8xbf16>
    %c0_24 = arith.constant 0 : index
    %c8 = arith.constant 8 : index
    %63 = vector.load %arg9[%c0_24, %c8] : memref<64x32xbf16, #tpu.memory_space<vmem>>, vector<64x8xbf16>
    tpu.vector_store %arg9[%c0_24, %c8], %62 {strides = array<i32>} : memref<64x32xbf16, #tpu.memory_space<vmem>>, vector<64x8xbf16>,
    %64 = vector.extract_strided_slice %8 {offsets = [0, 0, 16], sizes = [8, 8, 8], strides = [1, 1, 1]} : vector<8x8x96xbf16> to vector<8x8x8xbf16>
    %65 = vector.extract_strided_slice %8 {offsets = [0, 0, 48], sizes = [8, 8, 8], strides = [1, 1, 1]} : vector<8x8x96xbf16> to vector<8x8x8xbf16>
    %66 = vector.extract_strided_slice %8 {offsets = [0, 0, 80], sizes = [8, 8, 8], strides = [1, 1, 1]} : vector<8x8x96xbf16> to vector<8x8x8xbf16>
    "tpu.trace_start"() <{level = 10 : i32, message = "bqd,bkd->bqk"}> : () -> ()
    %cst_25 = arith.constant dense<0.000000e+00> : vector<8x8x8xf32>
    %67 = tpu.matmul %64, %65, %cst_25 {dimension_numbers = #tpu.dot_dimension_numbers<[2], [2], [1], [1], [0, 0, 0, 1, 1, 1], [0], [0]>} : vector<8x8x8xbf16>, vector<8x8x8xbf16>, vector<8x8x8xf32> -> vector<8x8x8xf32>
    "tpu.trace_stop"() : () -> ()
    %c2 = arith.constant 2 : index
    %c0_26 = arith.constant 0 : index
    %c0_27 = arith.constant 0 : index
    %68 = vector.load %arg3[%c2, %c0_26, %c0_27] : memref<4x8x8xbf16, #tpu.memory_space<vmem>>, vector<1x8x8xbf16>
    %69 = vector.shape_cast %68 : vector<1x8x8xbf16> to vector<8x8xbf16>
    %70 = vector.shape_cast %69 : vector<8x8xbf16> to vector<1x8x8xbf16>
    %71 = arith.extf %70 : vector<1x8x8xbf16> to vector<1x8x8xf32>
    %72 = vector.broadcast %71 : vector<1x8x8xf32> to vector<8x8x8xf32>
    %73 = arith.addf %67, %72 : vector<8x8x8xf32>
    %74 = vector.broadcast %9 : vector<8x1x8xf32> to vector<8x8x8xf32>
    %75 = arith.addf %73, %74 : vector<8x8x8xf32>
    %cst_28 = arith.constant dense<0xFF800000> : vector<8x8xf32>
    %76 = vector.multi_reduction <maximumf>, %75, %cst_28 [2] : vector<8x8x8xf32> to vector<8x8xf32>
    %77 = vector.shape_cast %76 : vector<8x8xf32> to vector<8x8x1xf32>
    %78 = vector.broadcast %77 : vector<8x8x1xf32> to vector<8x8x8xf32>
    %79 = arith.subf %75, %78 : vector<8x8x8xf32>
    %80 = math.exp %79 : vector<8x8x8xf32>
    %cst_29 = arith.constant dense<0.000000e+00> : vector<8x8xf32>
    %81 = vector.multi_reduction <add>, %80, %cst_29 [2] : vector<8x8x8xf32> to vector<8x8xf32>
    %82 = vector.shape_cast %81 : vector<8x8xf32> to vector<8x8x1xf32>
    %83 = tpu.reciprocal %82 {approx = true} : vector<8x8x1xf32> -> vector<8x8x1xf32>
    %84 = vector.broadcast %83 : vector<8x8x1xf32> to vector<8x8x8xf32>
    %85 = arith.mulf %80, %84 : vector<8x8x8xf32>
    %86 = arith.truncf %85 : vector<8x8x8xf32> to vector<8x8x8xbf16>
    "tpu.trace_start"() <{level = 10 : i32, message = "bqk,bkd->bqd"}> : () -> ()
    %cst_30 = arith.constant dense<0.000000e+00> : vector<8x8x8xf32>
    %87 = tpu.matmul %86, %66, %cst_30 {dimension_numbers = #tpu.dot_dimension_numbers<[2], [1], [1], [2], [0, 0, 0, 1, 1, 2], [0], [0]>} : vector<8x8x8xbf16>, vector<8x8x8xbf16>, vector<8x8x8xf32> -> vector<8x8x8xf32>
    "tpu.trace_stop"() : () -> ()
    %88 = vector.shape_cast %87 : vector<8x8x8xf32> to vector<64x8xf32>
    %89 = arith.truncf %88 : vector<64x8xf32> to vector<64x8xbf16>
    %c0_31 = arith.constant 0 : index
    %c16 = arith.constant 16 : index
    %90 = vector.load %arg9[%c0_31, %c16] : memref<64x32xbf16, #tpu.memory_space<vmem>>, vector<64x8xbf16>
    tpu.vector_store %arg9[%c0_31, %c16], %89 {strides = array<i32>} : memref<64x32xbf16, #tpu.memory_space<vmem>>, vector<64x8xbf16>,
    %91 = vector.extract_strided_slice %8 {offsets = [0, 0, 24], sizes = [8, 8, 8], strides = [1, 1, 1]} : vector<8x8x96xbf16> to vector<8x8x8xbf16>
    %92 = vector.extract_strided_slice %8 {offsets = [0, 0, 56], sizes = [8, 8, 8], strides = [1, 1, 1]} : vector<8x8x96xbf16> to vector<8x8x8xbf16>
    %93 = vector.extract_strided_slice %8 {offsets = [0, 0, 88], sizes = [8, 8, 8], strides = [1, 1, 1]} : vector<8x8x96xbf16> to vector<8x8x8xbf16>
    "tpu.trace_start"() <{level = 10 : i32, message = "bqd,bkd->bqk"}> : () -> ()
    %cst_32 = arith.constant dense<0.000000e+00> : vector<8x8x8xf32>
    %94 = tpu.matmul %91, %92, %cst_32 {dimension_numbers = #tpu.dot_dimension_numbers<[2], [2], [1], [1], [0, 0, 0, 1, 1, 1], [0], [0]>} : vector<8x8x8xbf16>, vector<8x8x8xbf16>, vector<8x8x8xf32> -> vector<8x8x8xf32>
    "tpu.trace_stop"() : () -> ()
    %c3 = arith.constant 3 : index
    %c0_33 = arith.constant 0 : index
    %c0_34 = arith.constant 0 : index
    %95 = vector.load %arg3[%c3, %c0_33, %c0_34] : memref<4x8x8xbf16, #tpu.memory_space<vmem>>, vector<1x8x8xbf16>
    %96 = vector.shape_cast %95 : vector<1x8x8xbf16> to vector<8x8xbf16>
    %97 = vector.shape_cast %96 : vector<8x8xbf16> to vector<1x8x8xbf16>
    %98 = arith.extf %97 : vector<1x8x8xbf16> to vector<1x8x8xf32>
    %99 = vector.broadcast %98 : vector<1x8x8xf32> to vector<8x8x8xf32>
    %100 = arith.addf %94, %99 : vector<8x8x8xf32>
    %101 = vector.broadcast %9 : vector<8x1x8xf32> to vector<8x8x8xf32>
    %102 = arith.addf %100, %101 : vector<8x8x8xf32>
    %cst_35 = arith.constant dense<0xFF800000> : vector<8x8xf32>
    %103 = vector.multi_reduction <maximumf>, %102, %cst_35 [2] : vector<8x8x8xf32> to vector<8x8xf32>
    %104 = vector.shape_cast %103 : vector<8x8xf32> to vector<8x8x1xf32>
    %105 = vector.broadcast %104 : vector<8x8x1xf32> to vector<8x8x8xf32>
    %106 = arith.subf %102, %105 : vector<8x8x8xf32>
    %107 = math.exp %106 : vector<8x8x8xf32>
    %cst_36 = arith.constant dense<0.000000e+00> : vector<8x8xf32>
    %108 = vector.multi_reduction <add>, %107, %cst_36 [2] : vector<8x8x8xf32> to vector<8x8xf32>
    %109 = vector.shape_cast %108 : vector<8x8xf32> to vector<8x8x1xf32>
    %110 = tpu.reciprocal %109 {approx = true} : vector<8x8x1xf32> -> vector<8x8x1xf32>
    %111 = vector.broadcast %110 : vector<8x8x1xf32> to vector<8x8x8xf32>
    %112 = arith.mulf %107, %111 : vector<8x8x8xf32>
    %113 = arith.truncf %112 : vector<8x8x8xf32> to vector<8x8x8xbf16>
    "tpu.trace_start"() <{level = 10 : i32, message = "bqk,bkd->bqd"}> : () -> ()
    %cst_37 = arith.constant dense<0.000000e+00> : vector<8x8x8xf32>
    %114 = tpu.matmul %113, %93, %cst_37 {dimension_numbers = #tpu.dot_dimension_numbers<[2], [1], [1], [2], [0, 0, 0, 1, 1, 2], [0], [0]>} : vector<8x8x8xbf16>, vector<8x8x8xbf16>, vector<8x8x8xf32> -> vector<8x8x8xf32>
    "tpu.trace_stop"() : () -> ()
    %115 = vector.shape_cast %114 : vector<8x8x8xf32> to vector<64x8xf32>
    %116 = arith.truncf %115 : vector<64x8xf32> to vector<64x8xbf16>
    %c0_38 = arith.constant 0 : index
    %c24 = arith.constant 24 : index
    %117 = vector.load %arg9[%c0_38, %c24] : memref<64x32xbf16, #tpu.memory_space<vmem>>, vector<64x8xbf16>
    tpu.vector_store %arg9[%c0_38, %c24], %116 {strides = array<i32>} : memref<64x32xbf16, #tpu.memory_space<vmem>>, vector<64x8xbf16>,
    %c0_39 = arith.constant 0 : index
    %c0_40 = arith.constant 0 : index
    %118 = vector.load %arg9[%c0_39, %c0_40] : memref<64x32xbf16, #tpu.memory_space<vmem>>, vector<64x32xbf16>
    %c0_41 = arith.constant 0 : index
    %c0_42 = arith.constant 0 : index
    %119 = vector.load %arg6[%c0_41, %c0_42] : memref<32x32xbf16, #tpu.memory_space<vmem>>, vector<32x32xbf16>
    %cst_43 = arith.constant dense<0.000000e+00> : vector<64x32xf32>
    %120 = tpu.matmul %118, %119, %cst_43 {dimension_numbers = #tpu.dot_dimension_numbers<[1], [0], [0], [1], [0, 0, 1, 1], [], []>} : vector<64x32xbf16>, vector<32x32xbf16>, vector<64x32xf32> -> vector<64x32xf32>
    %c0_44 = arith.constant 0 : index
    %c0_45 = arith.constant 0 : index
    %121 = vector.load %arg7[%c0_44, %c0_45] : memref<1x32xf32, #tpu.memory_space<vmem>>, vector<1x32xf32>
    %122 = vector.broadcast %121 : vector<1x32xf32> to vector<64x32xf32>
    %123 = arith.addf %120, %122 : vector<64x32xf32>
    %124 = vector.shape_cast %123 : vector<64x32xf32> to vector<8x8x32xf32>
    %125 = arith.truncf %124 : vector<8x8x32xf32> to vector<8x8x32xbf16>
    %c0_46 = arith.constant 0 : index
    %c0_47 = arith.constant 0 : index
    %c0_48 = arith.constant 0 : index
    %126 = vector.load %arg8[%c0_46, %c0_47, %c0_48] : memref<8x8x32xbf16, #tpu.memory_space<vmem>>, vector<8x8x32xbf16>
    tpu.vector_store %arg8[%c0_46, %c0_47, %c0_48], %125 {strides = array<i32>} : memref<8x8x32xbf16, #tpu.memory_space<vmem>>, vector<8x8x32xbf16>,
    return
  }
  func.func @transform_0(%arg0: i32) -> (i32, i32, i32) {
    %c0_i32 = arith.constant 0 : i32
    %c0_i32_0 = arith.constant 0 : i32
    %c0_i32_1 = arith.constant 0 : i32
    return %arg0, %c0_i32, %c0_i32_0 : i32, i32, i32
  }
  func.func @transform_1(%arg0: i32) -> (i32, i32, i32) {
    %c0_i32 = arith.constant 0 : i32
    %c0_i32_0 = arith.constant 0 : i32
    %c0_i32_1 = arith.constant 0 : i32
    return %arg0, %c0_i32, %c0_i32_0 : i32, i32, i32
  }
  func.func @transform_2(%arg0: i32) -> (i32, i32, i32) {
    %c0_i32 = arith.constant 0 : i32
    %c0_i32_0 = arith.constant 0 : i32
    %c0_i32_1 = arith.constant 0 : i32
    %c0_i32_2 = arith.constant 0 : i32
    return %c0_i32, %c0_i32_0, %c0_i32_1 : i32, i32, i32
  }
  func.func @transform_3(%arg0: i32) -> (i32, i32) {
    %c0_i32 = arith.constant 0 : i32
    %c0_i32_0 = arith.constant 0 : i32
    %c0_i32_1 = arith.constant 0 : i32
    return %c0_i32, %c0_i32_0 : i32, i32
  }
  func.func @transform_4(%arg0: i32) -> (i32, i32) {
    %c0_i32 = arith.constant 0 : i32
    %c0_i32_0 = arith.constant 0 : i32
    %c0_i32_1 = arith.constant 0 : i32
    return %c0_i32, %c0_i32_0 : i32, i32
  }
  func.func @transform_5(%arg0: i32) -> (i32, i32) {
    %c0_i32 = arith.constant 0 : i32
    %c0_i32_0 = arith.constant 0 : i32
    %c0_i32_1 = arith.constant 0 : i32
    return %c0_i32, %c0_i32_0 : i32, i32
  }
  func.func @transform_6(%arg0: i32) -> (i32, i32) {
    %c0_i32 = arith.constant 0 : i32
    %c0_i32_0 = arith.constant 0 : i32
    %c0_i32_1 = arith.constant 0 : i32
    return %c0_i32, %c0_i32_0 : i32, i32
  }
  func.func @transform_7(%arg0: i32) -> (i32, i32, i32) {
    %c0_i32 = arith.constant 0 : i32
    %c0_i32_0 = arith.constant 0 : i32
    %c0_i32_1 = arith.constant 0 : i32
    return %arg0, %c0_i32, %c0_i32_0 : i32, i32, i32
  }
}

</mosaic_0001>

<llo_original>
// kernel: tpu_custom_call.1
$region0: #{tpu_custom_call.1}
  #allocation0 [shape = 'u32[]', space=smem, size = 0x4, offset = 0x4, fixed_abs, tag = 'smem constant byte address 0x4 - core index']
  #allocation1 [shape = 'u32[144,128]{1,0:T(1,128)}', space=vmem, size = 0x12000, scoped, tag = 'internal scratch']
  %s0 = inlined_call_operand.hbm [shape: f32[8,128], index: 0, kind: input, shape index: {}]
  %s1 = inlined_call_operand.hbm [shape: f32[8,128], index: 1, kind: input, shape index: {}]
  %s2 = inlined_call_operand.hbm [shape: f32[8,128], index: 2, kind: output, shape index: {}]
  %s3 = sld [smem:[#allocation0]]
  $region26: #{tpu_custom_call.1} parent=0
    _
  %s5 = ssub.s32 1, %s3
  %s6 = scalar_select 0, %s5, %s3
  $region1: #{tpu_custom_call.1} parent=0
    #allocation2 [shape = 'u8[4096]{0}', space=vmem, size = 0x1000, scoped, tag = 'input window, operand 0, single buffered']
    #allocation3 [shape = 's32[1]{0}', space=sflag, size = 0x4, scoped, tag = 'scoped memory for tpu_custom_call.1']
    #allocation4 [shape = 's32[1]{0}', space=sflag, size = 0x4, scoped, tag = 'scoped memory for tpu_custom_call.1']
    #allocation5 [shape = 'u8[4096]{0}', space=vmem, size = 0x1000, scoped, tag = 'input window, operand 1, single buffered']
    #allocation6 [shape = 's32[1]{0}', space=sflag, size = 0x4, scoped, tag = 'scoped memory for tpu_custom_call.1']
    #allocation7 [shape = 'u8[4096]{0}', space=vmem, size = 0x1000, scoped, tag = 'output window, operand 0, single buffered']
    %7 = vsyncpa [#allocation3], 0
    %8 = vsyncpa [#allocation6], 0
    %9 = vsyncpa [#allocation4], 0
    // Predicated region
    $region2: #{tpu_custom_call.1} parent=1 // pred_check
      _
    $region3: #{tpu_custom_call.1} parent=1 // pred_check_branch
      %11 = sbr.rel (0) target = $region5
    $region4: #{tpu_custom_call.1} parent=1 // pred_region
      %s13 = ssub.s32 128, 128
      %14 = vsyncadd [#allocation3], %s13
      %s16 = sshll.u32 [#allocation2], 4
      %s17 = int_to_ptr.vmem [resolvable:$true] %s16
      %19 = dma.hbm_to_vmem [thread:$0]  %s0, 128, %s17, [#allocation3]
    $region5: #{tpu_custom_call.1} parent=1 // pred_fallthru
      _
    // Predicated region
    $region6: #{tpu_custom_call.1} parent=1 // pred_check
      _
    $region7: #{tpu_custom_call.1} parent=1 // pred_check_branch
      %21 = sbr.rel (0) target = $region9
    $region8: #{tpu_custom_call.1} parent=1 // pred_region
      %s23 = ssub.s32 128, 128
      %24 = vsyncadd [#allocation6], %s23
      %s26 = sshll.u32 [#allocation5], 4
      %s27 = int_to_ptr.vmem [resolvable:$true] %s26
      %29 = dma.hbm_to_vmem [thread:$0]  %s1, 128, %s27, [#allocation6]
    $region9: #{tpu_custom_call.1} parent=1 // pred_fallthru
      _
    // Predicated region
    $region10: #{tpu_custom_call.1} parent=1 // pred_check
      _
    $region11: #{tpu_custom_call.1} parent=1 // pred_check_branch
      %31 = sbr.rel (0) target = $region13
    $region12: #{tpu_custom_call.1} parent=1 // pred_region
      %32 = dma.done [#allocation3], 128
    $region13: #{tpu_custom_call.1} parent=1 // pred_fallthru
      _
    // Predicated region
    $region14: #{tpu_custom_call.1} parent=1 // pred_check
      _
    $region15: #{tpu_custom_call.1} parent=1 // pred_check_branch
      %34 = sbr.rel (0) target = $region17
    $region16: #{tpu_custom_call.1} parent=1 // pred_region
      %35 = dma.done [#allocation6], 128
    $region17: #{tpu_custom_call.1} parent=1 // pred_fallthru
      _
    %v36 = vld [vmem:[#allocation2] sm:$0xff]
    %v37 = vld [vmem:[#allocation5] sm:$0xff]
    %v38 = vadd.f32 %v36, %v37
    %39 = vst [vmem:[#allocation7] sm:$0xff] %v38
    // Predicated region
    $region18: #{tpu_custom_call.1} parent=1 // pred_check
      _
    $region19: #{tpu_custom_call.1} parent=1 // pred_check_branch
      %41 = sbr.rel (0) target = $region21
    $region20: #{tpu_custom_call.1} parent=1 // pred_region
      %s43 = ssub.s32 128, 128
      %44 = vsyncadd [#allocation4], %s43
      %s46 = sshll.u32 [#allocation7], 4
      %s47 = int_to_ptr.vmem [resolvable:$true] %s46
      %49 = dma.vmem_to_hbm [thread:$0]  %s47, 128, %s2, [#allocation4]
    $region21: #{tpu_custom_call.1} parent=1 // pred_fallthru
      _
    // Predicated region
    $region22: #{tpu_custom_call.1} parent=1 // pred_check
      _
    $region23: #{tpu_custom_call.1} parent=1 // pred_check_branch
      %51 = sbr.rel (0) target = $region25
    $region24: #{tpu_custom_call.1} parent=1 // pred_region
      %52 = dma.done [#allocation4], 128
    $region25: #{tpu_custom_call.1} parent=1 // pred_fallthru
      _
    %53 = vsyncpa [#allocation3], 1
    %54 = vsyncpa [#allocation6], 1
    %55 = vsyncpa [#allocation4], 1

// kernel: tpu_custom_call.1
$region0: #{tpu_custom_call.1}
  #allocation0 [shape = 'u32[]', space=smem, size = 0x4, offset = 0x4, fixed_abs, tag = 'smem constant byte address 0x4 - core index']
  #allocation1 [shape = 'u32[144,128]{1,0:T(1,128)}', space=vmem, size = 0x12000, scoped, tag = 'internal scratch']
  #allocation2 [shape = 'bf16[64,32]{1,0:T(8,128)(2,1)}', space=vmem, size = 0x4000, scoped, tag = 'scratch operand']
  %s0 = inlined_call_operand.hbm [shape: bf16[8,8,32], index: 0, kind: input, shape index: {}]
  %s1 = inlined_call_operand.hbm [shape: f32[8,1,8], index: 1, kind: input, shape index: {}]
  %s2 = inlined_call_operand.hbm [shape: bf16[4,8,8], index: 2, kind: input, shape index: {}]
  %s3 = inlined_call_operand.hbm [shape: bf16[32,96], index: 3, kind: input, shape index: {}]
  %s4 = inlined_call_operand.vmem [shape: f32[1,96], index: 4, kind: input, shape index: {}]
  %s5 = inlined_call_operand.hbm [shape: bf16[32,32], index: 5, kind: input, shape index: {}]
  %s6 = inlined_call_operand.vmem [shape: f32[1,32], index: 6, kind: input, shape index: {}]
  %s7 = inlined_call_operand.hbm [shape: bf16[8,8,32], index: 7, kind: output, shape index: {}]
  %s8 = sld [smem:[#allocation0]]
  $region58: #{tpu_custom_call.1} parent=0
    _
  %s10 = ssub.s32 1, %s8
  %s11 = scalar_select 0, %s10, %s8
  $region1: #{tpu_custom_call.1} parent=0
    #allocation3 [shape = 'u8[16384]{0}', space=vmem, size = 0x4000, scoped, tag = 'input window, operand 0, single buffered']
    #allocation4 [shape = 's32[1]{0}', space=sflag, size = 0x4, scoped, tag = 'scoped memory for tpu_custom_call.1']
    #allocation5 [shape = 's32[1]{0}', space=sflag, size = 0x4, scoped, tag = 'scoped memory for tpu_custom_call.1']
    #allocation6 [shape = 'u8[4096]{0}', space=vmem, size = 0x1000, scoped, tag = 'input window, operand 1, single buffered']
    #allocation7 [shape = 's32[1]{0}', space=sflag, size = 0x4, scoped, tag = 'scoped memory for tpu_custom_call.1']
    #allocation8 [shape = 'u8[8192]{0}', space=vmem, size = 0x2000, scoped, tag = 'input window, operand 2, single buffered']
    #allocation9 [shape = 'u8[8192]{0}', space=vmem, size = 0x2000, scoped, tag = 'input window, operand 3, single buffered']
    #allocation10 [shape = 's32[1]{0}', space=sflag, size = 0x4, scoped, tag = 'scoped memory for tpu_custom_call.1']
    #allocation11 [shape = 'u8[8192]{0}', space=vmem, size = 0x2000, scoped, tag = 'input window, operand 5, single buffered']
    #allocation12 [shape = 'u8[16384]{0}', space=vmem, size = 0x4000, scoped, tag = 'output window, operand 0, single buffered']
    %12 = vsyncpa [#allocation4], 0
    %13 = vsyncpa [#allocation7], 0
    %14 = vsyncpa [#allocation10], 0
    %15 = vsyncpa [#allocation5], 0
    // Predicated region
    $region2: #{tpu_custom_call.1} parent=1 // pred_check
      _
    $region3: #{tpu_custom_call.1} parent=1 // pred_check_branch
      %17 = sbr.rel (0) target = $region5
    $region4: #{tpu_custom_call.1} parent=1 // pred_region
      %s19 = ssub.s32 512, 512
      %20 = vsyncadd [#allocation4], %s19
      %s21 = sshll.u32 [#allocation3], 4
      %s22 = int_to_ptr.vmem [resolvable:$true] %s21
      %27 = dma.hbm_to_vmem [thread:$0]  %s0, 512, %s22, [#allocation4], 64, 64, 4
    $region5: #{tpu_custom_call.1} parent=1 // pred_fallthru
      _
    // Predicated region
    $region6: #{tpu_custom_call.1} parent=1 // pred_check
      _
    $region7: #{tpu_custom_call.1} parent=1 // pred_check_branch
      %29 = sbr.rel (0) target = $region9
    $region8: #{tpu_custom_call.1} parent=1 // pred_region
      %s31 = ssub.s32 128, 128
      %32 = vsyncadd [#allocation7], %s31
      %s33 = sshll.u32 [#allocation6], 4
      %s34 = int_to_ptr.vmem [resolvable:$true] %s33
      %39 = dma.hbm_to_vmem [thread:$0]  %s1, 128, %s34, [#allocation7], 16, 16, 1
    $region9: #{tpu_custom_call.1} parent=1 // pred_fallthru
      _
    // Predicated region
    $region10: #{tpu_custom_call.1} parent=1 // pred_check
      _
    $region11: #{tpu_custom_call.1} parent=1 // pred_check_branch
      %41 = sbr.rel (0) target = $region13
    $region12: #{tpu_custom_call.1} parent=1 // pred_region
      %s43 = ssub.s32 256, 256
      %44 = vsyncadd [#allocation7], %s43
      %s45 = sshll.u32 [#allocation8], 4
      %s46 = int_to_ptr.vmem [resolvable:$true] %s45
      %51 = dma.hbm_to_vmem [thread:$0]  %s2, 256, %s46, [#allocation7], 64, 64, 4
    $region13: #{tpu_custom_call.1} parent=1 // pred_fallthru
      _
    // Predicated region
    $region14: #{tpu_custom_call.1} parent=1 // pred_check
      _
    $region15: #{tpu_custom_call.1} parent=1 // pred_check_branch
      %53 = sbr.rel (0) target = $region17
    $region16: #{tpu_custom_call.1} parent=1 // pred_region
      %s55 = ssub.s32 256, 256
      %56 = vsyncadd [#allocation10], %s55
      %s57 = sshll.u32 [#allocation9], 4
      %s58 = int_to_ptr.vmem [resolvable:$true] %s57
      %63 = dma.hbm_to_vmem [thread:$0]  %s3, 256, %s58, [#allocation10], 64, 64, 4
    $region17: #{tpu_custom_call.1} parent=1 // pred_fallthru
      _
    // Predicated region
    $region18: #{tpu_custom_call.1} parent=1 // pred_check
      _
    $region19: #{tpu_custom_call.1} parent=1 // pred_check_branch
      %65 = sbr.rel (0) target = $region21
    $region20: #{tpu_custom_call.1} parent=1 // pred_region
      _
    $region21: #{tpu_custom_call.1} parent=1 // pred_fallthru
      _
    // Predicated region
    $region22: #{tpu_custom_call.1} parent=1 // pred_check
      _
    $region23: #{tpu_custom_call.1} parent=1 // pred_check_branch
      %67 = sbr.rel (0) target = $region25
    $region24: #{tpu_custom_call.1} parent=1 // pred_region
      %s69 = ssub.s32 256, 256
      %70 = vsyncadd [#allocation10], %s69
      %s71 = sshll.u32 [#allocation11], 4
      %s72 = int_to_ptr.vmem [resolvable:$true] %s71
      %77 = dma.hbm_to_vmem [thread:$0]  %s5, 256, %s72, [#allocation10], 64, 64, 4
    $region25: #{tpu_custom_call.1} parent=1 // pred_fallthru
      _
    // Predicated region
    $region26: #{tpu_custom_call.1} parent=1 // pred_check
      _
    $region27: #{tpu_custom_call.1} parent=1 // pred_check_branch
      %79 = sbr.rel (0) target = $region29
    $region28: #{tpu_custom_call.1} parent=1 // pred_region
      _
    $region29: #{tpu_custom_call.1} parent=1 // pred_fallthru
      _
    // Predicated region
    $region30: #{tpu_custom_call.1} parent=1 // pred_check
      _
    $region31: #{tpu_custom_call.1} parent=1 // pred_check_branch
      %81 = sbr.rel (0) target = $region33
    $region32: #{tpu_custom_call.1} parent=1 // pred_region
      %82 = dma.done [#allocation4], 512
    $region33: #{tpu_custom_call.1} parent=1 // pred_fallthru
      _
    // Predicated region
    $region34: #{tpu_custom_call.1} parent=1 // pred_check
      _
    $region35: #{tpu_custom_call.1} parent=1 // pred_check_branch
      %84 = sbr.rel (0) target = $region37
    $region36: #{tpu_custom_call.1} parent=1 // pred_region
      %85 = dma.done [#allocation7], 128
    $region37: #{tpu_custom_call.1} parent=1 // pred_fallthru
      _
    // Predicated region
    $region38: #{tpu_custom_call.1} parent=1 // pred_check
      _
    $region39: #{tpu_custom_call.1} parent=1 // pred_check_branch
      %87 = sbr.rel (0) target = $region41
    $region40: #{tpu_custom_call.1} parent=1 // pred_region
      %88 = dma.done [#allocation7], 256
    $region41: #{tpu_custom_call.1} parent=1 // pred_fallthru
      _
    // Predicated region
    $region42: #{tpu_custom_call.1} parent=1 // pred_check
      _
    $region43: #{tpu_custom_call.1} parent=1 // pred_check_branch
      %90 = sbr.rel (0) target = $region45
    $region44: #{tpu_custom_call.1} parent=1 // pred_region
      %91 = dma.done [#allocation10], 256
    $region45: #{tpu_custom_call.1} parent=1 // pred_fallthru
      _
    // Predicated region
    $region46: #{tpu_custom_call.1} parent=1 // pred_check
      _
    $region47: #{tpu_custom_call.1} parent=1 // pred_check_branch
      %93 = sbr.rel (0) target = $region49
    $region48: #{tpu_custom_call.1} parent=1 // pred_region
      %94 = dma.done [#allocation10], 256
    $region49: #{tpu_custom_call.1} parent=1 // pred_fallthru
      _
    %v96 = vld [vmem:[#allocation3] sm:$0xf]
    %v97 = vld [vmem:[#allocation3 + $0x4] sm:$0xf]
    %v98 = vld [vmem:[#allocation3 + $0x8] sm:$0xf]
    %v99 = vld [vmem:[#allocation3 + $0xc] sm:$0xf]
    %v100 = vld [vmem:[#allocation3 + $0x10] sm:$0xf]
    %v101 = vld [vmem:[#allocation3 + $0x14] sm:$0xf]
    %v102 = vld [vmem:[#allocation3 + $0x18] sm:$0xf]
    %v103 = vld [vmem:[#allocation3 + $0x1c] sm:$0xf]
    %v104 = vld [vmem:[#allocation9] sm:$0xf]
    %v105 = vld [vmem:[#allocation9 + $0x4] sm:$0xf]
    %v106 = vld [vmem:[#allocation9 + $0x8] sm:$0xf]
    %v107 = vld [vmem:[#allocation9 + $0xc] sm:$0xf]
    %v108 = vld [vmem:[%s4] sm:$0x1]
    %v110 = vlaneseq
    %v111 = vshrl.u32 %v110, 7
    %v112 = vsub.s32 0, %v111
    %v113 = vrot.slane %v108, %v112
    %v123 = vunpack.c.l.b16 %v96
    %v124 = vunpack.c.l.b16 %v97
    %v125 = vunpack.c.l.b16 %v98
    %v126 = vunpack.c.l.b16 %v99
    %v127 = vunpack.c.l.b16 %v100
    %v128 = vunpack.c.l.b16 %v101
    %v129 = vunpack.c.l.b16 %v102
    %v130 = vunpack.c.l.b16 %v103
    %v131 = vpack.c.b16 %v124, %v123
    %v132 = vpack.c.b16 %v126, %v125
    %v133 = vpack.c.b16 %v128, %v127
    %v134 = vpack.c.b16 %v130, %v129
    %v139 = vunpack.c.l.b16 %v104
    %v140 = vunpack.c.l.b16 %v105
    %v141 = vunpack.c.l.b16 %v106
    %v142 = vunpack.c.l.b16 %v107
    %v143 = vpack.c.b16 %v140, %v139
    %v144 = vpack.c.b16 %v142, %v141
    %vm147 = vcmask 261120
    %v149 = vsel %vm147, %v131, 0
    %v152 = vsel %vm147, %v132, 0
    %v155 = vsel %vm147, %v133, 0
    %v158 = vsel %vm147, %v134, 0
    %160 = vmatprep.subr.bf16.mxu0 0
    %161 = vmatpush1.bf16.msra.mxu0 0
    %162 = vmatprep.subr.bf16.mxu0 0
    %163 = vmatpush1.bf16.msra.mxu0 0
    %164 = vmatprep.subr.bf16.mxu0 0
    %165 = vmatpush1.bf16.msra.mxu0 0
    %166 = vmatprep.subr.bf16.mxu0 0
    %167 = vmatpush1.bf16.msra.mxu0 0
    %168 = vmatprep.subr.bf16.mxu0 0
    %169 = vmatpush1.bf16.msra.mxu0 0
    %170 = vmatprep.subr.bf16.mxu0 0
    %171 = vmatpush1.bf16.msra.mxu0 0
    %172 = vmatprep.subr.bf16.mxu0 0
    %173 = vmatpush1.bf16.msra.mxu0 %v144
    %174 = vmatprep.subr.bf16.mxu0 0
    %175 = vmatpush1.bf16.msra.mxu0 %v143
    %176 = vmatprep.subr.bf16.mxu0 0
    %177 = vmatpush2.bf16.msra.mxu0 0
    %178 = vmatprep.subr.bf16.mxu0 0
    %179 = vmatpush2.bf16.msra.mxu0 0
    %180 = vmatprep.subr.bf16.mxu0 0
    %181 = vmatpush2.bf16.msra.mxu0 0
    %182 = vmatprep.subr.bf16.mxu0 0
    %183 = vmatpush2.bf16.msra.mxu0 0
    %184 = vmatprep.subr.bf16.mxu0 0
    %185 = vmatpush2.bf16.msra.mxu0 0
    %186 = vmatprep.subr.bf16.mxu0 0
    %187 = vmatpush2.bf16.msra.mxu0 0
    %188 = vmatprep.subr.bf16.mxu0 0
    %189 = vmatpush2.bf16.msra.mxu0 0
    %190 = vmatprep.subr.bf16.mxu0 0
    %191 = vmatpush2.bf16.msra.mxu0 0
    %192 = vmatprep.mubr.bf16.mxu0 0
    %193 = vmatmul.mubr.bf16.gmra.mxu0 %v149
    %v194 = vpop.f32.mrf.mxu0
    %v195 = vadd.f32 %v113, %v194
    %v196 = vpop.f32.mrf.mxu0
    %v197 = vpop.f32.mrf.mxu0
    %v198 = vadd.f32 %v113, %v197
    %v199 = vpop.f32.mrf.mxu0
    %200 = vmatprep.mubr.bf16.mxu0 0
    %201 = vmatmul.mubr.bf16.gmra.mxu0 %v152
    %v202 = vpop.f32.mrf.mxu0
    %v203 = vadd.f32 %v113, %v202
    %v204 = vpop.f32.mrf.mxu0
    %v205 = vpop.f32.mrf.mxu0
    %v206 = vadd.f32 %v113, %v205
    %v207 = vpop.f32.mrf.mxu0
    %208 = vmatprep.mubr.bf16.mxu0 0
    %209 = vmatmul.mubr.bf16.gmra.mxu0 %v155
    %v210 = vpop.f32.mrf.mxu0
    %v211 = vadd.f32 %v113, %v210
    %v212 = vpop.f32.mrf.mxu0
    %v213 = vpop.f32.mrf.mxu0
    %v214 = vadd.f32 %v113, %v213
    %v215 = vpop.f32.mrf.mxu0
    %216 = vmatprep.mubr.bf16.mxu0 0
    %217 = vmatmul.mubr.bf16.gmra.mxu0 %v158
    %v218 = vpop.f32.mrf.mxu0
    %v219 = vadd.f32 %v113, %v218
    %v220 = vpop.f32.mrf.mxu0
    %v221 = vpop.f32.mrf.mxu0
    %v222 = vadd.f32 %v113, %v221
    %v223 = vpop.f32.mrf.mxu0
    %224 = vdwg.mxu0
    %v225 = vpack.c.bf16 %v198, %v195
    %v226 = vpack.c.bf16 %v206, %v203
    %v227 = vpack.c.bf16 %v214, %v211
    %v228 = vpack.c.bf16 %v222, %v219
    %v233 = vunpack.c.l.b16 %v225
    %v234 = vunpack.c.h.b16 %v225
    %v235 = vunpack.c.l.b16 %v226
    %v236 = vunpack.c.h.b16 %v226
    %v237 = vunpack.c.l.b16 %v227
    %v238 = vunpack.c.h.b16 %v227
    %v239 = vunpack.c.l.b16 %v228
    %v240 = vunpack.c.h.b16 %v228
    %v241 = vpack.c.b16 %v233, %v233
    %v242 = vpack.c.b16 %v234, %v234
    %v243 = vpack.c.b16 %v235, %v235
    %v244 = vpack.c.b16 %v236, %v236
    %v245 = vpack.c.b16 %v237, %v237
    %v246 = vpack.c.b16 %v238, %v238
    %v247 = vpack.c.b16 %v239, %v239
    %v248 = vpack.c.b16 %v240, %v240
    %v249 = vld [vmem:[#allocation6] sm:$0x1]
    %v250 = vld [vmem:[#allocation6 + $0x1] sm:$0x1]
    %v251 = vld [vmem:[#allocation6 + $0x2] sm:$0x1]
    %v252 = vld [vmem:[#allocation6 + $0x3] sm:$0x1]
    %v253 = vld [vmem:[#allocation6 + $0x4] sm:$0x1]
    %v254 = vld [vmem:[#allocation6 + $0x5] sm:$0x1]
    %v255 = vld [vmem:[#allocation6 + $0x6] sm:$0x1]
    %v256 = vld [vmem:[#allocation6 + $0x7] sm:$0x1]
    %v257 = vld [vmem:[#allocation8] sm:$0xf]
    %v258 = vunpack.c.l.bf16 %v257
    %259 = vrot.lane.b32.xlu0 %v241, 96
    %v260 = vpop.permute.xlu0 %259
    %vm261 = vcmask 64512
    %v263 = vsel %vm261, %v241, 0
    %v266 = vsel %vm261, %v260, 0
    %268 = vmatprep.subr.bf16.mxu0 0
    %269 = vmatpush1.bf16.xpose.msra.mxu0 0
    %270 = vmatprep.subr.bf16.mxu0 0
    %271 = vmatpush1.bf16.xpose.msra.mxu0 0
    %272 = vmatprep.subr.bf16.mxu0 0
    %273 = vmatpush1.bf16.xpose.msra.mxu0 0
    %274 = vmatprep.subr.bf16.mxu0 0
    %275 = vmatpush1.bf16.xpose.msra.mxu0 0
    %276 = vmatprep.subr.bf16.mxu0 0
    %277 = vmatpush1.bf16.xpose.msra.mxu0 0
    %278 = vmatprep.subr.bf16.mxu0 0
    %279 = vmatpush1.bf16.xpose.msra.mxu0 0
    %280 = vmatprep.subr.bf16.mxu0 0
    %281 = vmatpush1.bf16.xpose.msra.mxu0 0
    %282 = vmatprep.subr.bf16.mxu0 0
    %283 = vmatpush1.bf16.xpose.msra.mxu0 %v266
    %284 = vmatprep.subr.bf16.mxu0 0
    %285 = vmatpush2.bf16.xpose.msra.mxu0 0
    %286 = vmatprep.subr.bf16.mxu0 0
    %287 = vmatpush2.bf16.xpose.msra.mxu0 0
    %288 = vmatprep.subr.bf16.mxu0 0
    %289 = vmatpush2.bf16.xpose.msra.mxu0 0
    %290 = vmatprep.subr.bf16.mxu0 0
    %291 = vmatpush2.bf16.xpose.msra.mxu0 0
    %292 = vmatprep.subr.bf16.mxu0 0
    %293 = vmatpush2.bf16.xpose.msra.mxu0 0
    %294 = vmatprep.subr.bf16.mxu0 0
    %295 = vmatpush2.bf16.xpose.msra.mxu0 0
    %296 = vmatprep.subr.bf16.mxu0 0
    %297 = vmatpush2.bf16.xpose.msra.mxu0 0
    %298 = vmatprep.subr.bf16.mxu0 0
    %299 = vmatpush2.bf16.xpose.msra.mxu0 0
    %300 = vmatprep.mubr.bf16.mxu0 0
    %301 = vmatmul.mubr.bf16.gmra.mxu0 %v263
    %v302 = vpop.f32.mrf.mxu0
    %v303 = vadd.f32 %v258, %v302
    %v304 = vpop.f32.mrf.mxu0
    %v305 = vpop.f32.mrf.mxu0
    %v306 = vpop.f32.mrf.mxu0
    %307 = vdwg.mxu0
    %308 = vrot.lane.b32.xlu0 %v242, 96
    %v309 = vpop.permute.xlu0 %308
    %v311 = vsel %vm261, %v242, 0
    %v314 = vsel %vm261, %v309, 0
    %316 = vmatprep.subr.bf16.mxu0 0
    %317 = vmatpush1.bf16.xpose.msra.mxu0 0
    %318 = vmatprep.subr.bf16.mxu0 0
    %319 = vmatpush1.bf16.xpose.msra.mxu0 0
    %320 = vmatprep.subr.bf16.mxu0 0
    %321 = vmatpush1.bf16.xpose.msra.mxu0 0
    %322 = vmatprep.subr.bf16.mxu0 0
    %323 = vmatpush1.bf16.xpose.msra.mxu0 0
    %324 = vmatprep.subr.bf16.mxu0 0
    %325 = vmatpush1.bf16.xpose.msra.mxu0 0
    %326 = vmatprep.subr.bf16.mxu0 0
    %327 = vmatpush1.bf16.xpose.msra.mxu0 0
    %328 = vmatprep.subr.bf16.mxu0 0
    %329 = vmatpush1.bf16.xpose.msra.mxu0 0
    %330 = vmatprep.subr.bf16.mxu0 0
    %331 = vmatpush1.bf16.xpose.msra.mxu0 %v314
    %332 = vmatprep.subr.bf16.mxu0 0
    %333 = vmatpush2.bf16.xpose.msra.mxu0 0
    %334 = vmatprep.subr.bf16.mxu0 0
    %335 = vmatpush2.bf16.xpose.msra.mxu0 0
    %336 = vmatprep.subr.bf16.mxu0 0
    %337 = vmatpush2.bf16.xpose.msra.mxu0 0
    %338 = vmatprep.subr.bf16.mxu0 0
    %339 = vmatpush2.bf16.xpose.msra.mxu0 0
    %340 = vmatprep.subr.bf16.mxu0 0
    %341 = vmatpush2.bf16.xpose.msra.mxu0 0
    %342 = vmatprep.subr.bf16.mxu0 0
    %343 = vmatpush2.bf16.xpose.msra.mxu0 0
    %344 = vmatprep.subr.bf16.mxu0 0
    %345 = vmatpush2.bf16.xpose.msra.mxu0 0
    %346 = vmatprep.subr.bf16.mxu0 0
    %347 = vmatpush2.bf16.xpose.msra.mxu0 0
    %348 = vmatprep.mubr.bf16.mxu0 0
    %349 = vmatmul.mubr.bf16.gmra.mxu0 %v311
    %v350 = vpop.f32.mrf.mxu0
    %v351 = vadd.f32 %v258, %v350
    %v352 = vpop.f32.mrf.mxu0
    %v353 = vpop.f32.mrf.mxu0
    %v354 = vpop.f32.mrf.mxu0
    %355 = vdwg.mxu0
    %356 = vrot.lane.b32.xlu0 %v243, 96
    %v357 = vpop.permute.xlu0 %356
    %v359 = vsel %vm261, %v243, 0
    %v362 = vsel %vm261, %v357, 0
    %364 = vmatprep.subr.bf16.mxu0 0
    %365 = vmatpush1.bf16.xpose.msra.mxu0 0
    %366 = vmatprep.subr.bf16.mxu0 0
    %367 = vmatpush1.bf16.xpose.msra.mxu0 0
    %368 = vmatprep.subr.bf16.mxu0 0
    %369 = vmatpush1.bf16.xpose.msra.mxu0 0
    %370 = vmatprep.subr.bf16.mxu0 0
    %371 = vmatpush1.bf16.xpose.msra.mxu0 0
    %372 = vmatprep.subr.bf16.mxu0 0
    %373 = vmatpush1.bf16.xpose.msra.mxu0 0
    %374 = vmatprep.subr.bf16.mxu0 0
    %375 = vmatpush1.bf16.xpose.msra.mxu0 0
    %376 = vmatprep.subr.bf16.mxu0 0
    %377 = vmatpush1.bf16.xpose.msra.mxu0 0
    %378 = vmatprep.subr.bf16.mxu0 0
    %379 = vmatpush1.bf16.xpose.msra.mxu0 %v362
    %380 = vmatprep.subr.bf16.mxu0 0
    %381 = vmatpush2.bf16.xpose.msra.mxu0 0
    %382 = vmatprep.subr.bf16.mxu0 0
    %383 = vmatpush2.bf16.xpose.msra.mxu0 0
    %384 = vmatprep.subr.bf16.mxu0 0
    %385 = vmatpush2.bf16.xpose.msra.mxu0 0
    %386 = vmatprep.subr.bf16.mxu0 0
    %387 = vmatpush2.bf16.xpose.msra.mxu0 0
    %388 = vmatprep.subr.bf16.mxu0 0
    %389 = vmatpush2.bf16.xpose.msra.mxu0 0
    %390 = vmatprep.subr.bf16.mxu0 0
    %391 = vmatpush2.bf16.xpose.msra.mxu0 0
    %392 = vmatprep.subr.bf16.mxu0 0
    %393 = vmatpush2.bf16.xpose.msra.mxu0 0
    %394 = vmatprep.subr.bf16.mxu0 0
    %395 = vmatpush2.bf16.xpose.msra.mxu0 0
    %396 = vmatprep.mubr.bf16.mxu0 0
    %397 = vmatmul.mubr.bf16.gmra.mxu0 %v359
    %v398 = vpop.f32.mrf.mxu0
    %v399 = vadd.f32 %v258, %v398
    %v400 = vpop.f32.mrf.mxu0
    %v401 = vpop.f32.mrf.mxu0
    %v402 = vpop.f32.mrf.mxu0
    %403 = vdwg.mxu0
    %404 = vrot.lane.b32.xlu0 %v244, 96
    %v405 = vpop.permute.xlu0 %404
    %v407 = vsel %vm261, %v244, 0
    %v410 = vsel %vm261, %v405, 0
    %412 = vmatprep.subr.bf16.mxu0 0
    %413 = vmatpush1.bf16.xpose.msra.mxu0 0
    %414 = vmatprep.subr.bf16.mxu0 0
    %415 = vmatpush1.bf16.xpose.msra.mxu0 0
    %416 = vmatprep.subr.bf16.mxu0 0
    %417 = vmatpush1.bf16.xpose.msra.mxu0 0
    %418 = vmatprep.subr.bf16.mxu0 0
    %419 = vmatpush1.bf16.xpose.msra.mxu0 0
    %420 = vmatprep.subr.bf16.mxu0 0
    %421 = vmatpush1.bf16.xpose.msra.mxu0 0
    %422 = vmatprep.subr.bf16.mxu0 0
    %423 = vmatpush1.bf16.xpose.msra.mxu0 0
    %424 = vmatprep.subr.bf16.mxu0 0
    %425 = vmatpush1.bf16.xpose.msra.mxu0 0
    %426 = vmatprep.subr.bf16.mxu0 0
    %427 = vmatpush1.bf16.xpose.msra.mxu0 %v410
    %428 = vmatprep.subr.bf16.mxu0 0
    %429 = vmatpush2.bf16.xpose.msra.mxu0 0
    %430 = vmatprep.subr.bf16.mxu0 0
    %431 = vmatpush2.bf16.xpose.msra.mxu0 0
    %432 = vmatprep.subr.bf16.mxu0 0
    %433 = vmatpush2.bf16.xpose.msra.mxu0 0
    %434 = vmatprep.subr.bf16.mxu0 0
    %435 = vmatpush2.bf16.xpose.msra.mxu0 0
    %436 = vmatprep.subr.bf16.mxu0 0
    %437 = vmatpush2.bf16.xpose.msra.mxu0 0
    %438 = vmatprep.subr.bf16.mxu0 0
    %439 = vmatpush2.bf16.xpose.msra.mxu0 0
    %440 = vmatprep.subr.bf16.mxu0 0
    %441 = vmatpush2.bf16.xpose.msra.mxu0 0
    %442 = vmatprep.subr.bf16.mxu0 0
    %443 = vmatpush2.bf16.xpose.msra.mxu0 0
    %444 = vmatprep.mubr.bf16.mxu0 0
    %445 = vmatmul.mubr.bf16.gmra.mxu0 %v407
    %v446 = vpop.f32.mrf.mxu0
    %v447 = vadd.f32 %v258, %v446
    %v448 = vpop.f32.mrf.mxu0
    %v449 = vpop.f32.mrf.mxu0
    %v450 = vpop.f32.mrf.mxu0
    %451 = vdwg.mxu0
    %452 = vrot.lane.b32.xlu0 %v245, 96
    %v453 = vpop.permute.xlu0 %452
    %v455 = vsel %vm261, %v245, 0
    %v458 = vsel %vm261, %v453, 0
    %460 = vmatprep.subr.bf16.mxu0 0
    %461 = vmatpush1.bf16.xpose.msra.mxu0 0
    %462 = vmatprep.subr.bf16.mxu0 0
    %463 = vmatpush1.bf16.xpose.msra.mxu0 0
    %464 = vmatprep.subr.bf16.mxu0 0
    %465 = vmatpush1.bf16.xpose.msra.mxu0 0
    %466 = vmatprep.subr.bf16.mxu0 0
    %467 = vmatpush1.bf16.xpose.msra.mxu0 0
    %468 = vmatprep.subr.bf16.mxu0 0
    %469 = vmatpush1.bf16.xpose.msra.mxu0 0
    %470 = vmatprep.subr.bf16.mxu0 0
    %471 = vmatpush1.bf16.xpose.msra.mxu0 0
    %472 = vmatprep.subr.bf16.mxu0 0
    %473 = vmatpush1.bf16.xpose.msra.mxu0 0
    %474 = vmatprep.subr.bf16.mxu0 0
    %475 = vmatpush1.bf16.xpose.msra.mxu0 %v458
    %476 = vmatprep.subr.bf16.mxu0 0
    %477 = vmatpush2.bf16.xpose.msra.mxu0 0
    %478 = vmatprep.subr.bf16.mxu0 0
    %479 = vmatpush2.bf16.xpose.msra.mxu0 0
    %480 = vmatprep.subr.bf16.mxu0 0
    %481 = vmatpush2.bf16.xpose.msra.mxu0 0
    %482 = vmatprep.subr.bf16.mxu0 0
    %483 = vmatpush2.bf16.xpose.msra.mxu0 0
    %484 = vmatprep.subr.bf16.mxu0 0
    %485 = vmatpush2.bf16.xpose.msra.mxu0 0
    %486 = vmatprep.subr.bf16.mxu0 0
    %487 = vmatpush2.bf16.xpose.msra.mxu0 0
    %488 = vmatprep.subr.bf16.mxu0 0
    %489 = vmatpush2.bf16.xpose.msra.mxu0 0
    %490 = vmatprep.subr.bf16.mxu0 0
    %491 = vmatpush2.bf16.xpose.msra.mxu0 0
    %492 = vmatprep.mubr.bf16.mxu0 0
    %493 = vmatmul.mubr.bf16.gmra.mxu0 %v455
    %v494 = vpop.f32.mrf.mxu0
    %v495 = vadd.f32 %v258, %v494
    %v496 = vpop.f32.mrf.mxu0
    %v497 = vpop.f32.mrf.mxu0
    %v498 = vpop.f32.mrf.mxu0
    %499 = vdwg.mxu0
    %500 = vrot.lane.b32.xlu0 %v246, 96
    %v501 = vpop.permute.xlu0 %500
    %v503 = vsel %vm261, %v246, 0
    %v506 = vsel %vm261, %v501, 0
    %508 = vmatprep.subr.bf16.mxu0 0
    %509 = vmatpush1.bf16.xpose.msra.mxu0 0
    %510 = vmatprep.subr.bf16.mxu0 0
    %511 = vmatpush1.bf16.xpose.msra.mxu0 0
    %512 = vmatprep.subr.bf16.mxu0 0
    %513 = vmatpush1.bf16.xpose.msra.mxu0 0
    %514 = vmatprep.subr.bf16.mxu0 0
    %515 = vmatpush1.bf16.xpose.msra.mxu0 0
    %516 = vmatprep.subr.bf16.mxu0 0
    %517 = vmatpush1.bf16.xpose.msra.mxu0 0
    %518 = vmatprep.subr.bf16.mxu0 0
    %519 = vmatpush1.bf16.xpose.msra.mxu0 0
    %520 = vmatprep.subr.bf16.mxu0 0
    %521 = vmatpush1.bf16.xpose.msra.mxu0 0
    %522 = vmatprep.subr.bf16.mxu0 0
    %523 = vmatpush1.bf16.xpose.msra.mxu0 %v506
    %524 = vmatprep.subr.bf16.mxu0 0
    %525 = vmatpush2.bf16.xpose.msra.mxu0 0
    %526 = vmatprep.subr.bf16.mxu0 0
    %527 = vmatpush2.bf16.xpose.msra.mxu0 0
    %528 = vmatprep.subr.bf16.mxu0 0
    %529 = vmatpush2.bf16.xpose.msra.mxu0 0
    %530 = vmatprep.subr.bf16.mxu0 0
    %531 = vmatpush2.bf16.xpose.msra.mxu0 0
    %532 = vmatprep.subr.bf16.mxu0 0
    %533 = vmatpush2.bf16.xpose.msra.mxu0 0
    %534 = vmatprep.subr.bf16.mxu0 0
    %535 = vmatpush2.bf16.xpose.msra.mxu0 0
    %536 = vmatprep.subr.bf16.mxu0 0
    %537 = vmatpush2.bf16.xpose.msra.mxu0 0
    %538 = vmatprep.subr.bf16.mxu0 0
    %539 = vmatpush2.bf16.xpose.msra.mxu0 0
    %540 = vmatprep.mubr.bf16.mxu0 0
    %541 = vmatmul.mubr.bf16.gmra.mxu0 %v503
    %v542 = vpop.f32.mrf.mxu0
    %v543 = vadd.f32 %v258, %v542
    %v544 = vpop.f32.mrf.mxu0
    %v545 = vpop.f32.mrf.mxu0
    %v546 = vpop.f32.mrf.mxu0
    %547 = vdwg.mxu0
    %548 = vrot.lane.b32.xlu0 %v247, 96
    %v549 = vpop.permute.xlu0 %548
    %v551 = vsel %vm261, %v247, 0
    %v554 = vsel %vm261, %v549, 0
    %556 = vmatprep.subr.bf16.mxu0 0
    %557 = vmatpush1.bf16.xpose.msra.mxu0 0
    %558 = vmatprep.subr.bf16.mxu0 0
    %559 = vmatpush1.bf16.xpose.msra.mxu0 0
    %560 = vmatprep.subr.bf16.mxu0 0
    %561 = vmatpush1.bf16.xpose.msra.mxu0 0
    %562 = vmatprep.subr.bf16.mxu0 0
    %563 = vmatpush1.bf16.xpose.msra.mxu0 0
    %564 = vmatprep.subr.bf16.mxu0 0
    %565 = vmatpush1.bf16.xpose.msra.mxu0 0
    %566 = vmatprep.subr.bf16.mxu0 0
    %567 = vmatpush1.bf16.xpose.msra.mxu0 0
    %568 = vmatprep.subr.bf16.mxu0 0
    %569 = vmatpush1.bf16.xpose.msra.mxu0 0
    %570 = vmatprep.subr.bf16.mxu0 0
    %571 = vmatpush1.bf16.xpose.msra.mxu0 %v554
    %572 = vmatprep.subr.bf16.mxu0 0
    %573 = vmatpush2.bf16.xpose.msra.mxu0 0
    %574 = vmatprep.subr.bf16.mxu0 0
    %575 = vmatpush2.bf16.xpose.msra.mxu0 0
    %576 = vmatprep.subr.bf16.mxu0 0
    %577 = vmatpush2.bf16.xpose.msra.mxu0 0
    %578 = vmatprep.subr.bf16.mxu0 0
    %579 = vmatpush2.bf16.xpose.msra.mxu0 0
    %580 = vmatprep.subr.bf16.mxu0 0
    %581 = vmatpush2.bf16.xpose.msra.mxu0 0
    %582 = vmatprep.subr.bf16.mxu0 0
    %583 = vmatpush2.bf16.xpose.msra.mxu0 0
    %584 = vmatprep.subr.bf16.mxu0 0
    %585 = vmatpush2.bf16.xpose.msra.mxu0 0
    %586 = vmatprep.subr.bf16.mxu0 0
    %587 = vmatpush2.bf16.xpose.msra.mxu0 0
    %588 = vmatprep.mubr.bf16.mxu0 0
    %589 = vmatmul.mubr.bf16.gmra.mxu0 %v551
    %v590 = vpop.f32.mrf.mxu0
    %v591 = vadd.f32 %v258, %v590
    %v592 = vpop.f32.mrf.mxu0
    %v593 = vpop.f32.mrf.mxu0
    %v594 = vpop.f32.mrf.mxu0
    %595 = vdwg.mxu0
    %596 = vrot.lane.b32.xlu0 %v248, 96
    %v597 = vpop.permute.xlu0 %596
    %v599 = vsel %vm261, %v248, 0
    %v602 = vsel %vm261, %v597, 0
    %604 = vmatprep.subr.bf16.mxu0 0
    %605 = vmatpush1.bf16.xpose.msra.mxu0 0
    %606 = vmatprep.subr.bf16.mxu0 0
    %607 = vmatpush1.bf16.xpose.msra.mxu0 0
    %608 = vmatprep.subr.bf16.mxu0 0
    %609 = vmatpush1.bf16.xpose.msra.mxu0 0
    %610 = vmatprep.subr.bf16.mxu0 0
    %611 = vmatpush1.bf16.xpose.msra.mxu0 0
    %612 = vmatprep.subr.bf16.mxu0 0
    %613 = vmatpush1.bf16.xpose.msra.mxu0 0
    %614 = vmatprep.subr.bf16.mxu0 0
    %615 = vmatpush1.bf16.xpose.msra.mxu0 0
    %616 = vmatprep.subr.bf16.mxu0 0
    %617 = vmatpush1.bf16.xpose.msra.mxu0 0
    %618 = vmatprep.subr.bf16.mxu0 0
    %619 = vmatpush1.bf16.xpose.msra.mxu0 %v602
    %620 = vmatprep.subr.bf16.mxu0 0
    %621 = vmatpush2.bf16.xpose.msra.mxu0 0
    %622 = vmatprep.subr.bf16.mxu0 0
    %623 = vmatpush2.bf16.xpose.msra.mxu0 0
    %624 = vmatprep.subr.bf16.mxu0 0
    %625 = vmatpush2.bf16.xpose.msra.mxu0 0
    %626 = vmatprep.subr.bf16.mxu0 0
    %627 = vmatpush2.bf16.xpose.msra.mxu0 0
    %628 = vmatprep.subr.bf16.mxu0 0
    %629 = vmatpush2.bf16.xpose.msra.mxu0 0
    %630 = vmatprep.subr.bf16.mxu0 0
    %631 = vmatpush2.bf16.xpose.msra.mxu0 0
    %632 = vmatprep.subr.bf16.mxu0 0
    %633 = vmatpush2.bf16.xpose.msra.mxu0 0
    %634 = vmatprep.subr.bf16.mxu0 0
    %635 = vmatpush2.bf16.xpose.msra.mxu0 0
    %636 = vmatprep.mubr.bf16.mxu0 0
    %637 = vmatmul.mubr.bf16.gmra.mxu0 %v599
    %v638 = vpop.f32.mrf.mxu0
    %v639 = vadd.f32 %v258, %v638
    %v640 = vpop.f32.mrf.mxu0
    %v641 = vpop.f32.mrf.mxu0
    %v642 = vpop.f32.mrf.mxu0
    %643 = vdwg.mxu0
    %v652 = vlaneseq
    %v653 = vshrl.u32 %v652, 7
    %v654 = vsub.s32 0, %v653
    %v655 = vrot.slane %v249, %v654
    %v656 = vlaneseq
    %v657 = vshrl.u32 %v656, 7
    %v658 = vsub.s32 0, %v657
    %v659 = vrot.slane %v250, %v658
    %v660 = vlaneseq
    %v661 = vshrl.u32 %v660, 7
    %v662 = vsub.s32 0, %v661
    %v663 = vrot.slane %v251, %v662
    %v664 = vlaneseq
    %v665 = vshrl.u32 %v664, 7
    %v666 = vsub.s32 0, %v665
    %v667 = vrot.slane %v252, %v666
    %v668 = vlaneseq
    %v669 = vshrl.u32 %v668, 7
    %v670 = vsub.s32 0, %v669
    %v671 = vrot.slane %v253, %v670
    %v672 = vlaneseq
    %v673 = vshrl.u32 %v672, 7
    %v674 = vsub.s32 0, %v673
    %v675 = vrot.slane %v254, %v674
    %v676 = vlaneseq
    %v677 = vshrl.u32 %v676, 7
    %v678 = vsub.s32 0, %v677
    %v679 = vrot.slane %v255, %v678
    %v680 = vlaneseq
    %v681 = vshrl.u32 %v680, 7
    %v682 = vsub.s32 0, %v681
    %v683 = vrot.slane %v256, %v682
    %v692 = vadd.f32 %v303, %v655
    %v693 = vadd.f32 %v351, %v659
    %v694 = vadd.f32 %v399, %v663
    %v695 = vadd.f32 %v447, %v667
    %v696 = vadd.f32 %v495, %v671
    %v697 = vadd.f32 %v543, %v675
    %v698 = vadd.f32 %v591, %v679
    %v699 = vadd.f32 %v639, %v683
    %v700 = vsel %vm261, %v692, -inf
    %701 = vmax.xlane.f32.xlu0 %v700
    %v702 = vpop.xlane.xlu0 %701
    %v703 = vsel %vm261, %v693, -inf
    %704 = vmax.xlane.f32.xlu0 %v703
    %v705 = vpop.xlane.xlu0 %704
    %v706 = vsel %vm261, %v694, -inf
    %707 = vmax.xlane.f32.xlu0 %v706
    %v708 = vpop.xlane.xlu0 %707
    %v709 = vsel %vm261, %v695, -inf
    %710 = vmax.xlane.f32.xlu0 %v709
    %v711 = vpop.xlane.xlu0 %710
    %v712 = vsel %vm261, %v696, -inf
    %713 = vmax.xlane.f32.xlu0 %v712
    %v714 = vpop.xlane.xlu0 %713
    %v715 = vsel %vm261, %v697, -inf
    %716 = vmax.xlane.f32.xlu0 %v715
    %v717 = vpop.xlane.xlu0 %716
    %v718 = vsel %vm261, %v698, -inf
    %719 = vmax.xlane.f32.xlu0 %v718
    %v720 = vpop.xlane.xlu0 %719
    %v721 = vsel %vm261, %v699, -inf
    %722 = vmax.xlane.f32.xlu0 %v721
    %v723 = vpop.xlane.xlu0 %722
    %v724 = vsub.f32 %v692, %v702
    %v725 = vsub.f32 %v693, %v705
    %v726 = vsub.f32 %v694, %v708
    %v727 = vsub.f32 %v695, %v711
    %v728 = vsub.f32 %v696, %v714
    %v729 = vsub.f32 %v697, %v717
    %v730 = vsub.f32 %v698, %v720
    %v731 = vsub.f32 %v699, %v723
    %v732 = vmul.f32 %v724, 1.442695
    %v733 = vpow.pop %v732
    %v734 = vmul.f32 %v725, 1.442695
    %v735 = vpow.pop %v734
    %v736 = vmul.f32 %v726, 1.442695
    %v737 = vpow.pop %v736
    %v738 = vmul.f32 %v727, 1.442695
    %v739 = vpow.pop %v738
    %v740 = vmul.f32 %v728, 1.442695
    %v741 = vpow.pop %v740
    %v742 = vmul.f32 %v729, 1.442695
    %v743 = vpow.pop %v742
    %v744 = vmul.f32 %v730, 1.442695
    %v745 = vpow.pop %v744
    %v746 = vmul.f32 %v731, 1.442695
    %v747 = vpow.pop %v746
    %v748 = vsel %vm261, %v733, 0.0
    %749 = vadd.xlane.f32.xlu0 %v748
    %v750 = vpop.xlane.xlu0 %749
    %v751 = vsel %vm261, %v735, 0.0
    %752 = vadd.xlane.f32.xlu0 %v751
    %v753 = vpop.xlane.xlu0 %752
    %v754 = vsel %vm261, %v737, 0.0
    %755 = vadd.xlane.f32.xlu0 %v754
    %v756 = vpop.xlane.xlu0 %755
    %v757 = vsel %vm261, %v739, 0.0
    %758 = vadd.xlane.f32.xlu0 %v757
    %v759 = vpop.xlane.xlu0 %758
    %v760 = vsel %vm261, %v741, 0.0
    %761 = vadd.xlane.f32.xlu0 %v760
    %v762 = vpop.xlane.xlu0 %761
    %v763 = vsel %vm261, %v743, 0.0
    %764 = vadd.xlane.f32.xlu0 %v763
    %v765 = vpop.xlane.xlu0 %764
    %v766 = vsel %vm261, %v745, 0.0
    %767 = vadd.xlane.f32.xlu0 %v766
    %v768 = vpop.xlane.xlu0 %767
    %v769 = vsel %vm261, %v747, 0.0
    %770 = vadd.xlane.f32.xlu0 %v769
    %v771 = vpop.xlane.xlu0 %770
    %v772 = vrcp.pop %v750
    %v773 = vrcp.pop %v753
    %v774 = vrcp.pop %v756
    %v775 = vrcp.pop %v759
    %v776 = vrcp.pop %v762
    %v777 = vrcp.pop %v765
    %v778 = vrcp.pop %v768
    %v779 = vrcp.pop %v771
    %v780 = vmul.f32 %v733, %v772
    %v781 = vmul.f32 %v735, %v773
    %v782 = vmul.f32 %v737, %v774
    %v783 = vmul.f32 %v739, %v775
    %v784 = vmul.f32 %v741, %v776
    %v785 = vmul.f32 %v743, %v777
    %v786 = vmul.f32 %v745, %v778
    %v787 = vmul.f32 %v747, %v779
    %v788 = vpack.c.bf16 %v780, %v780
    %v789 = vpack.c.bf16 %v781, %v781
    %v790 = vpack.c.bf16 %v782, %v782
    %v791 = vpack.c.bf16 %v783, %v783
    %v792 = vpack.c.bf16 %v784, %v784
    %v793 = vpack.c.bf16 %v785, %v785
    %v794 = vpack.c.bf16 %v786, %v786
    %v795 = vpack.c.bf16 %v787, %v787
    %796 = vrot.lane.b32.xlu0 %v241, 64
    %v797 = vpop.permute.xlu0 %796
    %v799 = vsel %vm261, %v788, 0
    %vm801 = vcmask 1043456
    %v803 = vsel %vm801, %v797, 0
    %805 = vmatprep.subr.bf16.mxu0 0
    %806 = vmatpush1.bf16.msra.mxu0 0
    %807 = vmatprep.subr.bf16.mxu0 0
    %808 = vmatpush1.bf16.msra.mxu0 0
    %809 = vmatprep.subr.bf16.mxu0 0
    %810 = vmatpush1.bf16.msra.mxu0 0
    %811 = vmatprep.subr.bf16.mxu0 0
    %812 = vmatpush1.bf16.msra.mxu0 0
    %813 = vmatprep.subr.bf16.mxu0 0
    %814 = vmatpush1.bf16.msra.mxu0 0
    %815 = vmatprep.subr.bf16.mxu0 0
    %816 = vmatpush1.bf16.msra.mxu0 0
    %817 = vmatprep.subr.bf16.mxu0 0
    %818 = vmatpush1.bf16.msra.mxu0 0
    %819 = vmatprep.subr.bf16.mxu0 0
    %820 = vmatpush1.bf16.msra.mxu0 %v803
    %821 = vmatprep.subr.bf16.mxu0 0
    %822 = vmatpush2.bf16.msra.mxu0 0
    %823 = vmatprep.subr.bf16.mxu0 0
    %824 = vmatpush2.bf16.msra.mxu0 0
    %825 = vmatprep.subr.bf16.mxu0 0
    %826 = vmatpush2.bf16.msra.mxu0 0
    %827 = vmatprep.subr.bf16.mxu0 0
    %828 = vmatpush2.bf16.msra.mxu0 0
    %829 = vmatprep.subr.bf16.mxu0 0
    %830 = vmatpush2.bf16.msra.mxu0 0
    %831 = vmatprep.subr.bf16.mxu0 0
    %832 = vmatpush2.bf16.msra.mxu0 0
    %833 = vmatprep.subr.bf16.mxu0 0
    %834 = vmatpush2.bf16.msra.mxu0 0
    %835 = vmatprep.subr.bf16.mxu0 0
    %836 = vmatpush2.bf16.msra.mxu0 0
    %837 = vmatprep.mubr.bf16.mxu0 0
    %838 = vmatmul.mubr.bf16.gmra.mxu0 %v799
    %v839 = vpop.f32.mrf.mxu0
    %v840 = vadd.f32 0.0, %v839
    %v841 = vpop.f32.mrf.mxu0
    %v842 = vpop.f32.mrf.mxu0
    %v843 = vpop.f32.mrf.mxu0
    %844 = vdwg.mxu0
    %845 = vrot.lane.b32.xlu0 %v242, 64
    %v846 = vpop.permute.xlu0 %845
    %v848 = vsel %vm261, %v789, 0
    %v851 = vsel %vm801, %v846, 0
    %853 = vmatprep.subr.bf16.mxu0 0
    %854 = vmatpush1.bf16.msra.mxu0 0
    %855 = vmatprep.subr.bf16.mxu0 0
    %856 = vmatpush1.bf16.msra.mxu0 0
    %857 = vmatprep.subr.bf16.mxu0 0
    %858 = vmatpush1.bf16.msra.mxu0 0
    %859 = vmatprep.subr.bf16.mxu0 0
    %860 = vmatpush1.bf16.msra.mxu0 0
    %861 = vmatprep.subr.bf16.mxu0 0
    %862 = vmatpush1.bf16.msra.mxu0 0
    %863 = vmatprep.subr.bf16.mxu0 0
    %864 = vmatpush1.bf16.msra.mxu0 0
    %865 = vmatprep.subr.bf16.mxu0 0
    %866 = vmatpush1.bf16.msra.mxu0 0
    %867 = vmatprep.subr.bf16.mxu0 0
    %868 = vmatpush1.bf16.msra.mxu0 %v851
    %869 = vmatprep.subr.bf16.mxu0 0
    %870 = vmatpush2.bf16.msra.mxu0 0
    %871 = vmatprep.subr.bf16.mxu0 0
    %872 = vmatpush2.bf16.msra.mxu0 0
    %873 = vmatprep.subr.bf16.mxu0 0
    %874 = vmatpush2.bf16.msra.mxu0 0
    %875 = vmatprep.subr.bf16.mxu0 0
    %876 = vmatpush2.bf16.msra.mxu0 0
    %877 = vmatprep.subr.bf16.mxu0 0
    %878 = vmatpush2.bf16.msra.mxu0 0
    %879 = vmatprep.subr.bf16.mxu0 0
    %880 = vmatpush2.bf16.msra.mxu0 0
    %881 = vmatprep.subr.bf16.mxu0 0
    %882 = vmatpush2.bf16.msra.mxu0 0
    %883 = vmatprep.subr.bf16.mxu0 0
    %884 = vmatpush2.bf16.msra.mxu0 0
    %885 = vmatprep.mubr.bf16.mxu0 0
    %886 = vmatmul.mubr.bf16.gmra.mxu0 %v848
    %v887 = vpop.f32.mrf.mxu0
    %v888 = vadd.f32 0.0, %v887
    %v889 = vpop.f32.mrf.mxu0
    %v890 = vpop.f32.mrf.mxu0
    %v891 = vpop.f32.mrf.mxu0
    %892 = vdwg.mxu0
    %893 = vrot.lane.b32.xlu0 %v243, 64
    %v894 = vpop.permute.xlu0 %893
    %v896 = vsel %vm261, %v790, 0
    %v899 = vsel %vm801, %v894, 0
    %901 = vmatprep.subr.bf16.mxu0 0
    %902 = vmatpush1.bf16.msra.mxu0 0
    %903 = vmatprep.subr.bf16.mxu0 0
    %904 = vmatpush1.bf16.msra.mxu0 0
    %905 = vmatprep.subr.bf16.mxu0 0
    %906 = vmatpush1.bf16.msra.mxu0 0
    %907 = vmatprep.subr.bf16.mxu0 0
    %908 = vmatpush1.bf16.msra.mxu0 0
    %909 = vmatprep.subr.bf16.mxu0 0
    %910 = vmatpush1.bf16.msra.mxu0 0
    %911 = vmatprep.subr.bf16.mxu0 0
    %912 = vmatpush1.bf16.msra.mxu0 0
    %913 = vmatprep.subr.bf16.mxu0 0
    %914 = vmatpush1.bf16.msra.mxu0 0
    %915 = vmatprep.subr.bf16.mxu0 0
    %916 = vmatpush1.bf16.msra.mxu0 %v899
    %917 = vmatprep.subr.bf16.mxu0 0
    %918 = vmatpush2.bf16.msra.mxu0 0
    %919 = vmatprep.subr.bf16.mxu0 0
    %920 = vmatpush2.bf16.msra.mxu0 0
    %921 = vmatprep.subr.bf16.mxu0 0
    %922 = vmatpush2.bf16.msra.mxu0 0
    %923 = vmatprep.subr.bf16.mxu0 0
    %924 = vmatpush2.bf16.msra.mxu0 0
    %925 = vmatprep.subr.bf16.mxu0 0
    %926 = vmatpush2.bf16.msra.mxu0 0
    %927 = vmatprep.subr.bf16.mxu0 0
    %928 = vmatpush2.bf16.msra.mxu0 0
    %929 = vmatprep.subr.bf16.mxu0 0
    %930 = vmatpush2.bf16.msra.mxu0 0
    %931 = vmatprep.subr.bf16.mxu0 0
    %932 = vmatpush2.bf16.msra.mxu0 0
    %933 = vmatprep.mubr.bf16.mxu0 0
    %934 = vmatmul.mubr.bf16.gmra.mxu0 %v896
    %v935 = vpop.f32.mrf.mxu0
    %v936 = vadd.f32 0.0, %v935
    %v937 = vpop.f32.mrf.mxu0
    %v938 = vpop.f32.mrf.mxu0
    %v939 = vpop.f32.mrf.mxu0
    %940 = vdwg.mxu0
    %941 = vrot.lane.b32.xlu0 %v244, 64
    %v942 = vpop.permute.xlu0 %941
    %v944 = vsel %vm261, %v791, 0
    %v947 = vsel %vm801, %v942, 0
    %949 = vmatprep.subr.bf16.mxu0 0
    %950 = vmatpush1.bf16.msra.mxu0 0
    %951 = vmatprep.subr.bf16.mxu0 0
    %952 = vmatpush1.bf16.msra.mxu0 0
    %953 = vmatprep.subr.bf16.mxu0 0
    %954 = vmatpush1.bf16.msra.mxu0 0
    %955 = vmatprep.subr.bf16.mxu0 0
    %956 = vmatpush1.bf16.msra.mxu0 0
    %957 = vmatprep.subr.bf16.mxu0 0
    %958 = vmatpush1.bf16.msra.mxu0 0
    %959 = vmatprep.subr.bf16.mxu0 0
    %960 = vmatpush1.bf16.msra.mxu0 0
    %961 = vmatprep.subr.bf16.mxu0 0
    %962 = vmatpush1.bf16.msra.mxu0 0
    %963 = vmatprep.subr.bf16.mxu0 0
    %964 = vmatpush1.bf16.msra.mxu0 %v947
    %965 = vmatprep.subr.bf16.mxu0 0
    %966 = vmatpush2.bf16.msra.mxu0 0
    %967 = vmatprep.subr.bf16.mxu0 0
    %968 = vmatpush2.bf16.msra.mxu0 0
    %969 = vmatprep.subr.bf16.mxu0 0
    %970 = vmatpush2.bf16.msra.mxu0 0
    %971 = vmatprep.subr.bf16.mxu0 0
    %972 = vmatpush2.bf16.msra.mxu0 0
    %973 = vmatprep.subr.bf16.mxu0 0
    %974 = vmatpush2.bf16.msra.mxu0 0
    %975 = vmatprep.subr.bf16.mxu0 0
    %976 = vmatpush2.bf16.msra.mxu0 0
    %977 = vmatprep.subr.bf16.mxu0 0
    %978 = vmatpush2.bf16.msra.mxu0 0
    %979 = vmatprep.subr.bf16.mxu0 0
    %980 = vmatpush2.bf16.msra.mxu0 0
    %981 = vmatprep.mubr.bf16.mxu0 0
    %982 = vmatmul.mubr.bf16.gmra.mxu0 %v944
    %v983 = vpop.f32.mrf.mxu0
    %v984 = vadd.f32 0.0, %v983
    %v985 = vpop.f32.mrf.mxu0
    %v986 = vpop.f32.mrf.mxu0
    %v987 = vpop.f32.mrf.mxu0
    %988 = vdwg.mxu0
    %989 = vrot.lane.b32.xlu0 %v245, 64
    %v990 = vpop.permute.xlu0 %989
    %v992 = vsel %vm261, %v792, 0
    %v995 = vsel %vm801, %v990, 0
    %997 = vmatprep.subr.bf16.mxu0 0
    %998 = vmatpush1.bf16.msra.mxu0 0
    %999 = vmatprep.subr.bf16.mxu0 0
    %1000 = vmatpush1.bf16.msra.mxu0 0
    %1001 = vmatprep.subr.bf16.mxu0 0
    %1002 = vmatpush1.bf16.msra.mxu0 0
    %1003 = vmatprep.subr.bf16.mxu0 0
    %1004 = vmatpush1.bf16.msra.mxu0 0
    %1005 = vmatprep.subr.bf16.mxu0 0
    %1006 = vmatpush1.bf16.msra.mxu0 0
    %1007 = vmatprep.subr.bf16.mxu0 0
    %1008 = vmatpush1.bf16.msra.mxu0 0
    %1009 = vmatprep.subr.bf16.mxu0 0
    %1010 = vmatpush1.bf16.msra.mxu0 0
    %1011 = vmatprep.subr.bf16.mxu0 0
    %1012 = vmatpush1.bf16.msra.mxu0 %v995
    %1013 = vmatprep.subr.bf16.mxu0 0
    %1014 = vmatpush2.bf16.msra.mxu0 0
    %1015 = vmatprep.subr.bf16.mxu0 0
    %1016 = vmatpush2.bf16.msra.mxu0 0
    %1017 = vmatprep.subr.bf16.mxu0 0
    %1018 = vmatpush2.bf16.msra.mxu0 0
    %1019 = vmatprep.subr.bf16.mxu0 0
    %1020 = vmatpush2.bf16.msra.mxu0 0
    %1021 = vmatprep.subr.bf16.mxu0 0
    %1022 = vmatpush2.bf16.msra.mxu0 0
    %1023 = vmatprep.subr.bf16.mxu0 0
    %1024 = vmatpush2.bf16.msra.mxu0 0
    %1025 = vmatprep.subr.bf16.mxu0 0
    %1026 = vmatpush2.bf16.msra.mxu0 0
    %1027 = vmatprep.subr.bf16.mxu0 0
    %1028 = vmatpush2.bf16.msra.mxu0 0
    %1029 = vmatprep.mubr.bf16.mxu0 0
    %1030 = vmatmul.mubr.bf16.gmra.mxu0 %v992
    %v1031 = vpop.f32.mrf.mxu0
    %v1032 = vadd.f32 0.0, %v1031
    %v1033 = vpop.f32.mrf.mxu0
    %v1034 = vpop.f32.mrf.mxu0
    %v1035 = vpop.f32.mrf.mxu0
    %1036 = vdwg.mxu0
    %1037 = vrot.lane.b32.xlu0 %v246, 64
    %v1038 = vpop.permute.xlu0 %1037
    %v1040 = vsel %vm261, %v793, 0
    %v1043 = vsel %vm801, %v1038, 0
    %1045 = vmatprep.subr.bf16.mxu0 0
    %1046 = vmatpush1.bf16.msra.mxu0 0
    %1047 = vmatprep.subr.bf16.mxu0 0
    %1048 = vmatpush1.bf16.msra.mxu0 0
    %1049 = vmatprep.subr.bf16.mxu0 0
    %1050 = vmatpush1.bf16.msra.mxu0 0
    %1051 = vmatprep.subr.bf16.mxu0 0
    %1052 = vmatpush1.bf16.msra.mxu0 0
    %1053 = vmatprep.subr.bf16.mxu0 0
    %1054 = vmatpush1.bf16.msra.mxu0 0
    %1055 = vmatprep.subr.bf16.mxu0 0
    %1056 = vmatpush1.bf16.msra.mxu0 0
    %1057 = vmatprep.subr.bf16.mxu0 0
    %1058 = vmatpush1.bf16.msra.mxu0 0
    %1059 = vmatprep.subr.bf16.mxu0 0
    %1060 = vmatpush1.bf16.msra.mxu0 %v1043
    %1061 = vmatprep.subr.bf16.mxu0 0
    %1062 = vmatpush2.bf16.msra.mxu0 0
    %1063 = vmatprep.subr.bf16.mxu0 0
    %1064 = vmatpush2.bf16.msra.mxu0 0
    %1065 = vmatprep.subr.bf16.mxu0 0
    %1066 = vmatpush2.bf16.msra.mxu0 0
    %1067 = vmatprep.subr.bf16.mxu0 0
    %1068 = vmatpush2.bf16.msra.mxu0 0
    %1069 = vmatprep.subr.bf16.mxu0 0
    %1070 = vmatpush2.bf16.msra.mxu0 0
    %1071 = vmatprep.subr.bf16.mxu0 0
    %1072 = vmatpush2.bf16.msra.mxu0 0
    %1073 = vmatprep.subr.bf16.mxu0 0
    %1074 = vmatpush2.bf16.msra.mxu0 0
    %1075 = vmatprep.subr.bf16.mxu0 0
    %1076 = vmatpush2.bf16.msra.mxu0 0
    %1077 = vmatprep.mubr.bf16.mxu0 0
    %1078 = vmatmul.mubr.bf16.gmra.mxu0 %v1040
    %v1079 = vpop.f32.mrf.mxu0
    %v1080 = vadd.f32 0.0, %v1079
    %v1081 = vpop.f32.mrf.mxu0
    %v1082 = vpop.f32.mrf.mxu0
    %v1083 = vpop.f32.mrf.mxu0
    %1084 = vdwg.mxu0
    %1085 = vrot.lane.b32.xlu0 %v247, 64
    %v1086 = vpop.permute.xlu0 %1085
    %v1088 = vsel %vm261, %v794, 0
    %v1091 = vsel %vm801, %v1086, 0
    %1093 = vmatprep.subr.bf16.mxu0 0
    %1094 = vmatpush1.bf16.msra.mxu0 0
    %1095 = vmatprep.subr.bf16.mxu0 0
    %1096 = vmatpush1.bf16.msra.mxu0 0
    %1097 = vmatprep.subr.bf16.mxu0 0
    %1098 = vmatpush1.bf16.msra.mxu0 0
    %1099 = vmatprep.subr.bf16.mxu0 0
    %1100 = vmatpush1.bf16.msra.mxu0 0
    %1101 = vmatprep.subr.bf16.mxu0 0
    %1102 = vmatpush1.bf16.msra.mxu0 0
    %1103 = vmatprep.subr.bf16.mxu0 0
    %1104 = vmatpush1.bf16.msra.mxu0 0
    %1105 = vmatprep.subr.bf16.mxu0 0
    %1106 = vmatpush1.bf16.msra.mxu0 0
    %1107 = vmatprep.subr.bf16.mxu0 0
    %1108 = vmatpush1.bf16.msra.mxu0 %v1091
    %1109 = vmatprep.subr.bf16.mxu0 0
    %1110 = vmatpush2.bf16.msra.mxu0 0
    %1111 = vmatprep.subr.bf16.mxu0 0
    %1112 = vmatpush2.bf16.msra.mxu0 0
    %1113 = vmatprep.subr.bf16.mxu0 0
    %1114 = vmatpush2.bf16.msra.mxu0 0
    %1115 = vmatprep.subr.bf16.mxu0 0
    %1116 = vmatpush2.bf16.msra.mxu0 0
    %1117 = vmatprep.subr.bf16.mxu0 0
    %1118 = vmatpush2.bf16.msra.mxu0 0
    %1119 = vmatprep.subr.bf16.mxu0 0
    %1120 = vmatpush2.bf16.msra.mxu0 0
    %1121 = vmatprep.subr.bf16.mxu0 0
    %1122 = vmatpush2.bf16.msra.mxu0 0
    %1123 = vmatprep.subr.bf16.mxu0 0
    %1124 = vmatpush2.bf16.msra.mxu0 0
    %1125 = vmatprep.mubr.bf16.mxu0 0
    %1126 = vmatmul.mubr.bf16.gmra.mxu0 %v1088
    %v1127 = vpop.f32.mrf.mxu0
    %v1128 = vadd.f32 0.0, %v1127
    %v1129 = vpop.f32.mrf.mxu0
    %v1130 = vpop.f32.mrf.mxu0
    %v1131 = vpop.f32.mrf.mxu0
    %1132 = vdwg.mxu0
    %1133 = vrot.lane.b32.xlu0 %v248, 64
    %v1134 = vpop.permute.xlu0 %1133
    %v1136 = vsel %vm261, %v795, 0
    %v1139 = vsel %vm801, %v1134, 0
    %1141 = vmatprep.subr.bf16.mxu0 0
    %1142 = vmatpush1.bf16.msra.mxu0 0
    %1143 = vmatprep.subr.bf16.mxu0 0
    %1144 = vmatpush1.bf16.msra.mxu0 0
    %1145 = vmatprep.subr.bf16.mxu0 0
    %1146 = vmatpush1.bf16.msra.mxu0 0
    %1147 = vmatprep.subr.bf16.mxu0 0
    %1148 = vmatpush1.bf16.msra.mxu0 0
    %1149 = vmatprep.subr.bf16.mxu0 0
    %1150 = vmatpush1.bf16.msra.mxu0 0
    %1151 = vmatprep.subr.bf16.mxu0 0
    %1152 = vmatpush1.bf16.msra.mxu0 0
    %1153 = vmatprep.subr.bf16.mxu0 0
    %1154 = vmatpush1.bf16.msra.mxu0 0
    %1155 = vmatprep.subr.bf16.mxu0 0
    %1156 = vmatpush1.bf16.msra.mxu0 %v1139
    %1157 = vmatprep.subr.bf16.mxu0 0
    %1158 = vmatpush2.bf16.msra.mxu0 0
    %1159 = vmatprep.subr.bf16.mxu0 0
    %1160 = vmatpush2.bf16.msra.mxu0 0
    %1161 = vmatprep.subr.bf16.mxu0 0
    %1162 = vmatpush2.bf16.msra.mxu0 0
    %1163 = vmatprep.subr.bf16.mxu0 0
    %1164 = vmatpush2.bf16.msra.mxu0 0
    %1165 = vmatprep.subr.bf16.mxu0 0
    %1166 = vmatpush2.bf16.msra.mxu0 0
    %1167 = vmatprep.subr.bf16.mxu0 0
    %1168 = vmatpush2.bf16.msra.mxu0 0
    %1169 = vmatprep.subr.bf16.mxu0 0
    %1170 = vmatpush2.bf16.msra.mxu0 0
    %1171 = vmatprep.subr.bf16.mxu0 0
    %1172 = vmatpush2.bf16.msra.mxu0 0
    %1173 = vmatprep.mubr.bf16.mxu0 0
    %1174 = vmatmul.mubr.bf16.gmra.mxu0 %v1136
    %v1175 = vpop.f32.mrf.mxu0
    %v1176 = vadd.f32 0.0, %v1175
    %v1177 = vpop.f32.mrf.mxu0
    %v1178 = vpop.f32.mrf.mxu0
    %v1179 = vpop.f32.mrf.mxu0
    %1180 = vdwg.mxu0
    %v1181 = vpack.c.bf16 %v888, %v840
    %v1182 = vpack.c.bf16 %v984, %v936
    %v1183 = vpack.c.bf16 %v1080, %v1032
    %v1184 = vpack.c.bf16 %v1176, %v1128
    %v1189 = vunpack.c.l.b16 %v1181
    %v1190 = vunpack.c.h.b16 %v1181
    %v1191 = vunpack.c.l.b16 %v1182
    %v1192 = vunpack.c.h.b16 %v1182
    %v1193 = vunpack.c.l.b16 %v1183
    %v1194 = vunpack.c.h.b16 %v1183
    %v1195 = vunpack.c.l.b16 %v1184
    %v1196 = vunpack.c.h.b16 %v1184
    %v1197 = vpack.c.b16 %v1189, %v1189
    %v1198 = vpack.c.b16 %v1190, %v1190
    %v1199 = vpack.c.b16 %v1191, %v1191
    %v1200 = vpack.c.b16 %v1192, %v1192
    %v1201 = vpack.c.b16 %v1193, %v1193
    %v1202 = vpack.c.b16 %v1194, %v1194
    %v1203 = vpack.c.b16 %v1195, %v1195
    %v1204 = vpack.c.b16 %v1196, %v1196
    %vm1213 = vcmask 60416
    %1214 = vst.msk [vmem:[#allocation2] sm:$0xf] %vm1213, %v1197
    %1215 = vst.msk [vmem:[#allocation2 + $0x4] sm:$0xf] %vm1213, %v1198
    %1216 = vst.msk [vmem:[#allocation2 + $0x8] sm:$0xf] %vm1213, %v1199
    %1217 = vst.msk [vmem:[#allocation2 + $0xc] sm:$0xf] %vm1213, %v1200
    %1218 = vst.msk [vmem:[#allocation2 + $0x10] sm:$0xf] %vm1213, %v1201
    %1219 = vst.msk [vmem:[#allocation2 + $0x14] sm:$0xf] %vm1213, %v1202
    %1220 = vst.msk [vmem:[#allocation2 + $0x18] sm:$0xf] %vm1213, %v1203
    %1221 = vst.msk [vmem:[#allocation2 + $0x1c] sm:$0xf] %vm1213, %v1204
    %s1222 = scalar_lea.vmem [#allocation8], 4
    %v1223 = vld [vmem:[%s1222] sm:$0xf]
    %v1224 = vunpack.c.l.bf16 %v1223
    %1225 = vrot.lane.b32.xlu0 %v241, 120
    %v1226 = vpop.permute.xlu0 %1225
    %1227 = vrot.lane.b32.xlu0 %v241, 88
    %v1228 = vpop.permute.xlu0 %1227
    %v1230 = vsel %vm261, %v1226, 0
    %v1233 = vsel %vm261, %v1228, 0
    %1235 = vmatprep.subr.bf16.mxu0 0
    %1236 = vmatpush1.bf16.xpose.msra.mxu0 0
    %1237 = vmatprep.subr.bf16.mxu0 0
    %1238 = vmatpush1.bf16.xpose.msra.mxu0 0
    %1239 = vmatprep.subr.bf16.mxu0 0
    %1240 = vmatpush1.bf16.xpose.msra.mxu0 0
    %1241 = vmatprep.subr.bf16.mxu0 0
    %1242 = vmatpush1.bf16.xpose.msra.mxu0 0
    %1243 = vmatprep.subr.bf16.mxu0 0
    %1244 = vmatpush1.bf16.xpose.msra.mxu0 0
    %1245 = vmatprep.subr.bf16.mxu0 0
    %1246 = vmatpush1.bf16.xpose.msra.mxu0 0
    %1247 = vmatprep.subr.bf16.mxu0 0
    %1248 = vmatpush1.bf16.xpose.msra.mxu0 0
    %1249 = vmatprep.subr.bf16.mxu0 0
    %1250 = vmatpush1.bf16.xpose.msra.mxu0 %v1233
    %1251 = vmatprep.subr.bf16.mxu0 0
    %1252 = vmatpush2.bf16.xpose.msra.mxu0 0
    %1253 = vmatprep.subr.bf16.mxu0 0
    %1254 = vmatpush2.bf16.xpose.msra.mxu0 0
    %1255 = vmatprep.subr.bf16.mxu0 0
    %1256 = vmatpush2.bf16.xpose.msra.mxu0 0
    %1257 = vmatprep.subr.bf16.mxu0 0
    %1258 = vmatpush2.bf16.xpose.msra.mxu0 0
    %1259 = vmatprep.subr.bf16.mxu0 0
    %1260 = vmatpush2.bf16.xpose.msra.mxu0 0
    %1261 = vmatprep.subr.bf16.mxu0 0
    %1262 = vmatpush2.bf16.xpose.msra.mxu0 0
    %1263 = vmatprep.subr.bf16.mxu0 0
    %1264 = vmatpush2.bf16.xpose.msra.mxu0 0
    %1265 = vmatprep.subr.bf16.mxu0 0
    %1266 = vmatpush2.bf16.xpose.msra.mxu0 0
    %1267 = vmatprep.mubr.bf16.mxu0 0
    %1268 = vmatmul.mubr.bf16.gmra.mxu0 %v1230
    %v1269 = vpop.f32.mrf.mxu0
    %v1270 = vadd.f32 %v1224, %v1269
    %v1271 = vpop.f32.mrf.mxu0
    %v1272 = vpop.f32.mrf.mxu0
    %v1273 = vpop.f32.mrf.mxu0
    %1274 = vdwg.mxu0
    %1275 = vrot.lane.b32.xlu0 %v242, 120
    %v1276 = vpop.permute.xlu0 %1275
    %1277 = vrot.lane.b32.xlu0 %v242, 88
    %v1278 = vpop.permute.xlu0 %1277
    %v1280 = vsel %vm261, %v1276, 0
    %v1283 = vsel %vm261, %v1278, 0
    %1285 = vmatprep.subr.bf16.mxu0 0
    %1286 = vmatpush1.bf16.xpose.msra.mxu0 0
    %1287 = vmatprep.subr.bf16.mxu0 0
    %1288 = vmatpush1.bf16.xpose.msra.mxu0 0
    %1289 = vmatprep.subr.bf16.mxu0 0
    %1290 = vmatpush1.bf16.xpose.msra.mxu0 0
    %1291 = vmatprep.subr.bf16.mxu0 0
    %1292 = vmatpush1.bf16.xpose.msra.mxu0 0
    %1293 = vmatprep.subr.bf16.mxu0 0
    %1294 = vmatpush1.bf16.xpose.msra.mxu0 0
    %1295 = vmatprep.subr.bf16.mxu0 0
    %1296 = vmatpush1.bf16.xpose.msra.mxu0 0
    %1297 = vmatprep.subr.bf16.mxu0 0
    %1298 = vmatpush1.bf16.xpose.msra.mxu0 0
    %1299 = vmatprep.subr.bf16.mxu0 0
    %1300 = vmatpush1.bf16.xpose.msra.mxu0 %v1283
    %1301 = vmatprep.subr.bf16.mxu0 0
    %1302 = vmatpush2.bf16.xpose.msra.mxu0 0
    %1303 = vmatprep.subr.bf16.mxu0 0
    %1304 = vmatpush2.bf16.xpose.msra.mxu0 0
    %1305 = vmatprep.subr.bf16.mxu0 0
    %1306 = vmatpush2.bf16.xpose.msra.mxu0 0
    %1307 = vmatprep.subr.bf16.mxu0 0
    %1308 = vmatpush2.bf16.xpose.msra.mxu0 0
    %1309 = vmatprep.subr.bf16.mxu0 0
    %1310 = vmatpush2.bf16.xpose.msra.mxu0 0
    %1311 = vmatprep.subr.bf16.mxu0 0
    %1312 = vmatpush2.bf16.xpose.msra.mxu0 0
    %1313 = vmatprep.subr.bf16.mxu0 0
    %1314 = vmatpush2.bf16.xpose.msra.mxu0 0
    %1315 = vmatprep.subr.bf16.mxu0 0
    %1316 = vmatpush2.bf16.xpose.msra.mxu0 0
    %1317 = vmatprep.mubr.bf16.mxu0 0
    %1318 = vmatmul.mubr.bf16.gmra.mxu0 %v1280
    %v1319 = vpop.f32.mrf.mxu0
    %v1320 = vadd.f32 %v1224, %v1319
    %v1321 = vpop.f32.mrf.mxu0
    %v1322 = vpop.f32.mrf.mxu0
    %v1323 = vpop.f32.mrf.mxu0
    %1324 = vdwg.mxu0
    %1325 = vrot.lane.b32.xlu0 %v243, 120
    %v1326 = vpop.permute.xlu0 %1325
    %1327 = vrot.lane.b32.xlu0 %v243, 88
    %v1328 = vpop.permute.xlu0 %1327
    %v1330 = vsel %vm261, %v1326, 0
    %v1333 = vsel %vm261, %v1328, 0
    %1335 = vmatprep.subr.bf16.mxu0 0
    %1336 = vmatpush1.bf16.xpose.msra.mxu0 0
    %1337 = vmatprep.subr.bf16.mxu0 0
    %1338 = vmatpush1.bf16.xpose.msra.mxu0 0
    %1339 = vmatprep.subr.bf16.mxu0 0
    %1340 = vmatpush1.bf16.xpose.msra.mxu0 0
    %1341 = vmatprep.subr.bf16.mxu0 0
    %1342 = vmatpush1.bf16.xpose.msra.mxu0 0
    %1343 = vmatprep.subr.bf16.mxu0 0
    %1344 = vmatpush1.bf16.xpose.msra.mxu0 0
    %1345 = vmatprep.subr.bf16.mxu0 0
    %1346 = vmatpush1.bf16.xpose.msra.mxu0 0
    %1347 = vmatprep.subr.bf16.mxu0 0
    %1348 = vmatpush1.bf16.xpose.msra.mxu0 0
    %1349 = vmatprep.subr.bf16.mxu0 0
    %1350 = vmatpush1.bf16.xpose.msra.mxu0 %v1333
    %1351 = vmatprep.subr.bf16.mxu0 0
    %1352 = vmatpush2.bf16.xpose.msra.mxu0 0
    %1353 = vmatprep.subr.bf16.mxu0 0
    %1354 = vmatpush2.bf16.xpose.msra.mxu0 0
    %1355 = vmatprep.subr.bf16.mxu0 0
    %1356 = vmatpush2.bf16.xpose.msra.mxu0 0
    %1357 = vmatprep.subr.bf16.mxu0 0
    %1358 = vmatpush2.bf16.xpose.msra.mxu0 0
    %1359 = vmatprep.subr.bf16.mxu0 0
    %1360 = vmatpush2.bf16.xpose.msra.mxu0 0
    %1361 = vmatprep.subr.bf16.mxu0 0
    %1362 = vmatpush2.bf16.xpose.msra.mxu0 0
    %1363 = vmatprep.subr.bf16.mxu0 0
    %1364 = vmatpush2.bf16.xpose.msra.mxu0 0
    %1365 = vmatprep.subr.bf16.mxu0 0
    %1366 = vmatpush2.bf16.xpose.msra.mxu0 0
    %1367 = vmatprep.mubr.bf16.mxu0 0
    %1368 = vmatmul.mubr.bf16.gmra.mxu0 %v1330
    %v1369 = vpop.f32.mrf.mxu0
    %v1370 = vadd.f32 %v1224, %v1369
    %v1371 = vpop.f32.mrf.mxu0
    %v1372 = vpop.f32.mrf.mxu0
    %v1373 = vpop.f32.mrf.mxu0
    %1374 = vdwg.mxu0
    %1375 = vrot.lane.b32.xlu0 %v244, 120
    %v1376 = vpop.permute.xlu0 %1375
    %1377 = vrot.lane.b32.xlu0 %v244, 88
    %v1378 = vpop.permute.xlu0 %1377
    %v1380 = vsel %vm261, %v1376, 0
    %v1383 = vsel %vm261, %v1378, 0
    %1385 = vmatprep.subr.bf16.mxu0 0
    %1386 = vmatpush1.bf16.xpose.msra.mxu0 0
    %1387 = vmatprep.subr.bf16.mxu0 0
    %1388 = vmatpush1.bf16.xpose.msra.mxu0 0
    %1389 = vmatprep.subr.bf16.mxu0 0
    %1390 = vmatpush1.bf16.xpose.msra.mxu0 0
    %1391 = vmatprep.subr.bf16.mxu0 0
    %1392 = vmatpush1.bf16.xpose.msra.mxu0 0
    %1393 = vmatprep.subr.bf16.mxu0 0
    %1394 = vmatpush1.bf16.xpose.msra.mxu0 0
    %1395 = vmatprep.subr.bf16.mxu0 0
    %1396 = vmatpush1.bf16.xpose.msra.mxu0 0
    %1397 = vmatprep.subr.bf16.mxu0 0
    %1398 = vmatpush1.bf16.xpose.msra.mxu0 0
    %1399 = vmatprep.subr.bf16.mxu0 0
    %1400 = vmatpush1.bf16.xpose.msra.mxu0 %v1383
    %1401 = vmatprep.subr.bf16.mxu0 0
    %1402 = vmatpush2.bf16.xpose.msra.mxu0 0
    %1403 = vmatprep.subr.bf16.mxu0 0
    %1404 = vmatpush2.bf16.xpose.msra.mxu0 0
    %1405 = vmatprep.subr.bf16.mxu0 0
    %1406 = vmatpush2.bf16.xpose.msra.mxu0 0
    %1407 = vmatprep.subr.bf16.mxu0 0
    %1408 = vmatpush2.bf16.xpose.msra.mxu0 0
    %1409 = vmatprep.subr.bf16.mxu0 0
    %1410 = vmatpush2.bf16.xpose.msra.mxu0 0
    %1411 = vmatprep.subr.bf16.mxu0 0
    %1412 = vmatpush2.bf16.xpose.msra.mxu0 0
    %1413 = vmatprep.subr.bf16.mxu0 0
    %1414 = vmatpush2.bf16.xpose.msra.mxu0 0
    %1415 = vmatprep.subr.bf16.mxu0 0
    %1416 = vmatpush2.bf16.xpose.msra.mxu0 0
    %1417 = vmatprep.mubr.bf16.mxu0 0
    %1418 = vmatmul.mubr.bf16.gmra.mxu0 %v1380
    %v1419 = vpop.f32.mrf.mxu0
    %v1420 = vadd.f32 %v1224, %v1419
    %v1421 = vpop.f32.mrf.mxu0
    %v1422 = vpop.f32.mrf.mxu0
    %v1423 = vpop.f32.mrf.mxu0
    %1424 = vdwg.mxu0
    %1425 = vrot.lane.b32.xlu0 %v245, 120
    %v1426 = vpop.permute.xlu0 %1425
    %1427 = vrot.lane.b32.xlu0 %v245, 88
    %v1428 = vpop.permute.xlu0 %1427
    %v1430 = vsel %vm261, %v1426, 0
    %v1433 = vsel %vm261, %v1428, 0
    %1435 = vmatprep.subr.bf16.mxu0 0
    %1436 = vmatpush1.bf16.xpose.msra.mxu0 0
    %1437 = vmatprep.subr.bf16.mxu0 0
    %1438 = vmatpush1.bf16.xpose.msra.mxu0 0
    %1439 = vmatprep.subr.bf16.mxu0 0
    %1440 = vmatpush1.bf16.xpose.msra.mxu0 0
    %1441 = vmatprep.subr.bf16.mxu0 0
    %1442 = vmatpush1.bf16.xpose.msra.mxu0 0
    %1443 = vmatprep.subr.bf16.mxu0 0
    %1444 = vmatpush1.bf16.xpose.msra.mxu0 0
    %1445 = vmatprep.subr.bf16.mxu0 0
    %1446 = vmatpush1.bf16.xpose.msra.mxu0 0
    %1447 = vmatprep.subr.bf16.mxu0 0
    %1448 = vmatpush1.bf16.xpose.msra.mxu0 0
    %1449 = vmatprep.subr.bf16.mxu0 0
    %1450 = vmatpush1.bf16.xpose.msra.mxu0 %v1433
    %1451 = vmatprep.subr.bf16.mxu0 0
    %1452 = vmatpush2.bf16.xpose.msra.mxu0 0
    %1453 = vmatprep.subr.bf16.mxu0 0
    %1454 = vmatpush2.bf16.xpose.msra.mxu0 0
    %1455 = vmatprep.subr.bf16.mxu0 0
    %1456 = vmatpush2.bf16.xpose.msra.mxu0 0
    %1457 = vmatprep.subr.bf16.mxu0 0
    %1458 = vmatpush2.bf16.xpose.msra.mxu0 0
    %1459 = vmatprep.subr.bf16.mxu0 0
    %1460 = vmatpush2.bf16.xpose.msra.mxu0 0
    %1461 = vmatprep.subr.bf16.mxu0 0
    %1462 = vmatpush2.bf16.xpose.msra.mxu0 0
    %1463 = vmatprep.subr.bf16.mxu0 0
    %1464 = vmatpush2.bf16.xpose.msra.mxu0 0
    %1465 = vmatprep.subr.bf16.mxu0 0
    %1466 = vmatpush2.bf16.xpose.msra.mxu0 0
    %1467 = vmatprep.mubr.bf16.mxu0 0
    %1468 = vmatmul.mubr.bf16.gmra.mxu0 %v1430
    %v1469 = vpop.f32.mrf.mxu0
    %v1470 = vadd.f32 %v1224, %v1469
    %v1471 = vpop.f32.mrf.mxu0
    %v1472 = vpop.f32.mrf.mxu0
    %v1473 = vpop.f32.mrf.mxu0
    %1474 = vdwg.mxu0
    %1475 = vrot.lane.b32.xlu0 %v246, 120
    %v1476 = vpop.permute.xlu0 %1475
    %1477 = vrot.lane.b32.xlu0 %v246, 88
    %v1478 = vpop.permute.xlu0 %1477
    %v1480 = vsel %vm261, %v1476, 0
    %v1483 = vsel %vm261, %v1478, 0
    %1485 = vmatprep.subr.bf16.mxu0 0
    %1486 = vmatpush1.bf16.xpose.msra.mxu0 0
    %1487 = vmatprep.subr.bf16.mxu0 0
    %1488 = vmatpush1.bf16.xpose.msra.mxu0 0
    %1489 = vmatprep.subr.bf16.mxu0 0
    %1490 = vmatpush1.bf16.xpose.msra.mxu0 0
    %1491 = vmatprep.subr.bf16.mxu0 0
    %1492 = vmatpush1.bf16.xpose.msra.mxu0 0
    %1493 = vmatprep.subr.bf16.mxu0 0
    %1494 = vmatpush1.bf16.xpose.msra.mxu0 0
    %1495 = vmatprep.subr.bf16.mxu0 0
    %1496 = vmatpush1.bf16.xpose.msra.mxu0 0
    %1497 = vmatprep.subr.bf16.mxu0 0
    %1498 = vmatpush1.bf16.xpose.msra.mxu0 0
    %1499 = vmatprep.subr.bf16.mxu0 0
    %1500 = vmatpush1.bf16.xpose.msra.mxu0 %v1483
    %1501 = vmatprep.subr.bf16.mxu0 0
    %1502 = vmatpush2.bf16.xpose.msra.mxu0 0
    %1503 = vmatprep.subr.bf16.mxu0 0
    %1504 = vmatpush2.bf16.xpose.msra.mxu0 0
    %1505 = vmatprep.subr.bf16.mxu0 0
    %1506 = vmatpush2.bf16.xpose.msra.mxu0 0
    %1507 = vmatprep.subr.bf16.mxu0 0
    %1508 = vmatpush2.bf16.xpose.msra.mxu0 0
    %1509 = vmatprep.subr.bf16.mxu0 0
    %1510 = vmatpush2.bf16.xpose.msra.mxu0 0
    %1511 = vmatprep.subr.bf16.mxu0 0
    %1512 = vmatpush2.bf16.xpose.msra.mxu0 0
    %1513 = vmatprep.subr.bf16.mxu0 0
    %1514 = vmatpush2.bf16.xpose.msra.mxu0 0
    %1515 = vmatprep.subr.bf16.mxu0 0
    %1516 = vmatpush2.bf16.xpose.msra.mxu0 0
    %1517 = vmatprep.mubr.bf16.mxu0 0
    %1518 = vmatmul.mubr.bf16.gmra.mxu0 %v1480
    %v1519 = vpop.f32.mrf.mxu0
    %v1520 = vadd.f32 %v1224, %v1519
    %v1521 = vpop.f32.mrf.mxu0
    %v1522 = vpop.f32.mrf.mxu0
    %v1523 = vpop.f32.mrf.mxu0
    %1524 = vdwg.mxu0
    %1525 = vrot.lane.b32.xlu0 %v247, 120
    %v1526 = vpop.permute.xlu0 %1525
    %1527 = vrot.lane.b32.xlu0 %v247, 88
    %v1528 = vpop.permute.xlu0 %1527
    %v1530 = vsel %vm261, %v1526, 0
    %v1533 = vsel %vm261, %v1528, 0
    %1535 = vmatprep.subr.bf16.mxu0 0
    %1536 = vmatpush1.bf16.xpose.msra.mxu0 0
    %1537 = vmatprep.subr.bf16.mxu0 0
    %1538 = vmatpush1.bf16.xpose.msra.mxu0 0
    %1539 = vmatprep.subr.bf16.mxu0 0
    %1540 = vmatpush1.bf16.xpose.msra.mxu0 0
    %1541 = vmatprep.subr.bf16.mxu0 0
    %1542 = vmatpush1.bf16.xpose.msra.mxu0 0
    %1543 = vmatprep.subr.bf16.mxu0 0
    %1544 = vmatpush1.bf16.xpose.msra.mxu0 0
    %1545 = vmatprep.subr.bf16.mxu0 0
    %1546 = vmatpush1.bf16.xpose.msra.mxu0 0
    %1547 = vmatprep.subr.bf16.mxu0 0
    %1548 = vmatpush1.bf16.xpose.msra.mxu0 0
    %1549 = vmatprep.subr.bf16.mxu0 0
    %1550 = vmatpush1.bf16.xpose.msra.mxu0 %v1533
    %1551 = vmatprep.subr.bf16.mxu0 0
    %1552 = vmatpush2.bf16.xpose.msra.mxu0 0
    %1553 = vmatprep.subr.bf16.mxu0 0
    %1554 = vmatpush2.bf16.xpose.msra.mxu0 0
    %1555 = vmatprep.subr.bf16.mxu0 0
    %1556 = vmatpush2.bf16.xpose.msra.mxu0 0
    %1557 = vmatprep.subr.bf16.mxu0 0
    %1558 = vmatpush2.bf16.xpose.msra.mxu0 0
    %1559 = vmatprep.subr.bf16.mxu0 0
    %1560 = vmatpush2.bf16.xpose.msra.mxu0 0
    %1561 = vmatprep.subr.bf16.mxu0 0
    %1562 = vmatpush2.bf16.xpose.msra.mxu0 0
    %1563 = vmatprep.subr.bf16.mxu0 0
    %1564 = vmatpush2.bf16.xpose.msra.mxu0 0
    %1565 = vmatprep.subr.bf16.mxu0 0
    %1566 = vmatpush2.bf16.xpose.msra.mxu0 0
    %1567 = vmatprep.mubr.bf16.mxu0 0
    %1568 = vmatmul.mubr.bf16.gmra.mxu0 %v1530
    %v1569 = vpop.f32.mrf.mxu0
    %v1570 = vadd.f32 %v1224, %v1569
    %v1571 = vpop.f32.mrf.mxu0
    %v1572 = vpop.f32.mrf.mxu0
    %v1573 = vpop.f32.mrf.mxu0
    %1574 = vdwg.mxu0
    %1575 = vrot.lane.b32.xlu0 %v248, 120
    %v1576 = vpop.permute.xlu0 %1575
    %1577 = vrot.lane.b32.xlu0 %v248, 88
    %v1578 = vpop.permute.xlu0 %1577
    %v1580 = vsel %vm261, %v1576, 0
    %v1583 = vsel %vm261, %v1578, 0
    %1585 = vmatprep.subr.bf16.mxu0 0
    %1586 = vmatpush1.bf16.xpose.msra.mxu0 0
    %1587 = vmatprep.subr.bf16.mxu0 0
    %1588 = vmatpush1.bf16.xpose.msra.mxu0 0
    %1589 = vmatprep.subr.bf16.mxu0 0
    %1590 = vmatpush1.bf16.xpose.msra.mxu0 0
    %1591 = vmatprep.subr.bf16.mxu0 0
    %1592 = vmatpush1.bf16.xpose.msra.mxu0 0
    %1593 = vmatprep.subr.bf16.mxu0 0
    %1594 = vmatpush1.bf16.xpose.msra.mxu0 0
    %1595 = vmatprep.subr.bf16.mxu0 0
    %1596 = vmatpush1.bf16.xpose.msra.mxu0 0
    %1597 = vmatprep.subr.bf16.mxu0 0
    %1598 = vmatpush1.bf16.xpose.msra.mxu0 0
    %1599 = vmatprep.subr.bf16.mxu0 0
    %1600 = vmatpush1.bf16.xpose.msra.mxu0 %v1583
    %1601 = vmatprep.subr.bf16.mxu0 0
    %1602 = vmatpush2.bf16.xpose.msra.mxu0 0
    %1603 = vmatprep.subr.bf16.mxu0 0
    %1604 = vmatpush2.bf16.xpose.msra.mxu0 0
    %1605 = vmatprep.subr.bf16.mxu0 0
    %1606 = vmatpush2.bf16.xpose.msra.mxu0 0
    %1607 = vmatprep.subr.bf16.mxu0 0
    %1608 = vmatpush2.bf16.xpose.msra.mxu0 0
    %1609 = vmatprep.subr.bf16.mxu0 0
    %1610 = vmatpush2.bf16.xpose.msra.mxu0 0
    %1611 = vmatprep.subr.bf16.mxu0 0
    %1612 = vmatpush2.bf16.xpose.msra.mxu0 0
    %1613 = vmatprep.subr.bf16.mxu0 0
    %1614 = vmatpush2.bf16.xpose.msra.mxu0 0
    %1615 = vmatprep.subr.bf16.mxu0 0
    %1616 = vmatpush2.bf16.xpose.msra.mxu0 0
    %1617 = vmatprep.mubr.bf16.mxu0 0
    %1618 = vmatmul.mubr.bf16.gmra.mxu0 %v1580
    %v1619 = vpop.f32.mrf.mxu0
    %v1620 = vadd.f32 %v1224, %v1619
    %v1621 = vpop.f32.mrf.mxu0
    %v1622 = vpop.f32.mrf.mxu0
    %v1623 = vpop.f32.mrf.mxu0
    %1624 = vdwg.mxu0
    %v1625 = vadd.f32 %v1270, %v655
    %v1626 = vadd.f32 %v1320, %v659
    %v1627 = vadd.f32 %v1370, %v663
    %v1628 = vadd.f32 %v1420, %v667
    %v1629 = vadd.f32 %v1470, %v671
    %v1630 = vadd.f32 %v1520, %v675
    %v1631 = vadd.f32 %v1570, %v679
    %v1632 = vadd.f32 %v1620, %v683
    %v1633 = vsel %vm261, %v1625, -inf
    %1634 = vmax.xlane.f32.xlu0 %v1633
    %v1635 = vpop.xlane.xlu0 %1634
    %v1636 = vsel %vm261, %v1626, -inf
    %1637 = vmax.xlane.f32.xlu0 %v1636
    %v1638 = vpop.xlane.xlu0 %1637
    %v1639 = vsel %vm261, %v1627, -inf
    %1640 = vmax.xlane.f32.xlu0 %v1639
    %v1641 = vpop.xlane.xlu0 %1640
    %v1642 = vsel %vm261, %v1628, -inf
    %1643 = vmax.xlane.f32.xlu0 %v1642
    %v1644 = vpop.xlane.xlu0 %1643
    %v1645 = vsel %vm261, %v1629, -inf
    %1646 = vmax.xlane.f32.xlu0 %v1645
    %v1647 = vpop.xlane.xlu0 %1646
    %v1648 = vsel %vm261, %v1630, -inf
    %1649 = vmax.xlane.f32.xlu0 %v1648
    %v1650 = vpop.xlane.xlu0 %1649
    %v1651 = vsel %vm261, %v1631, -inf
    %1652 = vmax.xlane.f32.xlu0 %v1651
    %v1653 = vpop.xlane.xlu0 %1652
    %v1654 = vsel %vm261, %v1632, -inf
    %1655 = vmax.xlane.f32.xlu0 %v1654
    %v1656 = vpop.xlane.xlu0 %1655
    %v1657 = vsub.f32 %v1625, %v1635
    %v1658 = vsub.f32 %v1626, %v1638
    %v1659 = vsub.f32 %v1627, %v1641
    %v1660 = vsub.f32 %v1628, %v1644
    %v1661 = vsub.f32 %v1629, %v1647
    %v1662 = vsub.f32 %v1630, %v1650
    %v1663 = vsub.f32 %v1631, %v1653
    %v1664 = vsub.f32 %v1632, %v1656
    %v1665 = vmul.f32 %v1657, 1.442695
    %v1666 = vpow.pop %v1665
    %v1667 = vmul.f32 %v1658, 1.442695
    %v1668 = vpow.pop %v1667
    %v1669 = vmul.f32 %v1659, 1.442695
    %v1670 = vpow.pop %v1669
    %v1671 = vmul.f32 %v1660, 1.442695
    %v1672 = vpow.pop %v1671
    %v1673 = vmul.f32 %v1661, 1.442695
    %v1674 = vpow.pop %v1673
    %v1675 = vmul.f32 %v1662, 1.442695
    %v1676 = vpow.pop %v1675
    %v1677 = vmul.f32 %v1663, 1.442695
    %v1678 = vpow.pop %v1677
    %v1679 = vmul.f32 %v1664, 1.442695
    %v1680 = vpow.pop %v1679
    %v1681 = vsel %vm261, %v1666, 0.0
    %1682 = vadd.xlane.f32.xlu0 %v1681
    %v1683 = vpop.xlane.xlu0 %1682
    %v1684 = vsel %vm261, %v1668, 0.0
    %1685 = vadd.xlane.f32.xlu0 %v1684
    %v1686 = vpop.xlane.xlu0 %1685
    %v1687 = vsel %vm261, %v1670, 0.0
    %1688 = vadd.xlane.f32.xlu0 %v1687
    %v1689 = vpop.xlane.xlu0 %1688
    %v1690 = vsel %vm261, %v1672, 0.0
    %1691 = vadd.xlane.f32.xlu0 %v1690
    %v1692 = vpop.xlane.xlu0 %1691
    %v1693 = vsel %vm261, %v1674, 0.0
    %1694 = vadd.xlane.f32.xlu0 %v1693
    %v1695 = vpop.xlane.xlu0 %1694
    %v1696 = vsel %vm261, %v1676, 0.0
    %1697 = vadd.xlane.f32.xlu0 %v1696
    %v1698 = vpop.xlane.xlu0 %1697
    %v1699 = vsel %vm261, %v1678, 0.0
    %1700 = vadd.xlane.f32.xlu0 %v1699
    %v1701 = vpop.xlane.xlu0 %1700
    %v1702 = vsel %vm261, %v1680, 0.0
    %1703 = vadd.xlane.f32.xlu0 %v1702
    %v1704 = vpop.xlane.xlu0 %1703
    %v1705 = vrcp.pop %v1683
    %v1706 = vrcp.pop %v1686
    %v1707 = vrcp.pop %v1689
    %v1708 = vrcp.pop %v1692
    %v1709 = vrcp.pop %v1695
    %v1710 = vrcp.pop %v1698
    %v1711 = vrcp.pop %v1701
    %v1712 = vrcp.pop %v1704
    %v1713 = vmul.f32 %v1666, %v1705
    %v1714 = vmul.f32 %v1668, %v1706
    %v1715 = vmul.f32 %v1670, %v1707
    %v1716 = vmul.f32 %v1672, %v1708
    %v1717 = vmul.f32 %v1674, %v1709
    %v1718 = vmul.f32 %v1676, %v1710
    %v1719 = vmul.f32 %v1678, %v1711
    %v1720 = vmul.f32 %v1680, %v1712
    %v1721 = vpack.c.bf16 %v1713, %v1713
    %v1722 = vpack.c.bf16 %v1714, %v1714
    %v1723 = vpack.c.bf16 %v1715, %v1715
    %v1724 = vpack.c.bf16 %v1716, %v1716
    %v1725 = vpack.c.bf16 %v1717, %v1717
    %v1726 = vpack.c.bf16 %v1718, %v1718
    %v1727 = vpack.c.bf16 %v1719, %v1719
    %v1728 = vpack.c.bf16 %v1720, %v1720
    %1729 = vrot.lane.b32.xlu0 %v241, 56
    %v1730 = vpop.permute.xlu0 %1729
    %v1732 = vsel %vm261, %v1721, 0
    %v1735 = vsel %vm801, %v1730, 0
    %1737 = vmatprep.subr.bf16.mxu0 0
    %1738 = vmatpush1.bf16.msra.mxu0 0
    %1739 = vmatprep.subr.bf16.mxu0 0
    %1740 = vmatpush1.bf16.msra.mxu0 0
    %1741 = vmatprep.subr.bf16.mxu0 0
    %1742 = vmatpush1.bf16.msra.mxu0 0
    %1743 = vmatprep.subr.bf16.mxu0 0
    %1744 = vmatpush1.bf16.msra.mxu0 0
    %1745 = vmatprep.subr.bf16.mxu0 0
    %1746 = vmatpush1.bf16.msra.mxu0 0
    %1747 = vmatprep.subr.bf16.mxu0 0
    %1748 = vmatpush1.bf16.msra.mxu0 0
    %1749 = vmatprep.subr.bf16.mxu0 0
    %1750 = vmatpush1.bf16.msra.mxu0 0
    %1751 = vmatprep.subr.bf16.mxu0 0
    %1752 = vmatpush1.bf16.msra.mxu0 %v1735
    %1753 = vmatprep.subr.bf16.mxu0 0
    %1754 = vmatpush2.bf16.msra.mxu0 0
    %1755 = vmatprep.subr.bf16.mxu0 0
    %1756 = vmatpush2.bf16.msra.mxu0 0
    %1757 = vmatprep.subr.bf16.mxu0 0
    %1758 = vmatpush2.bf16.msra.mxu0 0
    %1759 = vmatprep.subr.bf16.mxu0 0
    %1760 = vmatpush2.bf16.msra.mxu0 0
    %1761 = vmatprep.subr.bf16.mxu0 0
    %1762 = vmatpush2.bf16.msra.mxu0 0
    %1763 = vmatprep.subr.bf16.mxu0 0
    %1764 = vmatpush2.bf16.msra.mxu0 0
    %1765 = vmatprep.subr.bf16.mxu0 0
    %1766 = vmatpush2.bf16.msra.mxu0 0
    %1767 = vmatprep.subr.bf16.mxu0 0
    %1768 = vmatpush2.bf16.msra.mxu0 0
    %1769 = vmatprep.mubr.bf16.mxu0 0
    %1770 = vmatmul.mubr.bf16.gmra.mxu0 %v1732
    %v1771 = vpop.f32.mrf.mxu0
    %v1772 = vadd.f32 0.0, %v1771
    %v1773 = vpop.f32.mrf.mxu0
    %v1774 = vpop.f32.mrf.mxu0
    %v1775 = vpop.f32.mrf.mxu0
    %1776 = vdwg.mxu0
    %1777 = vrot.lane.b32.xlu0 %v242, 56
    %v1778 = vpop.permute.xlu0 %1777
    %v1780 = vsel %vm261, %v1722, 0
    %v1783 = vsel %vm801, %v1778, 0
    %1785 = vmatprep.subr.bf16.mxu0 0
    %1786 = vmatpush1.bf16.msra.mxu0 0
    %1787 = vmatprep.subr.bf16.mxu0 0
    %1788 = vmatpush1.bf16.msra.mxu0 0
    %1789 = vmatprep.subr.bf16.mxu0 0
    %1790 = vmatpush1.bf16.msra.mxu0 0
    %1791 = vmatprep.subr.bf16.mxu0 0
    %1792 = vmatpush1.bf16.msra.mxu0 0
    %1793 = vmatprep.subr.bf16.mxu0 0
    %1794 = vmatpush1.bf16.msra.mxu0 0
    %1795 = vmatprep.subr.bf16.mxu0 0
    %1796 = vmatpush1.bf16.msra.mxu0 0
    %1797 = vmatprep.subr.bf16.mxu0 0
    %1798 = vmatpush1.bf16.msra.mxu0 0
    %1799 = vmatprep.subr.bf16.mxu0 0
    %1800 = vmatpush1.bf16.msra.mxu0 %v1783
    %1801 = vmatprep.subr.bf16.mxu0 0
    %1802 = vmatpush2.bf16.msra.mxu0 0
    %1803 = vmatprep.subr.bf16.mxu0 0
    %1804 = vmatpush2.bf16.msra.mxu0 0
    %1805 = vmatprep.subr.bf16.mxu0 0
    %1806 = vmatpush2.bf16.msra.mxu0 0
    %1807 = vmatprep.subr.bf16.mxu0 0
    %1808 = vmatpush2.bf16.msra.mxu0 0
    %1809 = vmatprep.subr.bf16.mxu0 0
    %1810 = vmatpush2.bf16.msra.mxu0 0
    %1811 = vmatprep.subr.bf16.mxu0 0
    %1812 = vmatpush2.bf16.msra.mxu0 0
    %1813 = vmatprep.subr.bf16.mxu0 0
    %1814 = vmatpush2.bf16.msra.mxu0 0
    %1815 = vmatprep.subr.bf16.mxu0 0
    %1816 = vmatpush2.bf16.msra.mxu0 0
    %1817 = vmatprep.mubr.bf16.mxu0 0
    %1818 = vmatmul.mubr.bf16.gmra.mxu0 %v1780
    %v1819 = vpop.f32.mrf.mxu0
    %v1820 = vadd.f32 0.0, %v1819
    %v1821 = vpop.f32.mrf.mxu0
    %v1822 = vpop.f32.mrf.mxu0
    %v1823 = vpop.f32.mrf.mxu0
    %1824 = vdwg.mxu0
    %1825 = vrot.lane.b32.xlu0 %v243, 56
    %v1826 = vpop.permute.xlu0 %1825
    %v1828 = vsel %vm261, %v1723, 0
    %v1831 = vsel %vm801, %v1826, 0
    %1833 = vmatprep.subr.bf16.mxu0 0
    %1834 = vmatpush1.bf16.msra.mxu0 0
    %1835 = vmatprep.subr.bf16.mxu0 0
    %1836 = vmatpush1.bf16.msra.mxu0 0
    %1837 = vmatprep.subr.bf16.mxu0 0
    %1838 = vmatpush1.bf16.msra.mxu0 0
    %1839 = vmatprep.subr.bf16.mxu0 0
    %1840 = vmatpush1.bf16.msra.mxu0 0
    %1841 = vmatprep.subr.bf16.mxu0 0
    %1842 = vmatpush1.bf16.msra.mxu0 0
    %1843 = vmatprep.subr.bf16.mxu0 0
    %1844 = vmatpush1.bf16.msra.mxu0 0
    %1845 = vmatprep.subr.bf16.mxu0 0
    %1846 = vmatpush1.bf16.msra.mxu0 0
    %1847 = vmatprep.subr.bf16.mxu0 0
    %1848 = vmatpush1.bf16.msra.mxu0 %v1831
    %1849 = vmatprep.subr.bf16.mxu0 0
    %1850 = vmatpush2.bf16.msra.mxu0 0
    %1851 = vmatprep.subr.bf16.mxu0 0
    %1852 = vmatpush2.bf16.msra.mxu0 0
    %1853 = vmatprep.subr.bf16.mxu0 0
    %1854 = vmatpush2.bf16.msra.mxu0 0
    %1855 = vmatprep.subr.bf16.mxu0 0
    %1856 = vmatpush2.bf16.msra.mxu0 0
    %1857 = vmatprep.subr.bf16.mxu0 0
    %1858 = vmatpush2.bf16.msra.mxu0 0
    %1859 = vmatprep.subr.bf16.mxu0 0
    %1860 = vmatpush2.bf16.msra.mxu0 0
    %1861 = vmatprep.subr.bf16.mxu0 0
    %1862 = vmatpush2.bf16.msra.mxu0 0
    %1863 = vmatprep.subr.bf16.mxu0 0
    %1864 = vmatpush2.bf16.msra.mxu0 0
    %1865 = vmatprep.mubr.bf16.mxu0 0
    %1866 = vmatmul.mubr.bf16.gmra.mxu0 %v1828
    %v1867 = vpop.f32.mrf.mxu0
    %v1868 = vadd.f32 0.0, %v1867
    %v1869 = vpop.f32.mrf.mxu0
    %v1870 = vpop.f32.mrf.mxu0
    %v1871 = vpop.f32.mrf.mxu0
    %1872 = vdwg.mxu0
    %1873 = vrot.lane.b32.xlu0 %v244, 56
    %v1874 = vpop.permute.xlu0 %1873
    %v1876 = vsel %vm261, %v1724, 0
    %v1879 = vsel %vm801, %v1874, 0
    %1881 = vmatprep.subr.bf16.mxu0 0
    %1882 = vmatpush1.bf16.msra.mxu0 0
    %1883 = vmatprep.subr.bf16.mxu0 0
    %1884 = vmatpush1.bf16.msra.mxu0 0
    %1885 = vmatprep.subr.bf16.mxu0 0
    %1886 = vmatpush1.bf16.msra.mxu0 0
    %1887 = vmatprep.subr.bf16.mxu0 0
    %1888 = vmatpush1.bf16.msra.mxu0 0
    %1889 = vmatprep.subr.bf16.mxu0 0
    %1890 = vmatpush1.bf16.msra.mxu0 0
    %1891 = vmatprep.subr.bf16.mxu0 0
    %1892 = vmatpush1.bf16.msra.mxu0 0
    %1893 = vmatprep.subr.bf16.mxu0 0
    %1894 = vmatpush1.bf16.msra.mxu0 0
    %1895 = vmatprep.subr.bf16.mxu0 0
    %1896 = vmatpush1.bf16.msra.mxu0 %v1879
    %1897 = vmatprep.subr.bf16.mxu0 0
    %1898 = vmatpush2.bf16.msra.mxu0 0
    %1899 = vmatprep.subr.bf16.mxu0 0
    %1900 = vmatpush2.bf16.msra.mxu0 0
    %1901 = vmatprep.subr.bf16.mxu0 0
    %1902 = vmatpush2.bf16.msra.mxu0 0
    %1903 = vmatprep.subr.bf16.mxu0 0
    %1904 = vmatpush2.bf16.msra.mxu0 0
    %1905 = vmatprep.subr.bf16.mxu0 0
    %1906 = vmatpush2.bf16.msra.mxu0 0
    %1907 = vmatprep.subr.bf16.mxu0 0
    %1908 = vmatpush2.bf16.msra.mxu0 0
    %1909 = vmatprep.subr.bf16.mxu0 0
    %1910 = vmatpush2.bf16.msra.mxu0 0
    %1911 = vmatprep.subr.bf16.mxu0 0
    %1912 = vmatpush2.bf16.msra.mxu0 0
    %1913 = vmatprep.mubr.bf16.mxu0 0
    %1914 = vmatmul.mubr.bf16.gmra.mxu0 %v1876
    %v1915 = vpop.f32.mrf.mxu0
    %v1916 = vadd.f32 0.0, %v1915
    %v1917 = vpop.f32.mrf.mxu0
    %v1918 = vpop.f32.mrf.mxu0
    %v1919 = vpop.f32.mrf.mxu0
    %1920 = vdwg.mxu0
    %1921 = vrot.lane.b32.xlu0 %v245, 56
    %v1922 = vpop.permute.xlu0 %1921
    %v1924 = vsel %vm261, %v1725, 0
    %v1927 = vsel %vm801, %v1922, 0
    %1929 = vmatprep.subr.bf16.mxu0 0
    %1930 = vmatpush1.bf16.msra.mxu0 0
    %1931 = vmatprep.subr.bf16.mxu0 0
    %1932 = vmatpush1.bf16.msra.mxu0 0
    %1933 = vmatprep.subr.bf16.mxu0 0
    %1934 = vmatpush1.bf16.msra.mxu0 0
    %1935 = vmatprep.subr.bf16.mxu0 0
    %1936 = vmatpush1.bf16.msra.mxu0 0
    %1937 = vmatprep.subr.bf16.mxu0 0
    %1938 = vmatpush1.bf16.msra.mxu0 0
    %1939 = vmatprep.subr.bf16.mxu0 0
    %1940 = vmatpush1.bf16.msra.mxu0 0
    %1941 = vmatprep.subr.bf16.mxu0 0
    %1942 = vmatpush1.bf16.msra.mxu0 0
    %1943 = vmatprep.subr.bf16.mxu0 0
    %1944 = vmatpush1.bf16.msra.mxu0 %v1927
    %1945 = vmatprep.subr.bf16.mxu0 0
    %1946 = vmatpush2.bf16.msra.mxu0 0
    %1947 = vmatprep.subr.bf16.mxu0 0
    %1948 = vmatpush2.bf16.msra.mxu0 0
    %1949 = vmatprep.subr.bf16.mxu0 0
    %1950 = vmatpush2.bf16.msra.mxu0 0
    %1951 = vmatprep.subr.bf16.mxu0 0
    %1952 = vmatpush2.bf16.msra.mxu0 0
    %1953 = vmatprep.subr.bf16.mxu0 0
    %1954 = vmatpush2.bf16.msra.mxu0 0
    %1955 = vmatprep.subr.bf16.mxu0 0
    %1956 = vmatpush2.bf16.msra.mxu0 0
    %1957 = vmatprep.subr.bf16.mxu0 0
    %1958 = vmatpush2.bf16.msra.mxu0 0
    %1959 = vmatprep.subr.bf16.mxu0 0
    %1960 = vmatpush2.bf16.msra.mxu0 0
    %1961 = vmatprep.mubr.bf16.mxu0 0
    %1962 = vmatmul.mubr.bf16.gmra.mxu0 %v1924
    %v1963 = vpop.f32.mrf.mxu0
    %v1964 = vadd.f32 0.0, %v1963
    %v1965 = vpop.f32.mrf.mxu0
    %v1966 = vpop.f32.mrf.mxu0
    %v1967 = vpop.f32.mrf.mxu0
    %1968 = vdwg.mxu0
    %1969 = vrot.lane.b32.xlu0 %v246, 56
    %v1970 = vpop.permute.xlu0 %1969
    %v1972 = vsel %vm261, %v1726, 0
    %v1975 = vsel %vm801, %v1970, 0
    %1977 = vmatprep.subr.bf16.mxu0 0
    %1978 = vmatpush1.bf16.msra.mxu0 0
    %1979 = vmatprep.subr.bf16.mxu0 0
    %1980 = vmatpush1.bf16.msra.mxu0 0
    %1981 = vmatprep.subr.bf16.mxu0 0
    %1982 = vmatpush1.bf16.msra.mxu0 0
    %1983 = vmatprep.subr.bf16.mxu0 0
    %1984 = vmatpush1.bf16.msra.mxu0 0
    %1985 = vmatprep.subr.bf16.mxu0 0
    %1986 = vmatpush1.bf16.msra.mxu0 0
    %1987 = vmatprep.subr.bf16.mxu0 0
    %1988 = vmatpush1.bf16.msra.mxu0 0
    %1989 = vmatprep.subr.bf16.mxu0 0
    %1990 = vmatpush1.bf16.msra.mxu0 0
    %1991 = vmatprep.subr.bf16.mxu0 0
    %1992 = vmatpush1.bf16.msra.mxu0 %v1975
    %1993 = vmatprep.subr.bf16.mxu0 0
    %1994 = vmatpush2.bf16.msra.mxu0 0
    %1995 = vmatprep.subr.bf16.mxu0 0
    %1996 = vmatpush2.bf16.msra.mxu0 0
    %1997 = vmatprep.subr.bf16.mxu0 0
    %1998 = vmatpush2.bf16.msra.mxu0 0
    %1999 = vmatprep.subr.bf16.mxu0 0
    %2000 = vmatpush2.bf16.msra.mxu0 0
    %2001 = vmatprep.subr.bf16.mxu0 0
    %2002 = vmatpush2.bf16.msra.mxu0 0
    %2003 = vmatprep.subr.bf16.mxu0 0
    %2004 = vmatpush2.bf16.msra.mxu0 0
    %2005 = vmatprep.subr.bf16.mxu0 0
    %2006 = vmatpush2.bf16.msra.mxu0 0
    %2007 = vmatprep.subr.bf16.mxu0 0
    %2008 = vmatpush2.bf16.msra.mxu0 0
    %2009 = vmatprep.mubr.bf16.mxu0 0
    %2010 = vmatmul.mubr.bf16.gmra.mxu0 %v1972
    %v2011 = vpop.f32.mrf.mxu0
    %v2012 = vadd.f32 0.0, %v2011
    %v2013 = vpop.f32.mrf.mxu0
    %v2014 = vpop.f32.mrf.mxu0
    %v2015 = vpop.f32.mrf.mxu0
    %2016 = vdwg.mxu0
    %2017 = vrot.lane.b32.xlu0 %v247, 56
    %v2018 = vpop.permute.xlu0 %2017
    %v2020 = vsel %vm261, %v1727, 0
    %v2023 = vsel %vm801, %v2018, 0
    %2025 = vmatprep.subr.bf16.mxu0 0
    %2026 = vmatpush1.bf16.msra.mxu0 0
    %2027 = vmatprep.subr.bf16.mxu0 0
    %2028 = vmatpush1.bf16.msra.mxu0 0
    %2029 = vmatprep.subr.bf16.mxu0 0
    %2030 = vmatpush1.bf16.msra.mxu0 0
    %2031 = vmatprep.subr.bf16.mxu0 0
    %2032 = vmatpush1.bf16.msra.mxu0 0
    %2033 = vmatprep.subr.bf16.mxu0 0
    %2034 = vmatpush1.bf16.msra.mxu0 0
    %2035 = vmatprep.subr.bf16.mxu0 0
    %2036 = vmatpush1.bf16.msra.mxu0 0
    %2037 = vmatprep.subr.bf16.mxu0 0
    %2038 = vmatpush1.bf16.msra.mxu0 0
    %2039 = vmatprep.subr.bf16.mxu0 0
    %2040 = vmatpush1.bf16.msra.mxu0 %v2023
    %2041 = vmatprep.subr.bf16.mxu0 0
    %2042 = vmatpush2.bf16.msra.mxu0 0
    %2043 = vmatprep.subr.bf16.mxu0 0
    %2044 = vmatpush2.bf16.msra.mxu0 0
    %2045 = vmatprep.subr.bf16.mxu0 0
    %2046 = vmatpush2.bf16.msra.mxu0 0
    %2047 = vmatprep.subr.bf16.mxu0 0
    %2048 = vmatpush2.bf16.msra.mxu0 0
    %2049 = vmatprep.subr.bf16.mxu0 0
    %2050 = vmatpush2.bf16.msra.mxu0 0
    %2051 = vmatprep.subr.bf16.mxu0 0
    %2052 = vmatpush2.bf16.msra.mxu0 0
    %2053 = vmatprep.subr.bf16.mxu0 0
    %2054 = vmatpush2.bf16.msra.mxu0 0
    %2055 = vmatprep.subr.bf16.mxu0 0
    %2056 = vmatpush2.bf16.msra.mxu0 0
    %2057 = vmatprep.mubr.bf16.mxu0 0
    %2058 = vmatmul.mubr.bf16.gmra.mxu0 %v2020
    %v2059 = vpop.f32.mrf.mxu0
    %v2060 = vadd.f32 0.0, %v2059
    %v2061 = vpop.f32.mrf.mxu0
    %v2062 = vpop.f32.mrf.mxu0
    %v2063 = vpop.f32.mrf.mxu0
    %2064 = vdwg.mxu0
    %2065 = vrot.lane.b32.xlu0 %v248, 56
    %v2066 = vpop.permute.xlu0 %2065
    %v2068 = vsel %vm261, %v1728, 0
    %v2071 = vsel %vm801, %v2066, 0
    %2073 = vmatprep.subr.bf16.mxu0 0
    %2074 = vmatpush1.bf16.msra.mxu0 0
    %2075 = vmatprep.subr.bf16.mxu0 0
    %2076 = vmatpush1.bf16.msra.mxu0 0
    %2077 = vmatprep.subr.bf16.mxu0 0
    %2078 = vmatpush1.bf16.msra.mxu0 0
    %2079 = vmatprep.subr.bf16.mxu0 0
    %2080 = vmatpush1.bf16.msra.mxu0 0
    %2081 = vmatprep.subr.bf16.mxu0 0
    %2082 = vmatpush1.bf16.msra.mxu0 0
    %2083 = vmatprep.subr.bf16.mxu0 0
    %2084 = vmatpush1.bf16.msra.mxu0 0
    %2085 = vmatprep.subr.bf16.mxu0 0
    %2086 = vmatpush1.bf16.msra.mxu0 0
    %2087 = vmatprep.subr.bf16.mxu0 0
    %2088 = vmatpush1.bf16.msra.mxu0 %v2071
    %2089 = vmatprep.subr.bf16.mxu0 0
    %2090 = vmatpush2.bf16.msra.mxu0 0
    %2091 = vmatprep.subr.bf16.mxu0 0
    %2092 = vmatpush2.bf16.msra.mxu0 0
    %2093 = vmatprep.subr.bf16.mxu0 0
    %2094 = vmatpush2.bf16.msra.mxu0 0
    %2095 = vmatprep.subr.bf16.mxu0 0
    %2096 = vmatpush2.bf16.msra.mxu0 0
    %2097 = vmatprep.subr.bf16.mxu0 0
    %2098 = vmatpush2.bf16.msra.mxu0 0
    %2099 = vmatprep.subr.bf16.mxu0 0
    %2100 = vmatpush2.bf16.msra.mxu0 0
    %2101 = vmatprep.subr.bf16.mxu0 0
    %2102 = vmatpush2.bf16.msra.mxu0 0
    %2103 = vmatprep.subr.bf16.mxu0 0
    %2104 = vmatpush2.bf16.msra.mxu0 0
    %2105 = vmatprep.mubr.bf16.mxu0 0
    %2106 = vmatmul.mubr.bf16.gmra.mxu0 %v2068
    %v2107 = vpop.f32.mrf.mxu0
    %v2108 = vadd.f32 0.0, %v2107
    %v2109 = vpop.f32.mrf.mxu0
    %v2110 = vpop.f32.mrf.mxu0
    %v2111 = vpop.f32.mrf.mxu0
    %2112 = vdwg.mxu0
    %v2113 = vpack.c.bf16 %v1820, %v1772
    %v2114 = vpack.c.bf16 %v1916, %v1868
    %v2115 = vpack.c.bf16 %v2012, %v1964
    %v2116 = vpack.c.bf16 %v2108, %v2060
    %v2121 = vunpack.c.l.b16 %v2113
    %v2122 = vunpack.c.h.b16 %v2113
    %v2123 = vunpack.c.l.b16 %v2114
    %v2124 = vunpack.c.h.b16 %v2114
    %v2125 = vunpack.c.l.b16 %v2115
    %v2126 = vunpack.c.h.b16 %v2115
    %v2127 = vunpack.c.l.b16 %v2116
    %v2128 = vunpack.c.h.b16 %v2116
    %v2129 = vpack.c.b16 %v2121, %v2121
    %v2130 = vpack.c.b16 %v2122, %v2122
    %v2131 = vpack.c.b16 %v2123, %v2123
    %v2132 = vpack.c.b16 %v2124, %v2124
    %v2133 = vpack.c.b16 %v2125, %v2125
    %v2134 = vpack.c.b16 %v2126, %v2126
    %v2135 = vpack.c.b16 %v2127, %v2127
    %v2136 = vpack.c.b16 %v2128, %v2128
    %2137 = vrot.lane.b32.xlu0 %v2129, 8
    %v2138 = vpop.permute.xlu0 %2137
    %2139 = vrot.lane.b32.xlu0 %v2130, 8
    %v2140 = vpop.permute.xlu0 %2139
    %2141 = vrot.lane.b32.xlu0 %v2131, 8
    %v2142 = vpop.permute.xlu0 %2141
    %2143 = vrot.lane.b32.xlu0 %v2132, 8
    %v2144 = vpop.permute.xlu0 %2143
    %2145 = vrot.lane.b32.xlu0 %v2133, 8
    %v2146 = vpop.permute.xlu0 %2145
    %2147 = vrot.lane.b32.xlu0 %v2134, 8
    %v2148 = vpop.permute.xlu0 %2147
    %2149 = vrot.lane.b32.xlu0 %v2135, 8
    %v2150 = vpop.permute.xlu0 %2149
    %2151 = vrot.lane.b32.xlu0 %v2136, 8
    %v2152 = vpop.permute.xlu0 %2151
    %vm2161 = vcmask 126016
    %2162 = vst.msk [vmem:[#allocation2] sm:$0xf] %vm2161, %v2138
    %2163 = vst.msk [vmem:[#allocation2 + $0x4] sm:$0xf] %vm2161, %v2140
    %2164 = vst.msk [vmem:[#allocation2 + $0x8] sm:$0xf] %vm2161, %v2142
    %2165 = vst.msk [vmem:[#allocation2 + $0xc] sm:$0xf] %vm2161, %v2144
    %2166 = vst.msk [vmem:[#allocation2 + $0x10] sm:$0xf] %vm2161, %v2146
    %2167 = vst.msk [vmem:[#allocation2 + $0x14] sm:$0xf] %vm2161, %v2148
    %2168 = vst.msk [vmem:[#allocation2 + $0x18] sm:$0xf] %vm2161, %v2150
    %2169 = vst.msk [vmem:[#allocation2 + $0x1c] sm:$0xf] %vm2161, %v2152
    %s2170 = scalar_lea.vmem [#allocation8], 8
    %v2171 = vld [vmem:[%s2170] sm:$0xf]
    %v2172 = vunpack.c.l.bf16 %v2171
    %2173 = vrot.lane.b32.xlu0 %v241, 112
    %v2174 = vpop.permute.xlu0 %2173
    %2175 = vrot.lane.b32.xlu0 %v241, 80
    %v2176 = vpop.permute.xlu0 %2175
    %v2178 = vsel %vm261, %v2174, 0
    %v2181 = vsel %vm261, %v2176, 0
    %2183 = vmatprep.subr.bf16.mxu0 0
    %2184 = vmatpush1.bf16.xpose.msra.mxu0 0
    %2185 = vmatprep.subr.bf16.mxu0 0
    %2186 = vmatpush1.bf16.xpose.msra.mxu0 0
    %2187 = vmatprep.subr.bf16.mxu0 0
    %2188 = vmatpush1.bf16.xpose.msra.mxu0 0
    %2189 = vmatprep.subr.bf16.mxu0 0
    %2190 = vmatpush1.bf16.xpose.msra.mxu0 0
    %2191 = vmatprep.subr.bf16.mxu0 0
    %2192 = vmatpush1.bf16.xpose.msra.mxu0 0
    %2193 = vmatprep.subr.bf16.mxu0 0
    %2194 = vmatpush1.bf16.xpose.msra.mxu0 0
    %2195 = vmatprep.subr.bf16.mxu0 0
    %2196 = vmatpush1.bf16.xpose.msra.mxu0 0
    %2197 = vmatprep.subr.bf16.mxu0 0
    %2198 = vmatpush1.bf16.xpose.msra.mxu0 %v2181
    %2199 = vmatprep.subr.bf16.mxu0 0
    %2200 = vmatpush2.bf16.xpose.msra.mxu0 0
    %2201 = vmatprep.subr.bf16.mxu0 0
    %2202 = vmatpush2.bf16.xpose.msra.mxu0 0
    %2203 = vmatprep.subr.bf16.mxu0 0
    %2204 = vmatpush2.bf16.xpose.msra.mxu0 0
    %2205 = vmatprep.subr.bf16.mxu0 0
    %2206 = vmatpush2.bf16.xpose.msra.mxu0 0
    %2207 = vmatprep.subr.bf16.mxu0 0
    %2208 = vmatpush2.bf16.xpose.msra.mxu0 0
    %2209 = vmatprep.subr.bf16.mxu0 0
    %2210 = vmatpush2.bf16.xpose.msra.mxu0 0
    %2211 = vmatprep.subr.bf16.mxu0 0
    %2212 = vmatpush2.bf16.xpose.msra.mxu0 0
    %2213 = vmatprep.subr.bf16.mxu0 0
    %2214 = vmatpush2.bf16.xpose.msra.mxu0 0
    %2215 = vmatprep.mubr.bf16.mxu0 0
    %2216 = vmatmul.mubr.bf16.gmra.mxu0 %v2178
    %v2217 = vpop.f32.mrf.mxu0
    %v2218 = vadd.f32 %v2172, %v2217
    %v2219 = vpop.f32.mrf.mxu0
    %v2220 = vpop.f32.mrf.mxu0
    %v2221 = vpop.f32.mrf.mxu0
    %2222 = vdwg.mxu0
    %2223 = vrot.lane.b32.xlu0 %v242, 112
    %v2224 = vpop.permute.xlu0 %2223
    %2225 = vrot.lane.b32.xlu0 %v242, 80
    %v2226 = vpop.permute.xlu0 %2225
    %v2228 = vsel %vm261, %v2224, 0
    %v2231 = vsel %vm261, %v2226, 0
    %2233 = vmatprep.subr.bf16.mxu0 0
    %2234 = vmatpush1.bf16.xpose.msra.mxu0 0
    %2235 = vmatprep.subr.bf16.mxu0 0
    %2236 = vmatpush1.bf16.xpose.msra.mxu0 0
    %2237 = vmatprep.subr.bf16.mxu0 0
    %2238 = vmatpush1.bf16.xpose.msra.mxu0 0
    %2239 = vmatprep.subr.bf16.mxu0 0
    %2240 = vmatpush1.bf16.xpose.msra.mxu0 0
    %2241 = vmatprep.subr.bf16.mxu0 0
    %2242 = vmatpush1.bf16.xpose.msra.mxu0 0
    %2243 = vmatprep.subr.bf16.mxu0 0
    %2244 = vmatpush1.bf16.xpose.msra.mxu0 0
    %2245 = vmatprep.subr.bf16.mxu0 0
    %2246 = vmatpush1.bf16.xpose.msra.mxu0 0
    %2247 = vmatprep.subr.bf16.mxu0 0
    %2248 = vmatpush1.bf16.xpose.msra.mxu0 %v2231
    %2249 = vmatprep.subr.bf16.mxu0 0
    %2250 = vmatpush2.bf16.xpose.msra.mxu0 0
    %2251 = vmatprep.subr.bf16.mxu0 0
    %2252 = vmatpush2.bf16.xpose.msra.mxu0 0
    %2253 = vmatprep.subr.bf16.mxu0 0
    %2254 = vmatpush2.bf16.xpose.msra.mxu0 0
    %2255 = vmatprep.subr.bf16.mxu0 0
    %2256 = vmatpush2.bf16.xpose.msra.mxu0 0
    %2257 = vmatprep.subr.bf16.mxu0 0
    %2258 = vmatpush2.bf16.xpose.msra.mxu0 0
    %2259 = vmatprep.subr.bf16.mxu0 0
    %2260 = vmatpush2.bf16.xpose.msra.mxu0 0
    %2261 = vmatprep.subr.bf16.mxu0 0
    %2262 = vmatpush2.bf16.xpose.msra.mxu0 0
    %2263 = vmatprep.subr.bf16.mxu0 0
    %2264 = vmatpush2.bf16.xpose.msra.mxu0 0
    %2265 = vmatprep.mubr.bf16.mxu0 0
    %2266 = vmatmul.mubr.bf16.gmra.mxu0 %v2228
    %v2267 = vpop.f32.mrf.mxu0
    %v2268 = vadd.f32 %v2172, %v2267
    %v2269 = vpop.f32.mrf.mxu0
    %v2270 = vpop.f32.mrf.mxu0
    %v2271 = vpop.f32.mrf.mxu0
    %2272 = vdwg.mxu0
    %2273 = vrot.lane.b32.xlu0 %v243, 112
    %v2274 = vpop.permute.xlu0 %2273
    %2275 = vrot.lane.b32.xlu0 %v243, 80
    %v2276 = vpop.permute.xlu0 %2275
    %v2278 = vsel %vm261, %v2274, 0
    %v2281 = vsel %vm261, %v2276, 0
    %2283 = vmatprep.subr.bf16.mxu0 0
    %2284 = vmatpush1.bf16.xpose.msra.mxu0 0
    %2285 = vmatprep.subr.bf16.mxu0 0
    %2286 = vmatpush1.bf16.xpose.msra.mxu0 0
    %2287 = vmatprep.subr.bf16.mxu0 0
    %2288 = vmatpush1.bf16.xpose.msra.mxu0 0
    %2289 = vmatprep.subr.bf16.mxu0 0
    %2290 = vmatpush1.bf16.xpose.msra.mxu0 0
    %2291 = vmatprep.subr.bf16.mxu0 0
    %2292 = vmatpush1.bf16.xpose.msra.mxu0 0
    %2293 = vmatprep.subr.bf16.mxu0 0
    %2294 = vmatpush1.bf16.xpose.msra.mxu0 0
    %2295 = vmatprep.subr.bf16.mxu0 0
    %2296 = vmatpush1.bf16.xpose.msra.mxu0 0
    %2297 = vmatprep.subr.bf16.mxu0 0
    %2298 = vmatpush1.bf16.xpose.msra.mxu0 %v2281
    %2299 = vmatprep.subr.bf16.mxu0 0
    %2300 = vmatpush2.bf16.xpose.msra.mxu0 0
    %2301 = vmatprep.subr.bf16.mxu0 0
    %2302 = vmatpush2.bf16.xpose.msra.mxu0 0
    %2303 = vmatprep.subr.bf16.mxu0 0
    %2304 = vmatpush2.bf16.xpose.msra.mxu0 0
    %2305 = vmatprep.subr.bf16.mxu0 0
    %2306 = vmatpush2.bf16.xpose.msra.mxu0 0
    %2307 = vmatprep.subr.bf16.mxu0 0
    %2308 = vmatpush2.bf16.xpose.msra.mxu0 0
    %2309 = vmatprep.subr.bf16.mxu0 0
    %2310 = vmatpush2.bf16.xpose.msra.mxu0 0
    %2311 = vmatprep.subr.bf16.mxu0 0
    %2312 = vmatpush2.bf16.xpose.msra.mxu0 0
    %2313 = vmatprep.subr.bf16.mxu0 0
    %2314 = vmatpush2.bf16.xpose.msra.mxu0 0
    %2315 = vmatprep.mubr.bf16.mxu0 0
    %2316 = vmatmul.mubr.bf16.gmra.mxu0 %v2278
    %v2317 = vpop.f32.mrf.mxu0
    %v2318 = vadd.f32 %v2172, %v2317
    %v2319 = vpop.f32.mrf.mxu0
    %v2320 = vpop.f32.mrf.mxu0
    %v2321 = vpop.f32.mrf.mxu0
    %2322 = vdwg.mxu0
    %2323 = vrot.lane.b32.xlu0 %v244, 112
    %v2324 = vpop.permute.xlu0 %2323
    %2325 = vrot.lane.b32.xlu0 %v244, 80
    %v2326 = vpop.permute.xlu0 %2325
    %v2328 = vsel %vm261, %v2324, 0
    %v2331 = vsel %vm261, %v2326, 0
    %2333 = vmatprep.subr.bf16.mxu0 0
    %2334 = vmatpush1.bf16.xpose.msra.mxu0 0
    %2335 = vmatprep.subr.bf16.mxu0 0
    %2336 = vmatpush1.bf16.xpose.msra.mxu0 0
    %2337 = vmatprep.subr.bf16.mxu0 0
    %2338 = vmatpush1.bf16.xpose.msra.mxu0 0
    %2339 = vmatprep.subr.bf16.mxu0 0
    %2340 = vmatpush1.bf16.xpose.msra.mxu0 0
    %2341 = vmatprep.subr.bf16.mxu0 0
    %2342 = vmatpush1.bf16.xpose.msra.mxu0 0
    %2343 = vmatprep.subr.bf16.mxu0 0
    %2344 = vmatpush1.bf16.xpose.msra.mxu0 0
    %2345 = vmatprep.subr.bf16.mxu0 0
    %2346 = vmatpush1.bf16.xpose.msra.mxu0 0
    %2347 = vmatprep.subr.bf16.mxu0 0
    %2348 = vmatpush1.bf16.xpose.msra.mxu0 %v2331
    %2349 = vmatprep.subr.bf16.mxu0 0
    %2350 = vmatpush2.bf16.xpose.msra.mxu0 0
    %2351 = vmatprep.subr.bf16.mxu0 0
    %2352 = vmatpush2.bf16.xpose.msra.mxu0 0
    %2353 = vmatprep.subr.bf16.mxu0 0
    %2354 = vmatpush2.bf16.xpose.msra.mxu0 0
    %2355 = vmatprep.subr.bf16.mxu0 0
    %2356 = vmatpush2.bf16.xpose.msra.mxu0 0
    %2357 = vmatprep.subr.bf16.mxu0 0
    %2358 = vmatpush2.bf16.xpose.msra.mxu0 0
    %2359 = vmatprep.subr.bf16.mxu0 0
    %2360 = vmatpush2.bf16.xpose.msra.mxu0 0
    %2361 = vmatprep.subr.bf16.mxu0 0
    %2362 = vmatpush2.bf16.xpose.msra.mxu0 0
    %2363 = vmatprep.subr.bf16.mxu0 0
    %2364 = vmatpush2.bf16.xpose.msra.mxu0 0
    %2365 = vmatprep.mubr.bf16.mxu0 0
    %2366 = vmatmul.mubr.bf16.gmra.mxu0 %v2328
    %v2367 = vpop.f32.mrf.mxu0
    %v2368 = vadd.f32 %v2172, %v2367
    %v2369 = vpop.f32.mrf.mxu0
    %v2370 = vpop.f32.mrf.mxu0
    %v2371 = vpop.f32.mrf.mxu0
    %2372 = vdwg.mxu0
    %2373 = vrot.lane.b32.xlu0 %v245, 112
    %v2374 = vpop.permute.xlu0 %2373
    %2375 = vrot.lane.b32.xlu0 %v245, 80
    %v2376 = vpop.permute.xlu0 %2375
    %v2378 = vsel %vm261, %v2374, 0
    %v2381 = vsel %vm261, %v2376, 0
    %2383 = vmatprep.subr.bf16.mxu0 0
    %2384 = vmatpush1.bf16.xpose.msra.mxu0 0
    %2385 = vmatprep.subr.bf16.mxu0 0
    %2386 = vmatpush1.bf16.xpose.msra.mxu0 0
    %2387 = vmatprep.subr.bf16.mxu0 0
    %2388 = vmatpush1.bf16.xpose.msra.mxu0 0
    %2389 = vmatprep.subr.bf16.mxu0 0
    %2390 = vmatpush1.bf16.xpose.msra.mxu0 0
    %2391 = vmatprep.subr.bf16.mxu0 0
    %2392 = vmatpush1.bf16.xpose.msra.mxu0 0
    %2393 = vmatprep.subr.bf16.mxu0 0
    %2394 = vmatpush1.bf16.xpose.msra.mxu0 0
    %2395 = vmatprep.subr.bf16.mxu0 0
    %2396 = vmatpush1.bf16.xpose.msra.mxu0 0
    %2397 = vmatprep.subr.bf16.mxu0 0
    %2398 = vmatpush1.bf16.xpose.msra.mxu0 %v2381
    %2399 = vmatprep.subr.bf16.mxu0 0
    %2400 = vmatpush2.bf16.xpose.msra.mxu0 0
    %2401 = vmatprep.subr.bf16.mxu0 0
    %2402 = vmatpush2.bf16.xpose.msra.mxu0 0
    %2403 = vmatprep.subr.bf16.mxu0 0
    %2404 = vmatpush2.bf16.xpose.msra.mxu0 0
    %2405 = vmatprep.subr.bf16.mxu0 0
    %2406 = vmatpush2.bf16.xpose.msra.mxu0 0
    %2407 = vmatprep.subr.bf16.mxu0 0
    %2408 = vmatpush2.bf16.xpose.msra.mxu0 0
    %2409 = vmatprep.subr.bf16.mxu0 0
    %2410 = vmatpush2.bf16.xpose.msra.mxu0 0
    %2411 = vmatprep.subr.bf16.mxu0 0
    %2412 = vmatpush2.bf16.xpose.msra.mxu0 0
    %2413 = vmatprep.subr.bf16.mxu0 0
    %2414 = vmatpush2.bf16.xpose.msra.mxu0 0
    %2415 = vmatprep.mubr.bf16.mxu0 0
    %2416 = vmatmul.mubr.bf16.gmra.mxu0 %v2378
    %v2417 = vpop.f32.mrf.mxu0
    %v2418 = vadd.f32 %v2172, %v2417
    %v2419 = vpop.f32.mrf.mxu0
    %v2420 = vpop.f32.mrf.mxu0
    %v2421 = vpop.f32.mrf.mxu0
    %2422 = vdwg.mxu0
    %2423 = vrot.lane.b32.xlu0 %v246, 112
    %v2424 = vpop.permute.xlu0 %2423
    %2425 = vrot.lane.b32.xlu0 %v246, 80
    %v2426 = vpop.permute.xlu0 %2425
    %v2428 = vsel %vm261, %v2424, 0
    %v2431 = vsel %vm261, %v2426, 0
    %2433 = vmatprep.subr.bf16.mxu0 0
    %2434 = vmatpush1.bf16.xpose.msra.mxu0 0
    %2435 = vmatprep.subr.bf16.mxu0 0
    %2436 = vmatpush1.bf16.xpose.msra.mxu0 0
    %2437 = vmatprep.subr.bf16.mxu0 0
    %2438 = vmatpush1.bf16.xpose.msra.mxu0 0
    %2439 = vmatprep.subr.bf16.mxu0 0
    %2440 = vmatpush1.bf16.xpose.msra.mxu0 0
    %2441 = vmatprep.subr.bf16.mxu0 0
    %2442 = vmatpush1.bf16.xpose.msra.mxu0 0
    %2443 = vmatprep.subr.bf16.mxu0 0
    %2444 = vmatpush1.bf16.xpose.msra.mxu0 0
    %2445 = vmatprep.subr.bf16.mxu0 0
    %2446 = vmatpush1.bf16.xpose.msra.mxu0 0
    %2447 = vmatprep.subr.bf16.mxu0 0
    %2448 = vmatpush1.bf16.xpose.msra.mxu0 %v2431
    %2449 = vmatprep.subr.bf16.mxu0 0
    %2450 = vmatpush2.bf16.xpose.msra.mxu0 0
    %2451 = vmatprep.subr.bf16.mxu0 0
    %2452 = vmatpush2.bf16.xpose.msra.mxu0 0
    %2453 = vmatprep.subr.bf16.mxu0 0
    %2454 = vmatpush2.bf16.xpose.msra.mxu0 0
    %2455 = vmatprep.subr.bf16.mxu0 0
    %2456 = vmatpush2.bf16.xpose.msra.mxu0 0
    %2457 = vmatprep.subr.bf16.mxu0 0
    %2458 = vmatpush2.bf16.xpose.msra.mxu0 0
    %2459 = vmatprep.subr.bf16.mxu0 0
    %2460 = vmatpush2.bf16.xpose.msra.mxu0 0
    %2461 = vmatprep.subr.bf16.mxu0 0
    %2462 = vmatpush2.bf16.xpose.msra.mxu0 0
    %2463 = vmatprep.subr.bf16.mxu0 0
    %2464 = vmatpush2.bf16.xpose.msra.mxu0 0
    %2465 = vmatprep.mubr.bf16.mxu0 0
    %2466 = vmatmul.mubr.bf16.gmra.mxu0 %v2428
    %v2467 = vpop.f32.mrf.mxu0
    %v2468 = vadd.f32 %v2172, %v2467
    %v2469 = vpop.f32.mrf.mxu0
    %v2470 = vpop.f32.mrf.mxu0
    %v2471 = vpop.f32.mrf.mxu0
    %2472 = vdwg.mxu0
    %2473 = vrot.lane.b32.xlu0 %v247, 112
    %v2474 = vpop.permute.xlu0 %2473
    %2475 = vrot.lane.b32.xlu0 %v247, 80
    %v2476 = vpop.permute.xlu0 %2475
    %v2478 = vsel %vm261, %v2474, 0
    %v2481 = vsel %vm261, %v2476, 0
    %2483 = vmatprep.subr.bf16.mxu0 0
    %2484 = vmatpush1.bf16.xpose.msra.mxu0 0
    %2485 = vmatprep.subr.bf16.mxu0 0
    %2486 = vmatpush1.bf16.xpose.msra.mxu0 0
    %2487 = vmatprep.subr.bf16.mxu0 0
    %2488 = vmatpush1.bf16.xpose.msra.mxu0 0
    %2489 = vmatprep.subr.bf16.mxu0 0
    %2490 = vmatpush1.bf16.xpose.msra.mxu0 0
    %2491 = vmatprep.subr.bf16.mxu0 0
    %2492 = vmatpush1.bf16.xpose.msra.mxu0 0
    %2493 = vmatprep.subr.bf16.mxu0 0
    %2494 = vmatpush1.bf16.xpose.msra.mxu0 0
    %2495 = vmatprep.subr.bf16.mxu0 0
    %2496 = vmatpush1.bf16.xpose.msra.mxu0 0
    %2497 = vmatprep.subr.bf16.mxu0 0
    %2498 = vmatpush1.bf16.xpose.msra.mxu0 %v2481
    %2499 = vmatprep.subr.bf16.mxu0 0
    %2500 = vmatpush2.bf16.xpose.msra.mxu0 0
    %2501 = vmatprep.subr.bf16.mxu0 0
    %2502 = vmatpush2.bf16.xpose.msra.mxu0 0
    %2503 = vmatprep.subr.bf16.mxu0 0
    %2504 = vmatpush2.bf16.xpose.msra.mxu0 0
    %2505 = vmatprep.subr.bf16.mxu0 0
    %2506 = vmatpush2.bf16.xpose.msra.mxu0 0
    %2507 = vmatprep.subr.bf16.mxu0 0
    %2508 = vmatpush2.bf16.xpose.msra.mxu0 0
    %2509 = vmatprep.subr.bf16.mxu0 0
    %2510 = vmatpush2.bf16.xpose.msra.mxu0 0
    %2511 = vmatprep.subr.bf16.mxu0 0
    %2512 = vmatpush2.bf16.xpose.msra.mxu0 0
    %2513 = vmatprep.subr.bf16.mxu0 0
    %2514 = vmatpush2.bf16.xpose.msra.mxu0 0
    %2515 = vmatprep.mubr.bf16.mxu0 0
    %2516 = vmatmul.mubr.bf16.gmra.mxu0 %v2478
    %v2517 = vpop.f32.mrf.mxu0
    %v2518 = vadd.f32 %v2172, %v2517
    %v2519 = vpop.f32.mrf.mxu0
    %v2520 = vpop.f32.mrf.mxu0
    %v2521 = vpop.f32.mrf.mxu0
    %2522 = vdwg.mxu0
    %2523 = vrot.lane.b32.xlu0 %v248, 112
    %v2524 = vpop.permute.xlu0 %2523
    %2525 = vrot.lane.b32.xlu0 %v248, 80
    %v2526 = vpop.permute.xlu0 %2525
    %v2528 = vsel %vm261, %v2524, 0
    %v2531 = vsel %vm261, %v2526, 0
    %2533 = vmatprep.subr.bf16.mxu0 0
    %2534 = vmatpush1.bf16.xpose.msra.mxu0 0
    %2535 = vmatprep.subr.bf16.mxu0 0
    %2536 = vmatpush1.bf16.xpose.msra.mxu0 0
    %2537 = vmatprep.subr.bf16.mxu0 0
    %2538 = vmatpush1.bf16.xpose.msra.mxu0 0
    %2539 = vmatprep.subr.bf16.mxu0 0
    %2540 = vmatpush1.bf16.xpose.msra.mxu0 0
    %2541 = vmatprep.subr.bf16.mxu0 0
    %2542 = vmatpush1.bf16.xpose.msra.mxu0 0
    %2543 = vmatprep.subr.bf16.mxu0 0
    %2544 = vmatpush1.bf16.xpose.msra.mxu0 0
    %2545 = vmatprep.subr.bf16.mxu0 0
    %2546 = vmatpush1.bf16.xpose.msra.mxu0 0
    %2547 = vmatprep.subr.bf16.mxu0 0
    %2548 = vmatpush1.bf16.xpose.msra.mxu0 %v2531
    %2549 = vmatprep.subr.bf16.mxu0 0
    %2550 = vmatpush2.bf16.xpose.msra.mxu0 0
    %2551 = vmatprep.subr.bf16.mxu0 0
    %2552 = vmatpush2.bf16.xpose.msra.mxu0 0
    %2553 = vmatprep.subr.bf16.mxu0 0
    %2554 = vmatpush2.bf16.xpose.msra.mxu0 0
    %2555 = vmatprep.subr.bf16.mxu0 0
    %2556 = vmatpush2.bf16.xpose.msra.mxu0 0
    %2557 = vmatprep.subr.bf16.mxu0 0
    %2558 = vmatpush2.bf16.xpose.msra.mxu0 0
    %2559 = vmatprep.subr.bf16.mxu0 0
    %2560 = vmatpush2.bf16.xpose.msra.mxu0 0
    %2561 = vmatprep.subr.bf16.mxu0 0
    %2562 = vmatpush2.bf16.xpose.msra.mxu0 0
    %2563 = vmatprep.subr.bf16.mxu0 0
    %2564 = vmatpush2.bf16.xpose.msra.mxu0 0
    %2565 = vmatprep.mubr.bf16.mxu0 0
    %2566 = vmatmul.mubr.bf16.gmra.mxu0 %v2528
    %v2567 = vpop.f32.mrf.mxu0
    %v2568 = vadd.f32 %v2172, %v2567
    %v2569 = vpop.f32.mrf.mxu0
    %v2570 = vpop.f32.mrf.mxu0
    %v2571 = vpop.f32.mrf.mxu0
    %2572 = vdwg.mxu0
    %v2573 = vadd.f32 %v2218, %v655
    %v2574 = vadd.f32 %v2268, %v659
    %v2575 = vadd.f32 %v2318, %v663
    %v2576 = vadd.f32 %v2368, %v667
    %v2577 = vadd.f32 %v2418, %v671
    %v2578 = vadd.f32 %v2468, %v675
    %v2579 = vadd.f32 %v2518, %v679
    %v2580 = vadd.f32 %v2568, %v683
    %v2581 = vsel %vm261, %v2573, -inf
    %2582 = vmax.xlane.f32.xlu0 %v2581
    %v2583 = vpop.xlane.xlu0 %2582
    %v2584 = vsel %vm261, %v2574, -inf
    %2585 = vmax.xlane.f32.xlu0 %v2584
    %v2586 = vpop.xlane.xlu0 %2585
    %v2587 = vsel %vm261, %v2575, -inf
    %2588 = vmax.xlane.f32.xlu0 %v2587
    %v2589 = vpop.xlane.xlu0 %2588
    %v2590 = vsel %vm261, %v2576, -inf
    %2591 = vmax.xlane.f32.xlu0 %v2590
    %v2592 = vpop.xlane.xlu0 %2591
    %v2593 = vsel %vm261, %v2577, -inf
    %2594 = vmax.xlane.f32.xlu0 %v2593
    %v2595 = vpop.xlane.xlu0 %2594
    %v2596 = vsel %vm261, %v2578, -inf
    %2597 = vmax.xlane.f32.xlu0 %v2596
    %v2598 = vpop.xlane.xlu0 %2597
    %v2599 = vsel %vm261, %v2579, -inf
    %2600 = vmax.xlane.f32.xlu0 %v2599
    %v2601 = vpop.xlane.xlu0 %2600
    %v2602 = vsel %vm261, %v2580, -inf
    %2603 = vmax.xlane.f32.xlu0 %v2602
    %v2604 = vpop.xlane.xlu0 %2603
    %v2605 = vsub.f32 %v2573, %v2583
    %v2606 = vsub.f32 %v2574, %v2586
    %v2607 = vsub.f32 %v2575, %v2589
    %v2608 = vsub.f32 %v2576, %v2592
    %v2609 = vsub.f32 %v2577, %v2595
    %v2610 = vsub.f32 %v2578, %v2598
    %v2611 = vsub.f32 %v2579, %v2601
    %v2612 = vsub.f32 %v2580, %v2604
    %v2613 = vmul.f32 %v2605, 1.442695
    %v2614 = vpow.pop %v2613
    %v2615 = vmul.f32 %v2606, 1.442695
    %v2616 = vpow.pop %v2615
    %v2617 = vmul.f32 %v2607, 1.442695
    %v2618 = vpow.pop %v2617
    %v2619 = vmul.f32 %v2608, 1.442695
    %v2620 = vpow.pop %v2619
    %v2621 = vmul.f32 %v2609, 1.442695
    %v2622 = vpow.pop %v2621
    %v2623 = vmul.f32 %v2610, 1.442695
    %v2624 = vpow.pop %v2623
    %v2625 = vmul.f32 %v2611, 1.442695
    %v2626 = vpow.pop %v2625
    %v2627 = vmul.f32 %v2612, 1.442695
    %v2628 = vpow.pop %v2627
    %v2629 = vsel %vm261, %v2614, 0.0
    %2630 = vadd.xlane.f32.xlu0 %v2629
    %v2631 = vpop.xlane.xlu0 %2630
    %v2632 = vsel %vm261, %v2616, 0.0
    %2633 = vadd.xlane.f32.xlu0 %v2632
    %v2634 = vpop.xlane.xlu0 %2633
    %v2635 = vsel %vm261, %v2618, 0.0
    %2636 = vadd.xlane.f32.xlu0 %v2635
    %v2637 = vpop.xlane.xlu0 %2636
    %v2638 = vsel %vm261, %v2620, 0.0
    %2639 = vadd.xlane.f32.xlu0 %v2638
    %v2640 = vpop.xlane.xlu0 %2639
    %v2641 = vsel %vm261, %v2622, 0.0
    %2642 = vadd.xlane.f32.xlu0 %v2641
    %v2643 = vpop.xlane.xlu0 %2642
    %v2644 = vsel %vm261, %v2624, 0.0
    %2645 = vadd.xlane.f32.xlu0 %v2644
    %v2646 = vpop.xlane.xlu0 %2645
    %v2647 = vsel %vm261, %v2626, 0.0
    %2648 = vadd.xlane.f32.xlu0 %v2647
    %v2649 = vpop.xlane.xlu0 %2648
    %v2650 = vsel %vm261, %v2628, 0.0
    %2651 = vadd.xlane.f32.xlu0 %v2650
    %v2652 = vpop.xlane.xlu0 %2651
    %v2653 = vrcp.pop %v2631
    %v2654 = vrcp.pop %v2634
    %v2655 = vrcp.pop %v2637
    %v2656 = vrcp.pop %v2640
    %v2657 = vrcp.pop %v2643
    %v2658 = vrcp.pop %v2646
    %v2659 = vrcp.pop %v2649
    %v2660 = vrcp.pop %v2652
    %v2661 = vmul.f32 %v2614, %v2653
    %v2662 = vmul.f32 %v2616, %v2654
    %v2663 = vmul.f32 %v2618, %v2655
    %v2664 = vmul.f32 %v2620, %v2656
    %v2665 = vmul.f32 %v2622, %v2657
    %v2666 = vmul.f32 %v2624, %v2658
    %v2667 = vmul.f32 %v2626, %v2659
    %v2668 = vmul.f32 %v2628, %v2660
    %v2669 = vpack.c.bf16 %v2661, %v2661
    %v2670 = vpack.c.bf16 %v2662, %v2662
    %v2671 = vpack.c.bf16 %v2663, %v2663
    %v2672 = vpack.c.bf16 %v2664, %v2664
    %v2673 = vpack.c.bf16 %v2665, %v2665
    %v2674 = vpack.c.bf16 %v2666, %v2666
    %v2675 = vpack.c.bf16 %v2667, %v2667
    %v2676 = vpack.c.bf16 %v2668, %v2668
    %2677 = vrot.lane.b32.xlu0 %v241, 48
    %v2678 = vpop.permute.xlu0 %2677
    %v2680 = vsel %vm261, %v2669, 0
    %v2683 = vsel %vm801, %v2678, 0
    %2685 = vmatprep.subr.bf16.mxu0 0
    %2686 = vmatpush1.bf16.msra.mxu0 0
    %2687 = vmatprep.subr.bf16.mxu0 0
    %2688 = vmatpush1.bf16.msra.mxu0 0
    %2689 = vmatprep.subr.bf16.mxu0 0
    %2690 = vmatpush1.bf16.msra.mxu0 0
    %2691 = vmatprep.subr.bf16.mxu0 0
    %2692 = vmatpush1.bf16.msra.mxu0 0
    %2693 = vmatprep.subr.bf16.mxu0 0
    %2694 = vmatpush1.bf16.msra.mxu0 0
    %2695 = vmatprep.subr.bf16.mxu0 0
    %2696 = vmatpush1.bf16.msra.mxu0 0
    %2697 = vmatprep.subr.bf16.mxu0 0
    %2698 = vmatpush1.bf16.msra.mxu0 0
    %2699 = vmatprep.subr.bf16.mxu0 0
    %2700 = vmatpush1.bf16.msra.mxu0 %v2683
    %2701 = vmatprep.subr.bf16.mxu0 0
    %2702 = vmatpush2.bf16.msra.mxu0 0
    %2703 = vmatprep.subr.bf16.mxu0 0
    %2704 = vmatpush2.bf16.msra.mxu0 0
    %2705 = vmatprep.subr.bf16.mxu0 0
    %2706 = vmatpush2.bf16.msra.mxu0 0
    %2707 = vmatprep.subr.bf16.mxu0 0
    %2708 = vmatpush2.bf16.msra.mxu0 0
    %2709 = vmatprep.subr.bf16.mxu0 0
    %2710 = vmatpush2.bf16.msra.mxu0 0
    %2711 = vmatprep.subr.bf16.mxu0 0
    %2712 = vmatpush2.bf16.msra.mxu0 0
    %2713 = vmatprep.subr.bf16.mxu0 0
    %2714 = vmatpush2.bf16.msra.mxu0 0
    %2715 = vmatprep.subr.bf16.mxu0 0
    %2716 = vmatpush2.bf16.msra.mxu0 0
    %2717 = vmatprep.mubr.bf16.mxu0 0
    %2718 = vmatmul.mubr.bf16.gmra.mxu0 %v2680
    %v2719 = vpop.f32.mrf.mxu0
    %v2720 = vadd.f32 0.0, %v2719
    %v2721 = vpop.f32.mrf.mxu0
    %v2722 = vpop.f32.mrf.mxu0
    %v2723 = vpop.f32.mrf.mxu0
    %2724 = vdwg.mxu0
    %2725 = vrot.lane.b32.xlu0 %v242, 48
    %v2726 = vpop.permute.xlu0 %2725
    %v2728 = vsel %vm261, %v2670, 0
    %v2731 = vsel %vm801, %v2726, 0
    %2733 = vmatprep.subr.bf16.mxu0 0
    %2734 = vmatpush1.bf16.msra.mxu0 0
    %2735 = vmatprep.subr.bf16.mxu0 0
    %2736 = vmatpush1.bf16.msra.mxu0 0
    %2737 = vmatprep.subr.bf16.mxu0 0
    %2738 = vmatpush1.bf16.msra.mxu0 0
    %2739 = vmatprep.subr.bf16.mxu0 0
    %2740 = vmatpush1.bf16.msra.mxu0 0
    %2741 = vmatprep.subr.bf16.mxu0 0
    %2742 = vmatpush1.bf16.msra.mxu0 0
    %2743 = vmatprep.subr.bf16.mxu0 0
    %2744 = vmatpush1.bf16.msra.mxu0 0
    %2745 = vmatprep.subr.bf16.mxu0 0
    %2746 = vmatpush1.bf16.msra.mxu0 0
    %2747 = vmatprep.subr.bf16.mxu0 0
    %2748 = vmatpush1.bf16.msra.mxu0 %v2731
    %2749 = vmatprep.subr.bf16.mxu0 0
    %2750 = vmatpush2.bf16.msra.mxu0 0
    %2751 = vmatprep.subr.bf16.mxu0 0
    %2752 = vmatpush2.bf16.msra.mxu0 0
    %2753 = vmatprep.subr.bf16.mxu0 0
    %2754 = vmatpush2.bf16.msra.mxu0 0
    %2755 = vmatprep.subr.bf16.mxu0 0
    %2756 = vmatpush2.bf16.msra.mxu0 0
    %2757 = vmatprep.subr.bf16.mxu0 0
    %2758 = vmatpush2.bf16.msra.mxu0 0
    %2759 = vmatprep.subr.bf16.mxu0 0
    %2760 = vmatpush2.bf16.msra.mxu0 0
    %2761 = vmatprep.subr.bf16.mxu0 0
    %2762 = vmatpush2.bf16.msra.mxu0 0
    %2763 = vmatprep.subr.bf16.mxu0 0
    %2764 = vmatpush2.bf16.msra.mxu0 0
    %2765 = vmatprep.mubr.bf16.mxu0 0
    %2766 = vmatmul.mubr.bf16.gmra.mxu0 %v2728
    %v2767 = vpop.f32.mrf.mxu0
    %v2768 = vadd.f32 0.0, %v2767
    %v2769 = vpop.f32.mrf.mxu0
    %v2770 = vpop.f32.mrf.mxu0
    %v2771 = vpop.f32.mrf.mxu0
    %2772 = vdwg.mxu0
    %2773 = vrot.lane.b32.xlu0 %v243, 48
    %v2774 = vpop.permute.xlu0 %2773
    %v2776 = vsel %vm261, %v2671, 0
    %v2779 = vsel %vm801, %v2774, 0
    %2781 = vmatprep.subr.bf16.mxu0 0
    %2782 = vmatpush1.bf16.msra.mxu0 0
    %2783 = vmatprep.subr.bf16.mxu0 0
    %2784 = vmatpush1.bf16.msra.mxu0 0
    %2785 = vmatprep.subr.bf16.mxu0 0
    %2786 = vmatpush1.bf16.msra.mxu0 0
    %2787 = vmatprep.subr.bf16.mxu0 0
    %2788 = vmatpush1.bf16.msra.mxu0 0
    %2789 = vmatprep.subr.bf16.mxu0 0
    %2790 = vmatpush1.bf16.msra.mxu0 0
    %2791 = vmatprep.subr.bf16.mxu0 0
    %2792 = vmatpush1.bf16.msra.mxu0 0
    %2793 = vmatprep.subr.bf16.mxu0 0
    %2794 = vmatpush1.bf16.msra.mxu0 0
    %2795 = vmatprep.subr.bf16.mxu0 0
    %2796 = vmatpush1.bf16.msra.mxu0 %v2779
    %2797 = vmatprep.subr.bf16.mxu0 0
    %2798 = vmatpush2.bf16.msra.mxu0 0
    %2799 = vmatprep.subr.bf16.mxu0 0
    %2800 = vmatpush2.bf16.msra.mxu0 0
    %2801 = vmatprep.subr.bf16.mxu0 0
    %2802 = vmatpush2.bf16.msra.mxu0 0
    %2803 = vmatprep.subr.bf16.mxu0 0
    %2804 = vmatpush2.bf16.msra.mxu0 0
    %2805 = vmatprep.subr.bf16.mxu0 0
    %2806 = vmatpush2.bf16.msra.mxu0 0
    %2807 = vmatprep.subr.bf16.mxu0 0
    %2808 = vmatpush2.bf16.msra.mxu0 0
    %2809 = vmatprep.subr.bf16.mxu0 0
    %2810 = vmatpush2.bf16.msra.mxu0 0
    %2811 = vmatprep.subr.bf16.mxu0 0
    %2812 = vmatpush2.bf16.msra.mxu0 0
    %2813 = vmatprep.mubr.bf16.mxu0 0
    %2814 = vmatmul.mubr.bf16.gmra.mxu0 %v2776
    %v2815 = vpop.f32.mrf.mxu0
    %v2816 = vadd.f32 0.0, %v2815
    %v2817 = vpop.f32.mrf.mxu0
    %v2818 = vpop.f32.mrf.mxu0
    %v2819 = vpop.f32.mrf.mxu0
    %2820 = vdwg.mxu0
    %2821 = vrot.lane.b32.xlu0 %v244, 48
    %v2822 = vpop.permute.xlu0 %2821
    %v2824 = vsel %vm261, %v2672, 0
    %v2827 = vsel %vm801, %v2822, 0
    %2829 = vmatprep.subr.bf16.mxu0 0
    %2830 = vmatpush1.bf16.msra.mxu0 0
    %2831 = vmatprep.subr.bf16.mxu0 0
    %2832 = vmatpush1.bf16.msra.mxu0 0
    %2833 = vmatprep.subr.bf16.mxu0 0
    %2834 = vmatpush1.bf16.msra.mxu0 0
    %2835 = vmatprep.subr.bf16.mxu0 0
    %2836 = vmatpush1.bf16.msra.mxu0 0
    %2837 = vmatprep.subr.bf16.mxu0 0
    %2838 = vmatpush1.bf16.msra.mxu0 0
    %2839 = vmatprep.subr.bf16.mxu0 0
    %2840 = vmatpush1.bf16.msra.mxu0 0
    %2841 = vmatprep.subr.bf16.mxu0 0
    %2842 = vmatpush1.bf16.msra.mxu0 0
    %2843 = vmatprep.subr.bf16.mxu0 0
    %2844 = vmatpush1.bf16.msra.mxu0 %v2827
    %2845 = vmatprep.subr.bf16.mxu0 0
    %2846 = vmatpush2.bf16.msra.mxu0 0
    %2847 = vmatprep.subr.bf16.mxu0 0
    %2848 = vmatpush2.bf16.msra.mxu0 0
    %2849 = vmatprep.subr.bf16.mxu0 0
    %2850 = vmatpush2.bf16.msra.mxu0 0
    %2851 = vmatprep.subr.bf16.mxu0 0
    %2852 = vmatpush2.bf16.msra.mxu0 0
    %2853 = vmatprep.subr.bf16.mxu0 0
    %2854 = vmatpush2.bf16.msra.mxu0 0
    %2855 = vmatprep.subr.bf16.mxu0 0
    %2856 = vmatpush2.bf16.msra.mxu0 0
    %2857 = vmatprep.subr.bf16.mxu0 0
    %2858 = vmatpush2.bf16.msra.mxu0 0
    %2859 = vmatprep.subr.bf16.mxu0 0
    %2860 = vmatpush2.bf16.msra.mxu0 0
    %2861 = vmatprep.mubr.bf16.mxu0 0
    %2862 = vmatmul.mubr.bf16.gmra.mxu0 %v2824
    %v2863 = vpop.f32.mrf.mxu0
    %v2864 = vadd.f32 0.0, %v2863
    %v2865 = vpop.f32.mrf.mxu0
    %v2866 = vpop.f32.mrf.mxu0
    %v2867 = vpop.f32.mrf.mxu0
    %2868 = vdwg.mxu0
    %2869 = vrot.lane.b32.xlu0 %v245, 48
    %v2870 = vpop.permute.xlu0 %2869
    %v2872 = vsel %vm261, %v2673, 0
    %v2875 = vsel %vm801, %v2870, 0
    %2877 = vmatprep.subr.bf16.mxu0 0
    %2878 = vmatpush1.bf16.msra.mxu0 0
    %2879 = vmatprep.subr.bf16.mxu0 0
    %2880 = vmatpush1.bf16.msra.mxu0 0
    %2881 = vmatprep.subr.bf16.mxu0 0
    %2882 = vmatpush1.bf16.msra.mxu0 0
    %2883 = vmatprep.subr.bf16.mxu0 0
    %2884 = vmatpush1.bf16.msra.mxu0 0
    %2885 = vmatprep.subr.bf16.mxu0 0
    %2886 = vmatpush1.bf16.msra.mxu0 0
    %2887 = vmatprep.subr.bf16.mxu0 0
    %2888 = vmatpush1.bf16.msra.mxu0 0
    %2889 = vmatprep.subr.bf16.mxu0 0
    %2890 = vmatpush1.bf16.msra.mxu0 0
    %2891 = vmatprep.subr.bf16.mxu0 0
    %2892 = vmatpush1.bf16.msra.mxu0 %v2875
    %2893 = vmatprep.subr.bf16.mxu0 0
    %2894 = vmatpush2.bf16.msra.mxu0 0
    %2895 = vmatprep.subr.bf16.mxu0 0
    %2896 = vmatpush2.bf16.msra.mxu0 0
    %2897 = vmatprep.subr.bf16.mxu0 0
    %2898 = vmatpush2.bf16.msra.mxu0 0
    %2899 = vmatprep.subr.bf16.mxu0 0
    %2900 = vmatpush2.bf16.msra.mxu0 0
    %2901 = vmatprep.subr.bf16.mxu0 0
    %2902 = vmatpush2.bf16.msra.mxu0 0
    %2903 = vmatprep.subr.bf16.mxu0 0
    %2904 = vmatpush2.bf16.msra.mxu0 0
    %2905 = vmatprep.subr.bf16.mxu0 0
    %2906 = vmatpush2.bf16.msra.mxu0 0
    %2907 = vmatprep.subr.bf16.mxu0 0
    %2908 = vmatpush2.bf16.msra.mxu0 0
    %2909 = vmatprep.mubr.bf16.mxu0 0
    %2910 = vmatmul.mubr.bf16.gmra.mxu0 %v2872
    %v2911 = vpop.f32.mrf.mxu0
    %v2912 = vadd.f32 0.0, %v2911
    %v2913 = vpop.f32.mrf.mxu0
    %v2914 = vpop.f32.mrf.mxu0
    %v2915 = vpop.f32.mrf.mxu0
    %2916 = vdwg.mxu0
    %2917 = vrot.lane.b32.xlu0 %v246, 48
    %v2918 = vpop.permute.xlu0 %2917
    %v2920 = vsel %vm261, %v2674, 0
    %v2923 = vsel %vm801, %v2918, 0
    %2925 = vmatprep.subr.bf16.mxu0 0
    %2926 = vmatpush1.bf16.msra.mxu0 0
    %2927 = vmatprep.subr.bf16.mxu0 0
    %2928 = vmatpush1.bf16.msra.mxu0 0
    %2929 = vmatprep.subr.bf16.mxu0 0
    %2930 = vmatpush1.bf16.msra.mxu0 0
    %2931 = vmatprep.subr.bf16.mxu0 0
    %2932 = vmatpush1.bf16.msra.mxu0 0
    %2933 = vmatprep.subr.bf16.mxu0 0
    %2934 = vmatpush1.bf16.msra.mxu0 0
    %2935 = vmatprep.subr.bf16.mxu0 0
    %2936 = vmatpush1.bf16.msra.mxu0 0
    %2937 = vmatprep.subr.bf16.mxu0 0
    %2938 = vmatpush1.bf16.msra.mxu0 0
    %2939 = vmatprep.subr.bf16.mxu0 0
    %2940 = vmatpush1.bf16.msra.mxu0 %v2923
    %2941 = vmatprep.subr.bf16.mxu0 0
    %2942 = vmatpush2.bf16.msra.mxu0 0
    %2943 = vmatprep.subr.bf16.mxu0 0
    %2944 = vmatpush2.bf16.msra.mxu0 0
    %2945 = vmatprep.subr.bf16.mxu0 0
    %2946 = vmatpush2.bf16.msra.mxu0 0
    %2947 = vmatprep.subr.bf16.mxu0 0
    %2948 = vmatpush2.bf16.msra.mxu0 0
    %2949 = vmatprep.subr.bf16.mxu0 0
    %2950 = vmatpush2.bf16.msra.mxu0 0
    %2951 = vmatprep.subr.bf16.mxu0 0
    %2952 = vmatpush2.bf16.msra.mxu0 0
    %2953 = vmatprep.subr.bf16.mxu0 0
    %2954 = vmatpush2.bf16.msra.mxu0 0
    %2955 = vmatprep.subr.bf16.mxu0 0
    %2956 = vmatpush2.bf16.msra.mxu0 0
    %2957 = vmatprep.mubr.bf16.mxu0 0
    %2958 = vmatmul.mubr.bf16.gmra.mxu0 %v2920
    %v2959 = vpop.f32.mrf.mxu0
    %v2960 = vadd.f32 0.0, %v2959
    %v2961 = vpop.f32.mrf.mxu0
    %v2962 = vpop.f32.mrf.mxu0
    %v2963 = vpop.f32.mrf.mxu0
    %2964 = vdwg.mxu0
    %2965 = vrot.lane.b32.xlu0 %v247, 48
    %v2966 = vpop.permute.xlu0 %2965
    %v2968 = vsel %vm261, %v2675, 0
    %v2971 = vsel %vm801, %v2966, 0
    %2973 = vmatprep.subr.bf16.mxu0 0
    %2974 = vmatpush1.bf16.msra.mxu0 0
    %2975 = vmatprep.subr.bf16.mxu0 0
    %2976 = vmatpush1.bf16.msra.mxu0 0
    %2977 = vmatprep.subr.bf16.mxu0 0
    %2978 = vmatpush1.bf16.msra.mxu0 0
    %2979 = vmatprep.subr.bf16.mxu0 0
    %2980 = vmatpush1.bf16.msra.mxu0 0
    %2981 = vmatprep.subr.bf16.mxu0 0
    %2982 = vmatpush1.bf16.msra.mxu0 0
    %2983 = vmatprep.subr.bf16.mxu0 0
    %2984 = vmatpush1.bf16.msra.mxu0 0
    %2985 = vmatprep.subr.bf16.mxu0 0
    %2986 = vmatpush1.bf16.msra.mxu0 0
    %2987 = vmatprep.subr.bf16.mxu0 0
    %2988 = vmatpush1.bf16.msra.mxu0 %v2971
    %2989 = vmatprep.subr.bf16.mxu0 0
    %2990 = vmatpush2.bf16.msra.mxu0 0
    %2991 = vmatprep.subr.bf16.mxu0 0
    %2992 = vmatpush2.bf16.msra.mxu0 0
    %2993 = vmatprep.subr.bf16.mxu0 0
    %2994 = vmatpush2.bf16.msra.mxu0 0
    %2995 = vmatprep.subr.bf16.mxu0 0
    %2996 = vmatpush2.bf16.msra.mxu0 0
    %2997 = vmatprep.subr.bf16.mxu0 0
    %2998 = vmatpush2.bf16.msra.mxu0 0
    %2999 = vmatprep.subr.bf16.mxu0 0
    %3000 = vmatpush2.bf16.msra.mxu0 0
    %3001 = vmatprep.subr.bf16.mxu0 0
    %3002 = vmatpush2.bf16.msra.mxu0 0
    %3003 = vmatprep.subr.bf16.mxu0 0
    %3004 = vmatpush2.bf16.msra.mxu0 0
    %3005 = vmatprep.mubr.bf16.mxu0 0
    %3006 = vmatmul.mubr.bf16.gmra.mxu0 %v2968
    %v3007 = vpop.f32.mrf.mxu0
    %v3008 = vadd.f32 0.0, %v3007
    %v3009 = vpop.f32.mrf.mxu0
    %v3010 = vpop.f32.mrf.mxu0
    %v3011 = vpop.f32.mrf.mxu0
    %3012 = vdwg.mxu0
    %3013 = vrot.lane.b32.xlu0 %v248, 48
    %v3014 = vpop.permute.xlu0 %3013
    %v3016 = vsel %vm261, %v2676, 0
    %v3019 = vsel %vm801, %v3014, 0
    %3021 = vmatprep.subr.bf16.mxu0 0
    %3022 = vmatpush1.bf16.msra.mxu0 0
    %3023 = vmatprep.subr.bf16.mxu0 0
    %3024 = vmatpush1.bf16.msra.mxu0 0
    %3025 = vmatprep.subr.bf16.mxu0 0
    %3026 = vmatpush1.bf16.msra.mxu0 0
    %3027 = vmatprep.subr.bf16.mxu0 0
    %3028 = vmatpush1.bf16.msra.mxu0 0
    %3029 = vmatprep.subr.bf16.mxu0 0
    %3030 = vmatpush1.bf16.msra.mxu0 0
    %3031 = vmatprep.subr.bf16.mxu0 0
    %3032 = vmatpush1.bf16.msra.mxu0 0
    %3033 = vmatprep.subr.bf16.mxu0 0
    %3034 = vmatpush1.bf16.msra.mxu0 0
    %3035 = vmatprep.subr.bf16.mxu0 0
    %3036 = vmatpush1.bf16.msra.mxu0 %v3019
    %3037 = vmatprep.subr.bf16.mxu0 0
    %3038 = vmatpush2.bf16.msra.mxu0 0
    %3039 = vmatprep.subr.bf16.mxu0 0
    %3040 = vmatpush2.bf16.msra.mxu0 0
    %3041 = vmatprep.subr.bf16.mxu0 0
    %3042 = vmatpush2.bf16.msra.mxu0 0
    %3043 = vmatprep.subr.bf16.mxu0 0
    %3044 = vmatpush2.bf16.msra.mxu0 0
    %3045 = vmatprep.subr.bf16.mxu0 0
    %3046 = vmatpush2.bf16.msra.mxu0 0
    %3047 = vmatprep.subr.bf16.mxu0 0
    %3048 = vmatpush2.bf16.msra.mxu0 0
    %3049 = vmatprep.subr.bf16.mxu0 0
    %3050 = vmatpush2.bf16.msra.mxu0 0
    %3051 = vmatprep.subr.bf16.mxu0 0
    %3052 = vmatpush2.bf16.msra.mxu0 0
    %3053 = vmatprep.mubr.bf16.mxu0 0
    %3054 = vmatmul.mubr.bf16.gmra.mxu0 %v3016
    %v3055 = vpop.f32.mrf.mxu0
    %v3056 = vadd.f32 0.0, %v3055
    %v3057 = vpop.f32.mrf.mxu0
    %v3058 = vpop.f32.mrf.mxu0
    %v3059 = vpop.f32.mrf.mxu0
    %3060 = vdwg.mxu0
    %v3061 = vpack.c.bf16 %v2768, %v2720
    %v3062 = vpack.c.bf16 %v2864, %v2816
    %v3063 = vpack.c.bf16 %v2960, %v2912
    %v3064 = vpack.c.bf16 %v3056, %v3008
    %v3069 = vunpack.c.l.b16 %v3061
    %v3070 = vunpack.c.h.b16 %v3061
    %v3071 = vunpack.c.l.b16 %v3062
    %v3072 = vunpack.c.h.b16 %v3062
    %v3073 = vunpack.c.l.b16 %v3063
    %v3074 = vunpack.c.h.b16 %v3063
    %v3075 = vunpack.c.l.b16 %v3064
    %v3076 = vunpack.c.h.b16 %v3064
    %v3077 = vpack.c.b16 %v3069, %v3069
    %v3078 = vpack.c.b16 %v3070, %v3070
    %v3079 = vpack.c.b16 %v3071, %v3071
    %v3080 = vpack.c.b16 %v3072, %v3072
    %v3081 = vpack.c.b16 %v3073, %v3073
    %v3082 = vpack.c.b16 %v3074, %v3074
    %v3083 = vpack.c.b16 %v3075, %v3075
    %v3084 = vpack.c.b16 %v3076, %v3076
    %3085 = vrot.lane.b32.xlu0 %v3077, 16
    %v3086 = vpop.permute.xlu0 %3085
    %3087 = vrot.lane.b32.xlu0 %v3078, 16
    %v3088 = vpop.permute.xlu0 %3087
    %3089 = vrot.lane.b32.xlu0 %v3079, 16
    %v3090 = vpop.permute.xlu0 %3089
    %3091 = vrot.lane.b32.xlu0 %v3080, 16
    %v3092 = vpop.permute.xlu0 %3091
    %3093 = vrot.lane.b32.xlu0 %v3081, 16
    %v3094 = vpop.permute.xlu0 %3093
    %3095 = vrot.lane.b32.xlu0 %v3082, 16
    %v3096 = vpop.permute.xlu0 %3095
    %3097 = vrot.lane.b32.xlu0 %v3083, 16
    %v3098 = vpop.permute.xlu0 %3097
    %3099 = vrot.lane.b32.xlu0 %v3084, 16
    %v3100 = vpop.permute.xlu0 %3099
    %vm3109 = vcmask 191616
    %3110 = vst.msk [vmem:[#allocation2] sm:$0xf] %vm3109, %v3086
    %3111 = vst.msk [vmem:[#allocation2 + $0x4] sm:$0xf] %vm3109, %v3088
    %3112 = vst.msk [vmem:[#allocation2 + $0x8] sm:$0xf] %vm3109, %v3090
    %3113 = vst.msk [vmem:[#allocation2 + $0xc] sm:$0xf] %vm3109, %v3092
    %3114 = vst.msk [vmem:[#allocation2 + $0x10] sm:$0xf] %vm3109, %v3094
    %3115 = vst.msk [vmem:[#allocation2 + $0x14] sm:$0xf] %vm3109, %v3096
    %3116 = vst.msk [vmem:[#allocation2 + $0x18] sm:$0xf] %vm3109, %v3098
    %3117 = vst.msk [vmem:[#allocation2 + $0x1c] sm:$0xf] %vm3109, %v3100
    %s3118 = scalar_lea.vmem [#allocation8], 12
    %v3119 = vld [vmem:[%s3118] sm:$0xf]
    %v3120 = vunpack.c.l.bf16 %v3119
    %3121 = vrot.lane.b32.xlu0 %v241, 104
    %v3122 = vpop.permute.xlu0 %3121
    %3123 = vrot.lane.b32.xlu0 %v241, 72
    %v3124 = vpop.permute.xlu0 %3123
    %v3126 = vsel %vm261, %v3122, 0
    %v3129 = vsel %vm261, %v3124, 0
    %3131 = vmatprep.subr.bf16.mxu0 0
    %3132 = vmatpush1.bf16.xpose.msra.mxu0 0
    %3133 = vmatprep.subr.bf16.mxu0 0
    %3134 = vmatpush1.bf16.xpose.msra.mxu0 0
    %3135 = vmatprep.subr.bf16.mxu0 0
    %3136 = vmatpush1.bf16.xpose.msra.mxu0 0
    %3137 = vmatprep.subr.bf16.mxu0 0
    %3138 = vmatpush1.bf16.xpose.msra.mxu0 0
    %3139 = vmatprep.subr.bf16.mxu0 0
    %3140 = vmatpush1.bf16.xpose.msra.mxu0 0
    %3141 = vmatprep.subr.bf16.mxu0 0
    %3142 = vmatpush1.bf16.xpose.msra.mxu0 0
    %3143 = vmatprep.subr.bf16.mxu0 0
    %3144 = vmatpush1.bf16.xpose.msra.mxu0 0
    %3145 = vmatprep.subr.bf16.mxu0 0
    %3146 = vmatpush1.bf16.xpose.msra.mxu0 %v3129
    %3147 = vmatprep.subr.bf16.mxu0 0
    %3148 = vmatpush2.bf16.xpose.msra.mxu0 0
    %3149 = vmatprep.subr.bf16.mxu0 0
    %3150 = vmatpush2.bf16.xpose.msra.mxu0 0
    %3151 = vmatprep.subr.bf16.mxu0 0
    %3152 = vmatpush2.bf16.xpose.msra.mxu0 0
    %3153 = vmatprep.subr.bf16.mxu0 0
    %3154 = vmatpush2.bf16.xpose.msra.mxu0 0
    %3155 = vmatprep.subr.bf16.mxu0 0
    %3156 = vmatpush2.bf16.xpose.msra.mxu0 0
    %3157 = vmatprep.subr.bf16.mxu0 0
    %3158 = vmatpush2.bf16.xpose.msra.mxu0 0
    %3159 = vmatprep.subr.bf16.mxu0 0
    %3160 = vmatpush2.bf16.xpose.msra.mxu0 0
    %3161 = vmatprep.subr.bf16.mxu0 0
    %3162 = vmatpush2.bf16.xpose.msra.mxu0 0
    %3163 = vmatprep.mubr.bf16.mxu0 0
    %3164 = vmatmul.mubr.bf16.gmra.mxu0 %v3126
    %v3165 = vpop.f32.mrf.mxu0
    %v3166 = vadd.f32 %v3120, %v3165
    %v3167 = vpop.f32.mrf.mxu0
    %v3168 = vpop.f32.mrf.mxu0
    %v3169 = vpop.f32.mrf.mxu0
    %3170 = vdwg.mxu0
    %3171 = vrot.lane.b32.xlu0 %v242, 104
    %v3172 = vpop.permute.xlu0 %3171
    %3173 = vrot.lane.b32.xlu0 %v242, 72
    %v3174 = vpop.permute.xlu0 %3173
    %v3176 = vsel %vm261, %v3172, 0
    %v3179 = vsel %vm261, %v3174, 0
    %3181 = vmatprep.subr.bf16.mxu0 0
    %3182 = vmatpush1.bf16.xpose.msra.mxu0 0
    %3183 = vmatprep.subr.bf16.mxu0 0
    %3184 = vmatpush1.bf16.xpose.msra.mxu0 0
    %3185 = vmatprep.subr.bf16.mxu0 0
    %3186 = vmatpush1.bf16.xpose.msra.mxu0 0
    %3187 = vmatprep.subr.bf16.mxu0 0
    %3188 = vmatpush1.bf16.xpose.msra.mxu0 0
    %3189 = vmatprep.subr.bf16.mxu0 0
    %3190 = vmatpush1.bf16.xpose.msra.mxu0 0
    %3191 = vmatprep.subr.bf16.mxu0 0
    %3192 = vmatpush1.bf16.xpose.msra.mxu0 0
    %3193 = vmatprep.subr.bf16.mxu0 0
    %3194 = vmatpush1.bf16.xpose.msra.mxu0 0
    %3195 = vmatprep.subr.bf16.mxu0 0
    %3196 = vmatpush1.bf16.xpose.msra.mxu0 %v3179
    %3197 = vmatprep.subr.bf16.mxu0 0
    %3198 = vmatpush2.bf16.xpose.msra.mxu0 0
    %3199 = vmatprep.subr.bf16.mxu0 0
    %3200 = vmatpush2.bf16.xpose.msra.mxu0 0
    %3201 = vmatprep.subr.bf16.mxu0 0
    %3202 = vmatpush2.bf16.xpose.msra.mxu0 0
    %3203 = vmatprep.subr.bf16.mxu0 0
    %3204 = vmatpush2.bf16.xpose.msra.mxu0 0
    %3205 = vmatprep.subr.bf16.mxu0 0
    %3206 = vmatpush2.bf16.xpose.msra.mxu0 0
    %3207 = vmatprep.subr.bf16.mxu0 0
    %3208 = vmatpush2.bf16.xpose.msra.mxu0 0
    %3209 = vmatprep.subr.bf16.mxu0 0
    %3210 = vmatpush2.bf16.xpose.msra.mxu0 0
    %3211 = vmatprep.subr.bf16.mxu0 0
    %3212 = vmatpush2.bf16.xpose.msra.mxu0 0
    %3213 = vmatprep.mubr.bf16.mxu0 0
    %3214 = vmatmul.mubr.bf16.gmra.mxu0 %v3176
    %v3215 = vpop.f32.mrf.mxu0
    %v3216 = vadd.f32 %v3120, %v3215
    %v3217 = vpop.f32.mrf.mxu0
    %v3218 = vpop.f32.mrf.mxu0
    %v3219 = vpop.f32.mrf.mxu0
    %3220 = vdwg.mxu0
    %3221 = vrot.lane.b32.xlu0 %v243, 104
    %v3222 = vpop.permute.xlu0 %3221
    %3223 = vrot.lane.b32.xlu0 %v243, 72
    %v3224 = vpop.permute.xlu0 %3223
    %v3226 = vsel %vm261, %v3222, 0
    %v3229 = vsel %vm261, %v3224, 0
    %3231 = vmatprep.subr.bf16.mxu0 0
    %3232 = vmatpush1.bf16.xpose.msra.mxu0 0
    %3233 = vmatprep.subr.bf16.mxu0 0
    %3234 = vmatpush1.bf16.xpose.msra.mxu0 0
    %3235 = vmatprep.subr.bf16.mxu0 0
    %3236 = vmatpush1.bf16.xpose.msra.mxu0 0
    %3237 = vmatprep.subr.bf16.mxu0 0
    %3238 = vmatpush1.bf16.xpose.msra.mxu0 0
    %3239 = vmatprep.subr.bf16.mxu0 0
    %3240 = vmatpush1.bf16.xpose.msra.mxu0 0
    %3241 = vmatprep.subr.bf16.mxu0 0
    %3242 = vmatpush1.bf16.xpose.msra.mxu0 0
    %3243 = vmatprep.subr.bf16.mxu0 0
    %3244 = vmatpush1.bf16.xpose.msra.mxu0 0
    %3245 = vmatprep.subr.bf16.mxu0 0
    %3246 = vmatpush1.bf16.xpose.msra.mxu0 %v3229
    %3247 = vmatprep.subr.bf16.mxu0 0
    %3248 = vmatpush2.bf16.xpose.msra.mxu0 0
    %3249 = vmatprep.subr.bf16.mxu0 0
    %3250 = vmatpush2.bf16.xpose.msra.mxu0 0
    %3251 = vmatprep.subr.bf16.mxu0 0
    %3252 = vmatpush2.bf16.xpose.msra.mxu0 0
    %3253 = vmatprep.subr.bf16.mxu0 0
    %3254 = vmatpush2.bf16.xpose.msra.mxu0 0
    %3255 = vmatprep.subr.bf16.mxu0 0
    %3256 = vmatpush2.bf16.xpose.msra.mxu0 0
    %3257 = vmatprep.subr.bf16.mxu0 0
    %3258 = vmatpush2.bf16.xpose.msra.mxu0 0
    %3259 = vmatprep.subr.bf16.mxu0 0
    %3260 = vmatpush2.bf16.xpose.msra.mxu0 0
    %3261 = vmatprep.subr.bf16.mxu0 0
    %3262 = vmatpush2.bf16.xpose.msra.mxu0 0
    %3263 = vmatprep.mubr.bf16.mxu0 0
    %3264 = vmatmul.mubr.bf16.gmra.mxu0 %v3226
    %v3265 = vpop.f32.mrf.mxu0
    %v3266 = vadd.f32 %v3120, %v3265
    %v3267 = vpop.f32.mrf.mxu0
    %v3268 = vpop.f32.mrf.mxu0
    %v3269 = vpop.f32.mrf.mxu0
    %3270 = vdwg.mxu0
    %3271 = vrot.lane.b32.xlu0 %v244, 104
    %v3272 = vpop.permute.xlu0 %3271
    %3273 = vrot.lane.b32.xlu0 %v244, 72
    %v3274 = vpop.permute.xlu0 %3273
    %v3276 = vsel %vm261, %v3272, 0
    %v3279 = vsel %vm261, %v3274, 0
    %3281 = vmatprep.subr.bf16.mxu0 0
    %3282 = vmatpush1.bf16.xpose.msra.mxu0 0
    %3283 = vmatprep.subr.bf16.mxu0 0
    %3284 = vmatpush1.bf16.xpose.msra.mxu0 0
    %3285 = vmatprep.subr.bf16.mxu0 0
    %3286 = vmatpush1.bf16.xpose.msra.mxu0 0
    %3287 = vmatprep.subr.bf16.mxu0 0
    %3288 = vmatpush1.bf16.xpose.msra.mxu0 0
    %3289 = vmatprep.subr.bf16.mxu0 0
    %3290 = vmatpush1.bf16.xpose.msra.mxu0 0
    %3291 = vmatprep.subr.bf16.mxu0 0
    %3292 = vmatpush1.bf16.xpose.msra.mxu0 0
    %3293 = vmatprep.subr.bf16.mxu0 0
    %3294 = vmatpush1.bf16.xpose.msra.mxu0 0
    %3295 = vmatprep.subr.bf16.mxu0 0
    %3296 = vmatpush1.bf16.xpose.msra.mxu0 %v3279
    %3297 = vmatprep.subr.bf16.mxu0 0
    %3298 = vmatpush2.bf16.xpose.msra.mxu0 0
    %3299 = vmatprep.subr.bf16.mxu0 0
    %3300 = vmatpush2.bf16.xpose.msra.mxu0 0
    %3301 = vmatprep.subr.bf16.mxu0 0
    %3302 = vmatpush2.bf16.xpose.msra.mxu0 0
    %3303 = vmatprep.subr.bf16.mxu0 0
    %3304 = vmatpush2.bf16.xpose.msra.mxu0 0
    %3305 = vmatprep.subr.bf16.mxu0 0
    %3306 = vmatpush2.bf16.xpose.msra.mxu0 0
    %3307 = vmatprep.subr.bf16.mxu0 0
    %3308 = vmatpush2.bf16.xpose.msra.mxu0 0
    %3309 = vmatprep.subr.bf16.mxu0 0
    %3310 = vmatpush2.bf16.xpose.msra.mxu0 0
    %3311 = vmatprep.subr.bf16.mxu0 0
    %3312 = vmatpush2.bf16.xpose.msra.mxu0 0
    %3313 = vmatprep.mubr.bf16.mxu0 0
    %3314 = vmatmul.mubr.bf16.gmra.mxu0 %v3276
    %v3315 = vpop.f32.mrf.mxu0
    %v3316 = vadd.f32 %v3120, %v3315
    %v3317 = vpop.f32.mrf.mxu0
    %v3318 = vpop.f32.mrf.mxu0
    %v3319 = vpop.f32.mrf.mxu0
    %3320 = vdwg.mxu0
    %3321 = vrot.lane.b32.xlu0 %v245, 104
    %v3322 = vpop.permute.xlu0 %3321
    %3323 = vrot.lane.b32.xlu0 %v245, 72
    %v3324 = vpop.permute.xlu0 %3323
    %v3326 = vsel %vm261, %v3322, 0
    %v3329 = vsel %vm261, %v3324, 0
    %3331 = vmatprep.subr.bf16.mxu0 0
    %3332 = vmatpush1.bf16.xpose.msra.mxu0 0
    %3333 = vmatprep.subr.bf16.mxu0 0
    %3334 = vmatpush1.bf16.xpose.msra.mxu0 0
    %3335 = vmatprep.subr.bf16.mxu0 0
    %3336 = vmatpush1.bf16.xpose.msra.mxu0 0
    %3337 = vmatprep.subr.bf16.mxu0 0
    %3338 = vmatpush1.bf16.xpose.msra.mxu0 0
    %3339 = vmatprep.subr.bf16.mxu0 0
    %3340 = vmatpush1.bf16.xpose.msra.mxu0 0
    %3341 = vmatprep.subr.bf16.mxu0 0
    %3342 = vmatpush1.bf16.xpose.msra.mxu0 0
    %3343 = vmatprep.subr.bf16.mxu0 0
    %3344 = vmatpush1.bf16.xpose.msra.mxu0 0
    %3345 = vmatprep.subr.bf16.mxu0 0
    %3346 = vmatpush1.bf16.xpose.msra.mxu0 %v3329
    %3347 = vmatprep.subr.bf16.mxu0 0
    %3348 = vmatpush2.bf16.xpose.msra.mxu0 0
    %3349 = vmatprep.subr.bf16.mxu0 0
    %3350 = vmatpush2.bf16.xpose.msra.mxu0 0
    %3351 = vmatprep.subr.bf16.mxu0 0
    %3352 = vmatpush2.bf16.xpose.msra.mxu0 0
    %3353 = vmatprep.subr.bf16.mxu0 0
    %3354 = vmatpush2.bf16.xpose.msra.mxu0 0
    %3355 = vmatprep.subr.bf16.mxu0 0
    %3356 = vmatpush2.bf16.xpose.msra.mxu0 0
    %3357 = vmatprep.subr.bf16.mxu0 0
    %3358 = vmatpush2.bf16.xpose.msra.mxu0 0
    %3359 = vmatprep.subr.bf16.mxu0 0
    %3360 = vmatpush2.bf16.xpose.msra.mxu0 0
    %3361 = vmatprep.subr.bf16.mxu0 0
    %3362 = vmatpush2.bf16.xpose.msra.mxu0 0
    %3363 = vmatprep.mubr.bf16.mxu0 0
    %3364 = vmatmul.mubr.bf16.gmra.mxu0 %v3326
    %v3365 = vpop.f32.mrf.mxu0
    %v3366 = vadd.f32 %v3120, %v3365
    %v3367 = vpop.f32.mrf.mxu0
    %v3368 = vpop.f32.mrf.mxu0
    %v3369 = vpop.f32.mrf.mxu0
    %3370 = vdwg.mxu0
    %3371 = vrot.lane.b32.xlu0 %v246, 104
    %v3372 = vpop.permute.xlu0 %3371
    %3373 = vrot.lane.b32.xlu0 %v246, 72
    %v3374 = vpop.permute.xlu0 %3373
    %v3376 = vsel %vm261, %v3372, 0
    %v3379 = vsel %vm261, %v3374, 0
    %3381 = vmatprep.subr.bf16.mxu0 0
    %3382 = vmatpush1.bf16.xpose.msra.mxu0 0
    %3383 = vmatprep.subr.bf16.mxu0 0
    %3384 = vmatpush1.bf16.xpose.msra.mxu0 0
    %3385 = vmatprep.subr.bf16.mxu0 0
    %3386 = vmatpush1.bf16.xpose.msra.mxu0 0
    %3387 = vmatprep.subr.bf16.mxu0 0
    %3388 = vmatpush1.bf16.xpose.msra.mxu0 0
    %3389 = vmatprep.subr.bf16.mxu0 0
    %3390 = vmatpush1.bf16.xpose.msra.mxu0 0
    %3391 = vmatprep.subr.bf16.mxu0 0
    %3392 = vmatpush1.bf16.xpose.msra.mxu0 0
    %3393 = vmatprep.subr.bf16.mxu0 0
    %3394 = vmatpush1.bf16.xpose.msra.mxu0 0
    %3395 = vmatprep.subr.bf16.mxu0 0
    %3396 = vmatpush1.bf16.xpose.msra.mxu0 %v3379
    %3397 = vmatprep.subr.bf16.mxu0 0
    %3398 = vmatpush2.bf16.xpose.msra.mxu0 0
    %3399 = vmatprep.subr.bf16.mxu0 0
    %3400 = vmatpush2.bf16.xpose.msra.mxu0 0
    %3401 = vmatprep.subr.bf16.mxu0 0
    %3402 = vmatpush2.bf16.xpose.msra.mxu0 0
    %3403 = vmatprep.subr.bf16.mxu0 0
    %3404 = vmatpush2.bf16.xpose.msra.mxu0 0
    %3405 = vmatprep.subr.bf16.mxu0 0
    %3406 = vmatpush2.bf16.xpose.msra.mxu0 0
    %3407 = vmatprep.subr.bf16.mxu0 0
    %3408 = vmatpush2.bf16.xpose.msra.mxu0 0
    %3409 = vmatprep.subr.bf16.mxu0 0
    %3410 = vmatpush2.bf16.xpose.msra.mxu0 0
    %3411 = vmatprep.subr.bf16.mxu0 0
    %3412 = vmatpush2.bf16.xpose.msra.mxu0 0
    %3413 = vmatprep.mubr.bf16.mxu0 0
    %3414 = vmatmul.mubr.bf16.gmra.mxu0 %v3376
    %v3415 = vpop.f32.mrf.mxu0
    %v3416 = vadd.f32 %v3120, %v3415
    %v3417 = vpop.f32.mrf.mxu0
    %v3418 = vpop.f32.mrf.mxu0
    %v3419 = vpop.f32.mrf.mxu0
    %3420 = vdwg.mxu0
    %3421 = vrot.lane.b32.xlu0 %v247, 104
    %v3422 = vpop.permute.xlu0 %3421
    %3423 = vrot.lane.b32.xlu0 %v247, 72
    %v3424 = vpop.permute.xlu0 %3423
    %v3426 = vsel %vm261, %v3422, 0
    %v3429 = vsel %vm261, %v3424, 0
    %3431 = vmatprep.subr.bf16.mxu0 0
    %3432 = vmatpush1.bf16.xpose.msra.mxu0 0
    %3433 = vmatprep.subr.bf16.mxu0 0
    %3434 = vmatpush1.bf16.xpose.msra.mxu0 0
    %3435 = vmatprep.subr.bf16.mxu0 0
    %3436 = vmatpush1.bf16.xpose.msra.mxu0 0
    %3437 = vmatprep.subr.bf16.mxu0 0
    %3438 = vmatpush1.bf16.xpose.msra.mxu0 0
    %3439 = vmatprep.subr.bf16.mxu0 0
    %3440 = vmatpush1.bf16.xpose.msra.mxu0 0
    %3441 = vmatprep.subr.bf16.mxu0 0
    %3442 = vmatpush1.bf16.xpose.msra.mxu0 0
    %3443 = vmatprep.subr.bf16.mxu0 0
    %3444 = vmatpush1.bf16.xpose.msra.mxu0 0
    %3445 = vmatprep.subr.bf16.mxu0 0
    %3446 = vmatpush1.bf16.xpose.msra.mxu0 %v3429
    %3447 = vmatprep.subr.bf16.mxu0 0
    %3448 = vmatpush2.bf16.xpose.msra.mxu0 0
    %3449 = vmatprep.subr.bf16.mxu0 0
    %3450 = vmatpush2.bf16.xpose.msra.mxu0 0
    %3451 = vmatprep.subr.bf16.mxu0 0
    %3452 = vmatpush2.bf16.xpose.msra.mxu0 0
    %3453 = vmatprep.subr.bf16.mxu0 0
    %3454 = vmatpush2.bf16.xpose.msra.mxu0 0
    %3455 = vmatprep.subr.bf16.mxu0 0
    %3456 = vmatpush2.bf16.xpose.msra.mxu0 0
    %3457 = vmatprep.subr.bf16.mxu0 0
    %3458 = vmatpush2.bf16.xpose.msra.mxu0 0
    %3459 = vmatprep.subr.bf16.mxu0 0
    %3460 = vmatpush2.bf16.xpose.msra.mxu0 0
    %3461 = vmatprep.subr.bf16.mxu0 0
    %3462 = vmatpush2.bf16.xpose.msra.mxu0 0
    %3463 = vmatprep.mubr.bf16.mxu0 0
    %3464 = vmatmul.mubr.bf16.gmra.mxu0 %v3426
    %v3465 = vpop.f32.mrf.mxu0
    %v3466 = vadd.f32 %v3120, %v3465
    %v3467 = vpop.f32.mrf.mxu0
    %v3468 = vpop.f32.mrf.mxu0
    %v3469 = vpop.f32.mrf.mxu0
    %3470 = vdwg.mxu0
    %3471 = vrot.lane.b32.xlu0 %v248, 104
    %v3472 = vpop.permute.xlu0 %3471
    %3473 = vrot.lane.b32.xlu0 %v248, 72
    %v3474 = vpop.permute.xlu0 %3473
    %v3476 = vsel %vm261, %v3472, 0
    %v3479 = vsel %vm261, %v3474, 0
    %3481 = vmatprep.subr.bf16.mxu0 0
    %3482 = vmatpush1.bf16.xpose.msra.mxu0 0
    %3483 = vmatprep.subr.bf16.mxu0 0
    %3484 = vmatpush1.bf16.xpose.msra.mxu0 0
    %3485 = vmatprep.subr.bf16.mxu0 0
    %3486 = vmatpush1.bf16.xpose.msra.mxu0 0
    %3487 = vmatprep.subr.bf16.mxu0 0
    %3488 = vmatpush1.bf16.xpose.msra.mxu0 0
    %3489 = vmatprep.subr.bf16.mxu0 0
    %3490 = vmatpush1.bf16.xpose.msra.mxu0 0
    %3491 = vmatprep.subr.bf16.mxu0 0
    %3492 = vmatpush1.bf16.xpose.msra.mxu0 0
    %3493 = vmatprep.subr.bf16.mxu0 0
    %3494 = vmatpush1.bf16.xpose.msra.mxu0 0
    %3495 = vmatprep.subr.bf16.mxu0 0
    %3496 = vmatpush1.bf16.xpose.msra.mxu0 %v3479
    %3497 = vmatprep.subr.bf16.mxu0 0
    %3498 = vmatpush2.bf16.xpose.msra.mxu0 0
    %3499 = vmatprep.subr.bf16.mxu0 0
    %3500 = vmatpush2.bf16.xpose.msra.mxu0 0
    %3501 = vmatprep.subr.bf16.mxu0 0
    %3502 = vmatpush2.bf16.xpose.msra.mxu0 0
    %3503 = vmatprep.subr.bf16.mxu0 0
    %3504 = vmatpush2.bf16.xpose.msra.mxu0 0
    %3505 = vmatprep.subr.bf16.mxu0 0
    %3506 = vmatpush2.bf16.xpose.msra.mxu0 0
    %3507 = vmatprep.subr.bf16.mxu0 0
    %3508 = vmatpush2.bf16.xpose.msra.mxu0 0
    %3509 = vmatprep.subr.bf16.mxu0 0
    %3510 = vmatpush2.bf16.xpose.msra.mxu0 0
    %3511 = vmatprep.subr.bf16.mxu0 0
    %3512 = vmatpush2.bf16.xpose.msra.mxu0 0
    %3513 = vmatprep.mubr.bf16.mxu0 0
    %3514 = vmatmul.mubr.bf16.gmra.mxu0 %v3476
    %v3515 = vpop.f32.mrf.mxu0
    %v3516 = vadd.f32 %v3120, %v3515
    %v3517 = vpop.f32.mrf.mxu0
    %v3518 = vpop.f32.mrf.mxu0
    %v3519 = vpop.f32.mrf.mxu0
    %3520 = vdwg.mxu0
    %v3521 = vadd.f32 %v3166, %v655
    %v3522 = vadd.f32 %v3216, %v659
    %v3523 = vadd.f32 %v3266, %v663
    %v3524 = vadd.f32 %v3316, %v667
    %v3525 = vadd.f32 %v3366, %v671
    %v3526 = vadd.f32 %v3416, %v675
    %v3527 = vadd.f32 %v3466, %v679
    %v3528 = vadd.f32 %v3516, %v683
    %v3529 = vsel %vm261, %v3521, -inf
    %3530 = vmax.xlane.f32.xlu0 %v3529
    %v3531 = vpop.xlane.xlu0 %3530
    %v3532 = vsel %vm261, %v3522, -inf
    %3533 = vmax.xlane.f32.xlu0 %v3532
    %v3534 = vpop.xlane.xlu0 %3533
    %v3535 = vsel %vm261, %v3523, -inf
    %3536 = vmax.xlane.f32.xlu0 %v3535
    %v3537 = vpop.xlane.xlu0 %3536
    %v3538 = vsel %vm261, %v3524, -inf
    %3539 = vmax.xlane.f32.xlu0 %v3538
    %v3540 = vpop.xlane.xlu0 %3539
    %v3541 = vsel %vm261, %v3525, -inf
    %3542 = vmax.xlane.f32.xlu0 %v3541
    %v3543 = vpop.xlane.xlu0 %3542
    %v3544 = vsel %vm261, %v3526, -inf
    %3545 = vmax.xlane.f32.xlu0 %v3544
    %v3546 = vpop.xlane.xlu0 %3545
    %v3547 = vsel %vm261, %v3527, -inf
    %3548 = vmax.xlane.f32.xlu0 %v3547
    %v3549 = vpop.xlane.xlu0 %3548
    %v3550 = vsel %vm261, %v3528, -inf
    %3551 = vmax.xlane.f32.xlu0 %v3550
    %v3552 = vpop.xlane.xlu0 %3551
    %v3553 = vsub.f32 %v3521, %v3531
    %v3554 = vsub.f32 %v3522, %v3534
    %v3555 = vsub.f32 %v3523, %v3537
    %v3556 = vsub.f32 %v3524, %v3540
    %v3557 = vsub.f32 %v3525, %v3543
    %v3558 = vsub.f32 %v3526, %v3546
    %v3559 = vsub.f32 %v3527, %v3549
    %v3560 = vsub.f32 %v3528, %v3552
    %v3561 = vmul.f32 %v3553, 1.442695
    %v3562 = vpow.pop %v3561
    %v3563 = vmul.f32 %v3554, 1.442695
    %v3564 = vpow.pop %v3563
    %v3565 = vmul.f32 %v3555, 1.442695
    %v3566 = vpow.pop %v3565
    %v3567 = vmul.f32 %v3556, 1.442695
    %v3568 = vpow.pop %v3567
    %v3569 = vmul.f32 %v3557, 1.442695
    %v3570 = vpow.pop %v3569
    %v3571 = vmul.f32 %v3558, 1.442695
    %v3572 = vpow.pop %v3571
    %v3573 = vmul.f32 %v3559, 1.442695
    %v3574 = vpow.pop %v3573
    %v3575 = vmul.f32 %v3560, 1.442695
    %v3576 = vpow.pop %v3575
    %v3577 = vsel %vm261, %v3562, 0.0
    %3578 = vadd.xlane.f32.xlu0 %v3577
    %v3579 = vpop.xlane.xlu0 %3578
    %v3580 = vsel %vm261, %v3564, 0.0
    %3581 = vadd.xlane.f32.xlu0 %v3580
    %v3582 = vpop.xlane.xlu0 %3581
    %v3583 = vsel %vm261, %v3566, 0.0
    %3584 = vadd.xlane.f32.xlu0 %v3583
    %v3585 = vpop.xlane.xlu0 %3584
    %v3586 = vsel %vm261, %v3568, 0.0
    %3587 = vadd.xlane.f32.xlu0 %v3586
    %v3588 = vpop.xlane.xlu0 %3587
    %v3589 = vsel %vm261, %v3570, 0.0
    %3590 = vadd.xlane.f32.xlu0 %v3589
    %v3591 = vpop.xlane.xlu0 %3590
    %v3592 = vsel %vm261, %v3572, 0.0
    %3593 = vadd.xlane.f32.xlu0 %v3592
    %v3594 = vpop.xlane.xlu0 %3593
    %v3595 = vsel %vm261, %v3574, 0.0
    %3596 = vadd.xlane.f32.xlu0 %v3595
    %v3597 = vpop.xlane.xlu0 %3596
    %v3598 = vsel %vm261, %v3576, 0.0
    %3599 = vadd.xlane.f32.xlu0 %v3598
    %v3600 = vpop.xlane.xlu0 %3599
    %v3601 = vrcp.pop %v3579
    %v3602 = vrcp.pop %v3582
    %v3603 = vrcp.pop %v3585
    %v3604 = vrcp.pop %v3588
    %v3605 = vrcp.pop %v3591
    %v3606 = vrcp.pop %v3594
    %v3607 = vrcp.pop %v3597
    %v3608 = vrcp.pop %v3600
    %v3609 = vmul.f32 %v3562, %v3601
    %v3610 = vmul.f32 %v3564, %v3602
    %v3611 = vmul.f32 %v3566, %v3603
    %v3612 = vmul.f32 %v3568, %v3604
    %v3613 = vmul.f32 %v3570, %v3605
    %v3614 = vmul.f32 %v3572, %v3606
    %v3615 = vmul.f32 %v3574, %v3607
    %v3616 = vmul.f32 %v3576, %v3608
    %v3617 = vpack.c.bf16 %v3609, %v3609
    %v3618 = vpack.c.bf16 %v3610, %v3610
    %v3619 = vpack.c.bf16 %v3611, %v3611
    %v3620 = vpack.c.bf16 %v3612, %v3612
    %v3621 = vpack.c.bf16 %v3613, %v3613
    %v3622 = vpack.c.bf16 %v3614, %v3614
    %v3623 = vpack.c.bf16 %v3615, %v3615
    %v3624 = vpack.c.bf16 %v3616, %v3616
    %3625 = vrot.lane.b32.xlu0 %v241, 40
    %v3626 = vpop.permute.xlu0 %3625
    %v3628 = vsel %vm261, %v3617, 0
    %v3631 = vsel %vm801, %v3626, 0
    %3633 = vmatprep.subr.bf16.mxu0 0
    %3634 = vmatpush1.bf16.msra.mxu0 0
    %3635 = vmatprep.subr.bf16.mxu0 0
    %3636 = vmatpush1.bf16.msra.mxu0 0
    %3637 = vmatprep.subr.bf16.mxu0 0
    %3638 = vmatpush1.bf16.msra.mxu0 0
    %3639 = vmatprep.subr.bf16.mxu0 0
    %3640 = vmatpush1.bf16.msra.mxu0 0
    %3641 = vmatprep.subr.bf16.mxu0 0
    %3642 = vmatpush1.bf16.msra.mxu0 0
    %3643 = vmatprep.subr.bf16.mxu0 0
    %3644 = vmatpush1.bf16.msra.mxu0 0
    %3645 = vmatprep.subr.bf16.mxu0 0
    %3646 = vmatpush1.bf16.msra.mxu0 0
    %3647 = vmatprep.subr.bf16.mxu0 0
    %3648 = vmatpush1.bf16.msra.mxu0 %v3631
    %3649 = vmatprep.subr.bf16.mxu0 0
    %3650 = vmatpush2.bf16.msra.mxu0 0
    %3651 = vmatprep.subr.bf16.mxu0 0
    %3652 = vmatpush2.bf16.msra.mxu0 0
    %3653 = vmatprep.subr.bf16.mxu0 0
    %3654 = vmatpush2.bf16.msra.mxu0 0
    %3655 = vmatprep.subr.bf16.mxu0 0
    %3656 = vmatpush2.bf16.msra.mxu0 0
    %3657 = vmatprep.subr.bf16.mxu0 0
    %3658 = vmatpush2.bf16.msra.mxu0 0
    %3659 = vmatprep.subr.bf16.mxu0 0
    %3660 = vmatpush2.bf16.msra.mxu0 0
    %3661 = vmatprep.subr.bf16.mxu0 0
    %3662 = vmatpush2.bf16.msra.mxu0 0
    %3663 = vmatprep.subr.bf16.mxu0 0
    %3664 = vmatpush2.bf16.msra.mxu0 0
    %3665 = vmatprep.mubr.bf16.mxu0 0
    %3666 = vmatmul.mubr.bf16.gmra.mxu0 %v3628
    %v3667 = vpop.f32.mrf.mxu0
    %v3668 = vadd.f32 0.0, %v3667
    %v3669 = vpop.f32.mrf.mxu0
    %v3670 = vpop.f32.mrf.mxu0
    %v3671 = vpop.f32.mrf.mxu0
    %3672 = vdwg.mxu0
    %3673 = vrot.lane.b32.xlu0 %v242, 40
    %v3674 = vpop.permute.xlu0 %3673
    %v3676 = vsel %vm261, %v3618, 0
    %v3679 = vsel %vm801, %v3674, 0
    %3681 = vmatprep.subr.bf16.mxu0 0
    %3682 = vmatpush1.bf16.msra.mxu0 0
    %3683 = vmatprep.subr.bf16.mxu0 0
    %3684 = vmatpush1.bf16.msra.mxu0 0
    %3685 = vmatprep.subr.bf16.mxu0 0
    %3686 = vmatpush1.bf16.msra.mxu0 0
    %3687 = vmatprep.subr.bf16.mxu0 0
    %3688 = vmatpush1.bf16.msra.mxu0 0
    %3689 = vmatprep.subr.bf16.mxu0 0
    %3690 = vmatpush1.bf16.msra.mxu0 0
    %3691 = vmatprep.subr.bf16.mxu0 0
    %3692 = vmatpush1.bf16.msra.mxu0 0
    %3693 = vmatprep.subr.bf16.mxu0 0
    %3694 = vmatpush1.bf16.msra.mxu0 0
    %3695 = vmatprep.subr.bf16.mxu0 0
    %3696 = vmatpush1.bf16.msra.mxu0 %v3679
    %3697 = vmatprep.subr.bf16.mxu0 0
    %3698 = vmatpush2.bf16.msra.mxu0 0
    %3699 = vmatprep.subr.bf16.mxu0 0
    %3700 = vmatpush2.bf16.msra.mxu0 0
    %3701 = vmatprep.subr.bf16.mxu0 0
    %3702 = vmatpush2.bf16.msra.mxu0 0
    %3703 = vmatprep.subr.bf16.mxu0 0
    %3704 = vmatpush2.bf16.msra.mxu0 0
    %3705 = vmatprep.subr.bf16.mxu0 0
    %3706 = vmatpush2.bf16.msra.mxu0 0
    %3707 = vmatprep.subr.bf16.mxu0 0
    %3708 = vmatpush2.bf16.msra.mxu0 0
    %3709 = vmatprep.subr.bf16.mxu0 0
    %3710 = vmatpush2.bf16.msra.mxu0 0
    %3711 = vmatprep.subr.bf16.mxu0 0
    %3712 = vmatpush2.bf16.msra.mxu0 0
    %3713 = vmatprep.mubr.bf16.mxu0 0
    %3714 = vmatmul.mubr.bf16.gmra.mxu0 %v3676
    %v3715 = vpop.f32.mrf.mxu0
    %v3716 = vadd.f32 0.0, %v3715
    %v3717 = vpop.f32.mrf.mxu0
    %v3718 = vpop.f32.mrf.mxu0
    %v3719 = vpop.f32.mrf.mxu0
    %3720 = vdwg.mxu0
    %3721 = vrot.lane.b32.xlu0 %v243, 40
    %v3722 = vpop.permute.xlu0 %3721
    %v3724 = vsel %vm261, %v3619, 0
    %v3727 = vsel %vm801, %v3722, 0
    %3729 = vmatprep.subr.bf16.mxu0 0
    %3730 = vmatpush1.bf16.msra.mxu0 0
    %3731 = vmatprep.subr.bf16.mxu0 0
    %3732 = vmatpush1.bf16.msra.mxu0 0
    %3733 = vmatprep.subr.bf16.mxu0 0
    %3734 = vmatpush1.bf16.msra.mxu0 0
    %3735 = vmatprep.subr.bf16.mxu0 0
    %3736 = vmatpush1.bf16.msra.mxu0 0
    %3737 = vmatprep.subr.bf16.mxu0 0
    %3738 = vmatpush1.bf16.msra.mxu0 0
    %3739 = vmatprep.subr.bf16.mxu0 0
    %3740 = vmatpush1.bf16.msra.mxu0 0
    %3741 = vmatprep.subr.bf16.mxu0 0
    %3742 = vmatpush1.bf16.msra.mxu0 0
    %3743 = vmatprep.subr.bf16.mxu0 0
    %3744 = vmatpush1.bf16.msra.mxu0 %v3727
    %3745 = vmatprep.subr.bf16.mxu0 0
    %3746 = vmatpush2.bf16.msra.mxu0 0
    %3747 = vmatprep.subr.bf16.mxu0 0
    %3748 = vmatpush2.bf16.msra.mxu0 0
    %3749 = vmatprep.subr.bf16.mxu0 0
    %3750 = vmatpush2.bf16.msra.mxu0 0
    %3751 = vmatprep.subr.bf16.mxu0 0
    %3752 = vmatpush2.bf16.msra.mxu0 0
    %3753 = vmatprep.subr.bf16.mxu0 0
    %3754 = vmatpush2.bf16.msra.mxu0 0
    %3755 = vmatprep.subr.bf16.mxu0 0
    %3756 = vmatpush2.bf16.msra.mxu0 0
    %3757 = vmatprep.subr.bf16.mxu0 0
    %3758 = vmatpush2.bf16.msra.mxu0 0
    %3759 = vmatprep.subr.bf16.mxu0 0
    %3760 = vmatpush2.bf16.msra.mxu0 0
    %3761 = vmatprep.mubr.bf16.mxu0 0
    %3762 = vmatmul.mubr.bf16.gmra.mxu0 %v3724
    %v3763 = vpop.f32.mrf.mxu0
    %v3764 = vadd.f32 0.0, %v3763
    %v3765 = vpop.f32.mrf.mxu0
    %v3766 = vpop.f32.mrf.mxu0
    %v3767 = vpop.f32.mrf.mxu0
    %3768 = vdwg.mxu0
    %3769 = vrot.lane.b32.xlu0 %v244, 40
    %v3770 = vpop.permute.xlu0 %3769
    %v3772 = vsel %vm261, %v3620, 0
    %v3775 = vsel %vm801, %v3770, 0
    %3777 = vmatprep.subr.bf16.mxu0 0
    %3778 = vmatpush1.bf16.msra.mxu0 0
    %3779 = vmatprep.subr.bf16.mxu0 0
    %3780 = vmatpush1.bf16.msra.mxu0 0
    %3781 = vmatprep.subr.bf16.mxu0 0
    %3782 = vmatpush1.bf16.msra.mxu0 0
    %3783 = vmatprep.subr.bf16.mxu0 0
    %3784 = vmatpush1.bf16.msra.mxu0 0
    %3785 = vmatprep.subr.bf16.mxu0 0
    %3786 = vmatpush1.bf16.msra.mxu0 0
    %3787 = vmatprep.subr.bf16.mxu0 0
    %3788 = vmatpush1.bf16.msra.mxu0 0
    %3789 = vmatprep.subr.bf16.mxu0 0
    %3790 = vmatpush1.bf16.msra.mxu0 0
    %3791 = vmatprep.subr.bf16.mxu0 0
    %3792 = vmatpush1.bf16.msra.mxu0 %v3775
    %3793 = vmatprep.subr.bf16.mxu0 0
    %3794 = vmatpush2.bf16.msra.mxu0 0
    %3795 = vmatprep.subr.bf16.mxu0 0
    %3796 = vmatpush2.bf16.msra.mxu0 0
    %3797 = vmatprep.subr.bf16.mxu0 0
    %3798 = vmatpush2.bf16.msra.mxu0 0
    %3799 = vmatprep.subr.bf16.mxu0 0
    %3800 = vmatpush2.bf16.msra.mxu0 0
    %3801 = vmatprep.subr.bf16.mxu0 0
    %3802 = vmatpush2.bf16.msra.mxu0 0
    %3803 = vmatprep.subr.bf16.mxu0 0
    %3804 = vmatpush2.bf16.msra.mxu0 0
    %3805 = vmatprep.subr.bf16.mxu0 0
    %3806 = vmatpush2.bf16.msra.mxu0 0
    %3807 = vmatprep.subr.bf16.mxu0 0
    %3808 = vmatpush2.bf16.msra.mxu0 0
    %3809 = vmatprep.mubr.bf16.mxu0 0
    %3810 = vmatmul.mubr.bf16.gmra.mxu0 %v3772
    %v3811 = vpop.f32.mrf.mxu0
    %v3812 = vadd.f32 0.0, %v3811
    %v3813 = vpop.f32.mrf.mxu0
    %v3814 = vpop.f32.mrf.mxu0
    %v3815 = vpop.f32.mrf.mxu0
    %3816 = vdwg.mxu0
    %3817 = vrot.lane.b32.xlu0 %v245, 40
    %v3818 = vpop.permute.xlu0 %3817
    %v3820 = vsel %vm261, %v3621, 0
    %v3823 = vsel %vm801, %v3818, 0
    %3825 = vmatprep.subr.bf16.mxu0 0
    %3826 = vmatpush1.bf16.msra.mxu0 0
    %3827 = vmatprep.subr.bf16.mxu0 0
    %3828 = vmatpush1.bf16.msra.mxu0 0
    %3829 = vmatprep.subr.bf16.mxu0 0
    %3830 = vmatpush1.bf16.msra.mxu0 0
    %3831 = vmatprep.subr.bf16.mxu0 0
    %3832 = vmatpush1.bf16.msra.mxu0 0
    %3833 = vmatprep.subr.bf16.mxu0 0
    %3834 = vmatpush1.bf16.msra.mxu0 0
    %3835 = vmatprep.subr.bf16.mxu0 0
    %3836 = vmatpush1.bf16.msra.mxu0 0
    %3837 = vmatprep.subr.bf16.mxu0 0
    %3838 = vmatpush1.bf16.msra.mxu0 0
    %3839 = vmatprep.subr.bf16.mxu0 0
    %3840 = vmatpush1.bf16.msra.mxu0 %v3823
    %3841 = vmatprep.subr.bf16.mxu0 0
    %3842 = vmatpush2.bf16.msra.mxu0 0
    %3843 = vmatprep.subr.bf16.mxu0 0
    %3844 = vmatpush2.bf16.msra.mxu0 0
    %3845 = vmatprep.subr.bf16.mxu0 0
    %3846 = vmatpush2.bf16.msra.mxu0 0
    %3847 = vmatprep.subr.bf16.mxu0 0
    %3848 = vmatpush2.bf16.msra.mxu0 0
    %3849 = vmatprep.subr.bf16.mxu0 0
    %3850 = vmatpush2.bf16.msra.mxu0 0
    %3851 = vmatprep.subr.bf16.mxu0 0
    %3852 = vmatpush2.bf16.msra.mxu0 0
    %3853 = vmatprep.subr.bf16.mxu0 0
    %3854 = vmatpush2.bf16.msra.mxu0 0
    %3855 = vmatprep.subr.bf16.mxu0 0
    %3856 = vmatpush2.bf16.msra.mxu0 0
    %3857 = vmatprep.mubr.bf16.mxu0 0
    %3858 = vmatmul.mubr.bf16.gmra.mxu0 %v3820
    %v3859 = vpop.f32.mrf.mxu0
    %v3860 = vadd.f32 0.0, %v3859
    %v3861 = vpop.f32.mrf.mxu0
    %v3862 = vpop.f32.mrf.mxu0
    %v3863 = vpop.f32.mrf.mxu0
    %3864 = vdwg.mxu0
    %3865 = vrot.lane.b32.xlu0 %v246, 40
    %v3866 = vpop.permute.xlu0 %3865
    %v3868 = vsel %vm261, %v3622, 0
    %v3871 = vsel %vm801, %v3866, 0
    %3873 = vmatprep.subr.bf16.mxu0 0
    %3874 = vmatpush1.bf16.msra.mxu0 0
    %3875 = vmatprep.subr.bf16.mxu0 0
    %3876 = vmatpush1.bf16.msra.mxu0 0
    %3877 = vmatprep.subr.bf16.mxu0 0
    %3878 = vmatpush1.bf16.msra.mxu0 0
    %3879 = vmatprep.subr.bf16.mxu0 0
    %3880 = vmatpush1.bf16.msra.mxu0 0
    %3881 = vmatprep.subr.bf16.mxu0 0
    %3882 = vmatpush1.bf16.msra.mxu0 0
    %3883 = vmatprep.subr.bf16.mxu0 0
    %3884 = vmatpush1.bf16.msra.mxu0 0
    %3885 = vmatprep.subr.bf16.mxu0 0
    %3886 = vmatpush1.bf16.msra.mxu0 0
    %3887 = vmatprep.subr.bf16.mxu0 0
    %3888 = vmatpush1.bf16.msra.mxu0 %v3871
    %3889 = vmatprep.subr.bf16.mxu0 0
    %3890 = vmatpush2.bf16.msra.mxu0 0
    %3891 = vmatprep.subr.bf16.mxu0 0
    %3892 = vmatpush2.bf16.msra.mxu0 0
    %3893 = vmatprep.subr.bf16.mxu0 0
    %3894 = vmatpush2.bf16.msra.mxu0 0
    %3895 = vmatprep.subr.bf16.mxu0 0
    %3896 = vmatpush2.bf16.msra.mxu0 0
    %3897 = vmatprep.subr.bf16.mxu0 0
    %3898 = vmatpush2.bf16.msra.mxu0 0
    %3899 = vmatprep.subr.bf16.mxu0 0
    %3900 = vmatpush2.bf16.msra.mxu0 0
    %3901 = vmatprep.subr.bf16.mxu0 0
    %3902 = vmatpush2.bf16.msra.mxu0 0
    %3903 = vmatprep.subr.bf16.mxu0 0
    %3904 = vmatpush2.bf16.msra.mxu0 0
    %3905 = vmatprep.mubr.bf16.mxu0 0
    %3906 = vmatmul.mubr.bf16.gmra.mxu0 %v3868
    %v3907 = vpop.f32.mrf.mxu0
    %v3908 = vadd.f32 0.0, %v3907
    %v3909 = vpop.f32.mrf.mxu0
    %v3910 = vpop.f32.mrf.mxu0
    %v3911 = vpop.f32.mrf.mxu0
    %3912 = vdwg.mxu0
    %3913 = vrot.lane.b32.xlu0 %v247, 40
    %v3914 = vpop.permute.xlu0 %3913
    %v3916 = vsel %vm261, %v3623, 0
    %v3919 = vsel %vm801, %v3914, 0
    %3921 = vmatprep.subr.bf16.mxu0 0
    %3922 = vmatpush1.bf16.msra.mxu0 0
    %3923 = vmatprep.subr.bf16.mxu0 0
    %3924 = vmatpush1.bf16.msra.mxu0 0
    %3925 = vmatprep.subr.bf16.mxu0 0
    %3926 = vmatpush1.bf16.msra.mxu0 0
    %3927 = vmatprep.subr.bf16.mxu0 0
    %3928 = vmatpush1.bf16.msra.mxu0 0
    %3929 = vmatprep.subr.bf16.mxu0 0
    %3930 = vmatpush1.bf16.msra.mxu0 0
    %3931 = vmatprep.subr.bf16.mxu0 0
    %3932 = vmatpush1.bf16.msra.mxu0 0
    %3933 = vmatprep.subr.bf16.mxu0 0
    %3934 = vmatpush1.bf16.msra.mxu0 0
    %3935 = vmatprep.subr.bf16.mxu0 0
    %3936 = vmatpush1.bf16.msra.mxu0 %v3919
    %3937 = vmatprep.subr.bf16.mxu0 0
    %3938 = vmatpush2.bf16.msra.mxu0 0
    %3939 = vmatprep.subr.bf16.mxu0 0
    %3940 = vmatpush2.bf16.msra.mxu0 0
    %3941 = vmatprep.subr.bf16.mxu0 0
    %3942 = vmatpush2.bf16.msra.mxu0 0
    %3943 = vmatprep.subr.bf16.mxu0 0
    %3944 = vmatpush2.bf16.msra.mxu0 0
    %3945 = vmatprep.subr.bf16.mxu0 0
    %3946 = vmatpush2.bf16.msra.mxu0 0
    %3947 = vmatprep.subr.bf16.mxu0 0
    %3948 = vmatpush2.bf16.msra.mxu0 0
    %3949 = vmatprep.subr.bf16.mxu0 0
    %3950 = vmatpush2.bf16.msra.mxu0 0
    %3951 = vmatprep.subr.bf16.mxu0 0
    %3952 = vmatpush2.bf16.msra.mxu0 0
    %3953 = vmatprep.mubr.bf16.mxu0 0
    %3954 = vmatmul.mubr.bf16.gmra.mxu0 %v3916
    %v3955 = vpop.f32.mrf.mxu0
    %v3956 = vadd.f32 0.0, %v3955
    %v3957 = vpop.f32.mrf.mxu0
    %v3958 = vpop.f32.mrf.mxu0
    %v3959 = vpop.f32.mrf.mxu0
    %3960 = vdwg.mxu0
    %3961 = vrot.lane.b32.xlu0 %v248, 40
    %v3962 = vpop.permute.xlu0 %3961
    %v3964 = vsel %vm261, %v3624, 0
    %v3967 = vsel %vm801, %v3962, 0
    %3969 = vmatprep.subr.bf16.mxu0 0
    %3970 = vmatpush1.bf16.msra.mxu0 0
    %3971 = vmatprep.subr.bf16.mxu0 0
    %3972 = vmatpush1.bf16.msra.mxu0 0
    %3973 = vmatprep.subr.bf16.mxu0 0
    %3974 = vmatpush1.bf16.msra.mxu0 0
    %3975 = vmatprep.subr.bf16.mxu0 0
    %3976 = vmatpush1.bf16.msra.mxu0 0
    %3977 = vmatprep.subr.bf16.mxu0 0
    %3978 = vmatpush1.bf16.msra.mxu0 0
    %3979 = vmatprep.subr.bf16.mxu0 0
    %3980 = vmatpush1.bf16.msra.mxu0 0
    %3981 = vmatprep.subr.bf16.mxu0 0
    %3982 = vmatpush1.bf16.msra.mxu0 0
    %3983 = vmatprep.subr.bf16.mxu0 0
    %3984 = vmatpush1.bf16.msra.mxu0 %v3967
    %3985 = vmatprep.subr.bf16.mxu0 0
    %3986 = vmatpush2.bf16.msra.mxu0 0
    %3987 = vmatprep.subr.bf16.mxu0 0
    %3988 = vmatpush2.bf16.msra.mxu0 0
    %3989 = vmatprep.subr.bf16.mxu0 0
    %3990 = vmatpush2.bf16.msra.mxu0 0
    %3991 = vmatprep.subr.bf16.mxu0 0
    %3992 = vmatpush2.bf16.msra.mxu0 0
    %3993 = vmatprep.subr.bf16.mxu0 0
    %3994 = vmatpush2.bf16.msra.mxu0 0
    %3995 = vmatprep.subr.bf16.mxu0 0
    %3996 = vmatpush2.bf16.msra.mxu0 0
    %3997 = vmatprep.subr.bf16.mxu0 0
    %3998 = vmatpush2.bf16.msra.mxu0 0
    %3999 = vmatprep.subr.bf16.mxu0 0
    %4000 = vmatpush2.bf16.msra.mxu0 0
    %4001 = vmatprep.mubr.bf16.mxu0 0
    %4002 = vmatmul.mubr.bf16.gmra.mxu0 %v3964
    %v4003 = vpop.f32.mrf.mxu0
    %v4004 = vadd.f32 0.0, %v4003
    %v4005 = vpop.f32.mrf.mxu0
    %v4006 = vpop.f32.mrf.mxu0
    %v4007 = vpop.f32.mrf.mxu0
    %4008 = vdwg.mxu0
    %v4009 = vpack.c.bf16 %v3716, %v3668
    %v4010 = vpack.c.bf16 %v3812, %v3764
    %v4011 = vpack.c.bf16 %v3908, %v3860
    %v4012 = vpack.c.bf16 %v4004, %v3956
    %v4017 = vunpack.c.l.b16 %v4009
    %v4018 = vunpack.c.h.b16 %v4009
    %v4019 = vunpack.c.l.b16 %v4010
    %v4020 = vunpack.c.h.b16 %v4010
    %v4021 = vunpack.c.l.b16 %v4011
    %v4022 = vunpack.c.h.b16 %v4011
    %v4023 = vunpack.c.l.b16 %v4012
    %v4024 = vunpack.c.h.b16 %v4012
    %v4025 = vpack.c.b16 %v4017, %v4017
    %v4026 = vpack.c.b16 %v4018, %v4018
    %v4027 = vpack.c.b16 %v4019, %v4019
    %v4028 = vpack.c.b16 %v4020, %v4020
    %v4029 = vpack.c.b16 %v4021, %v4021
    %v4030 = vpack.c.b16 %v4022, %v4022
    %v4031 = vpack.c.b16 %v4023, %v4023
    %v4032 = vpack.c.b16 %v4024, %v4024
    %4033 = vrot.lane.b32.xlu0 %v4025, 24
    %v4034 = vpop.permute.xlu0 %4033
    %4035 = vrot.lane.b32.xlu0 %v4026, 24
    %v4036 = vpop.permute.xlu0 %4035
    %4037 = vrot.lane.b32.xlu0 %v4027, 24
    %v4038 = vpop.permute.xlu0 %4037
    %4039 = vrot.lane.b32.xlu0 %v4028, 24
    %v4040 = vpop.permute.xlu0 %4039
    %4041 = vrot.lane.b32.xlu0 %v4029, 24
    %v4042 = vpop.permute.xlu0 %4041
    %4043 = vrot.lane.b32.xlu0 %v4030, 24
    %v4044 = vpop.permute.xlu0 %4043
    %4045 = vrot.lane.b32.xlu0 %v4031, 24
    %v4046 = vpop.permute.xlu0 %4045
    %4047 = vrot.lane.b32.xlu0 %v4032, 24
    %v4048 = vpop.permute.xlu0 %4047
    %vm4057 = vcmask 257216
    %4058 = vst.msk [vmem:[#allocation2] sm:$0xf] %vm4057, %v4034
    %4059 = vst.msk [vmem:[#allocation2 + $0x4] sm:$0xf] %vm4057, %v4036
    %4060 = vst.msk [vmem:[#allocation2 + $0x8] sm:$0xf] %vm4057, %v4038
    %4061 = vst.msk [vmem:[#allocation2 + $0xc] sm:$0xf] %vm4057, %v4040
    %4062 = vst.msk [vmem:[#allocation2 + $0x10] sm:$0xf] %vm4057, %v4042
    %4063 = vst.msk [vmem:[#allocation2 + $0x14] sm:$0xf] %vm4057, %v4044
    %4064 = vst.msk [vmem:[#allocation2 + $0x18] sm:$0xf] %vm4057, %v4046
    %4065 = vst.msk [vmem:[#allocation2 + $0x1c] sm:$0xf] %vm4057, %v4048
    %v4066 = vld [vmem:[#allocation2] sm:$0xf]
    %v4067 = vld [vmem:[#allocation2 + $0x4] sm:$0xf]
    %v4068 = vld [vmem:[#allocation2 + $0x8] sm:$0xf]
    %v4069 = vld [vmem:[#allocation2 + $0xc] sm:$0xf]
    %v4070 = vld [vmem:[#allocation2 + $0x10] sm:$0xf]
    %v4071 = vld [vmem:[#allocation2 + $0x14] sm:$0xf]
    %v4072 = vld [vmem:[#allocation2 + $0x18] sm:$0xf]
    %v4073 = vld [vmem:[#allocation2 + $0x1c] sm:$0xf]
    %v4074 = vld [vmem:[#allocation11] sm:$0xf]
    %v4075 = vld [vmem:[#allocation11 + $0x4] sm:$0xf]
    %v4076 = vld [vmem:[#allocation11 + $0x8] sm:$0xf]
    %v4077 = vld [vmem:[#allocation11 + $0xc] sm:$0xf]
    %v4078 = vld [vmem:[%s6] sm:$0x1]
    %v4080 = vlaneseq
    %v4081 = vshrl.u32 %v4080, 7
    %v4082 = vsub.s32 0, %v4081
    %v4083 = vrot.slane %v4078, %v4082
    %v4093 = vunpack.c.l.b16 %v4066
    %v4094 = vunpack.c.l.b16 %v4067
    %v4095 = vunpack.c.l.b16 %v4068
    %v4096 = vunpack.c.l.b16 %v4069
    %v4097 = vunpack.c.l.b16 %v4070
    %v4098 = vunpack.c.l.b16 %v4071
    %v4099 = vunpack.c.l.b16 %v4072
    %v4100 = vunpack.c.l.b16 %v4073
    %v4101 = vpack.c.b16 %v4094, %v4093
    %v4102 = vpack.c.b16 %v4096, %v4095
    %v4103 = vpack.c.b16 %v4098, %v4097
    %v4104 = vpack.c.b16 %v4100, %v4099
    %v4109 = vunpack.c.l.b16 %v4074
    %v4110 = vunpack.c.l.b16 %v4075
    %v4111 = vunpack.c.l.b16 %v4076
    %v4112 = vunpack.c.l.b16 %v4077
    %v4113 = vpack.c.b16 %v4110, %v4109
    %v4114 = vpack.c.b16 %v4112, %v4111
    %v4118 = vsel %vm147, %v4101, 0
    %v4121 = vsel %vm147, %v4102, 0
    %v4124 = vsel %vm147, %v4103, 0
    %v4127 = vsel %vm147, %v4104, 0
    %4129 = vmatprep.subr.bf16.mxu0 0
    %4130 = vmatpush1.bf16.msra.mxu0 0
    %4131 = vmatprep.subr.bf16.mxu0 0
    %4132 = vmatpush1.bf16.msra.mxu0 0
    %4133 = vmatprep.subr.bf16.mxu0 0
    %4134 = vmatpush1.bf16.msra.mxu0 0
    %4135 = vmatprep.subr.bf16.mxu0 0
    %4136 = vmatpush1.bf16.msra.mxu0 0
    %4137 = vmatprep.subr.bf16.mxu0 0
    %4138 = vmatpush1.bf16.msra.mxu0 0
    %4139 = vmatprep.subr.bf16.mxu0 0
    %4140 = vmatpush1.bf16.msra.mxu0 0
    %4141 = vmatprep.subr.bf16.mxu0 0
    %4142 = vmatpush1.bf16.msra.mxu0 %v4114
    %4143 = vmatprep.subr.bf16.mxu0 0
    %4144 = vmatpush1.bf16.msra.mxu0 %v4113
    %4145 = vmatprep.subr.bf16.mxu0 0
    %4146 = vmatpush2.bf16.msra.mxu0 0
    %4147 = vmatprep.subr.bf16.mxu0 0
    %4148 = vmatpush2.bf16.msra.mxu0 0
    %4149 = vmatprep.subr.bf16.mxu0 0
    %4150 = vmatpush2.bf16.msra.mxu0 0
    %4151 = vmatprep.subr.bf16.mxu0 0
    %4152 = vmatpush2.bf16.msra.mxu0 0
    %4153 = vmatprep.subr.bf16.mxu0 0
    %4154 = vmatpush2.bf16.msra.mxu0 0
    %4155 = vmatprep.subr.bf16.mxu0 0
    %4156 = vmatpush2.bf16.msra.mxu0 0
    %4157 = vmatprep.subr.bf16.mxu0 0
    %4158 = vmatpush2.bf16.msra.mxu0 0
    %4159 = vmatprep.subr.bf16.mxu0 0
    %4160 = vmatpush2.bf16.msra.mxu0 0
    %4161 = vmatprep.mubr.bf16.mxu0 0
    %4162 = vmatmul.mubr.bf16.gmra.mxu0 %v4118
    %v4163 = vpop.f32.mrf.mxu0
    %v4164 = vadd.f32 %v4083, %v4163
    %v4165 = vpop.f32.mrf.mxu0
    %v4166 = vpop.f32.mrf.mxu0
    %v4167 = vadd.f32 %v4083, %v4166
    %v4168 = vpop.f32.mrf.mxu0
    %4169 = vmatprep.mubr.bf16.mxu0 0
    %4170 = vmatmul.mubr.bf16.gmra.mxu0 %v4121
    %v4171 = vpop.f32.mrf.mxu0
    %v4172 = vadd.f32 %v4083, %v4171
    %v4173 = vpop.f32.mrf.mxu0
    %v4174 = vpop.f32.mrf.mxu0
    %v4175 = vadd.f32 %v4083, %v4174
    %v4176 = vpop.f32.mrf.mxu0
    %4177 = vmatprep.mubr.bf16.mxu0 0
    %4178 = vmatmul.mubr.bf16.gmra.mxu0 %v4124
    %v4179 = vpop.f32.mrf.mxu0
    %v4180 = vadd.f32 %v4083, %v4179
    %v4181 = vpop.f32.mrf.mxu0
    %v4182 = vpop.f32.mrf.mxu0
    %v4183 = vadd.f32 %v4083, %v4182
    %v4184 = vpop.f32.mrf.mxu0
    %4185 = vmatprep.mubr.bf16.mxu0 0
    %4186 = vmatmul.mubr.bf16.gmra.mxu0 %v4127
    %v4187 = vpop.f32.mrf.mxu0
    %v4188 = vadd.f32 %v4083, %v4187
    %v4189 = vpop.f32.mrf.mxu0
    %v4190 = vpop.f32.mrf.mxu0
    %v4191 = vadd.f32 %v4083, %v4190
    %v4192 = vpop.f32.mrf.mxu0
    %4193 = vdwg.mxu0
    %v4194 = vpack.c.bf16 %v4164, %v4164
    %v4195 = vpack.c.bf16 %v4167, %v4167
    %v4196 = vpack.c.bf16 %v4172, %v4172
    %v4197 = vpack.c.bf16 %v4175, %v4175
    %v4198 = vpack.c.bf16 %v4180, %v4180
    %v4199 = vpack.c.bf16 %v4183, %v4183
    %v4200 = vpack.c.bf16 %v4188, %v4188
    %v4201 = vpack.c.bf16 %v4191, %v4191
    %vm4202 = vcmask 257024
    %4203 = vst.msk [vmem:[#allocation12] sm:$0xf] %vm4202, %v4194
    %4204 = vst.msk [vmem:[#allocation12 + $0x4] sm:$0xf] %vm4202, %v4195
    %4205 = vst.msk [vmem:[#allocation12 + $0x8] sm:$0xf] %vm4202, %v4196
    %4206 = vst.msk [vmem:[#allocation12 + $0xc] sm:$0xf] %vm4202, %v4197
    %4207 = vst.msk [vmem:[#allocation12 + $0x10] sm:$0xf] %vm4202, %v4198
    %4208 = vst.msk [vmem:[#allocation12 + $0x14] sm:$0xf] %vm4202, %v4199
    %4209 = vst.msk [vmem:[#allocation12 + $0x18] sm:$0xf] %vm4202, %v4200
    %4210 = vst.msk [vmem:[#allocation12 + $0x1c] sm:$0xf] %vm4202, %v4201
    // Predicated region
    $region50: #{tpu_custom_call.1} parent=1 // pred_check
      _
    $region51: #{tpu_custom_call.1} parent=1 // pred_check_branch
      %4212 = sbr.rel (0) target = $region53
    $region52: #{tpu_custom_call.1} parent=1 // pred_region
      %s4214 = ssub.s32 512, 512
      %4215 = vsyncadd [#allocation5], %s4214
      %s4216 = sshll.u32 [#allocation12], 4
      %s4217 = int_to_ptr.vmem [resolvable:$true] %s4216
      %4222 = dma.vmem_to_hbm [thread:$0]  %s4217, 512, %s7, [#allocation5], 64, 64, 4
    $region53: #{tpu_custom_call.1} parent=1 // pred_fallthru
      _
    // Predicated region
    $region54: #{tpu_custom_call.1} parent=1 // pred_check
      _
    $region55: #{tpu_custom_call.1} parent=1 // pred_check_branch
      %4224 = sbr.rel (0) target = $region57
    $region56: #{tpu_custom_call.1} parent=1 // pred_region
      %4225 = dma.done [#allocation5], 512
    $region57: #{tpu_custom_call.1} parent=1 // pred_fallthru
      _
    %4226 = vsyncpa [#allocation4], 1
    %4227 = vsyncpa [#allocation7], 1
    %4228 = vsyncpa [#allocation10], 1
    %4229 = vsyncpa [#allocation5], 1

</llo_original>
